<compile_context>
chip_gen: v6e
topology: v6e:2x2x1
jax: 0.10.0
libtpu: 0.0.40
codegen_flags: <defaults>
</compile_context>

<pallas_src>
import functools

import jax
import jax.numpy as jnp
from jax.experimental import pallas as pl
from jax.experimental.pallas import tpu as pltpu

EPS = 1e-5  # PyTorch BatchNorm2d default eps


def _round_up(x, m):
    return (x + m - 1) // m * m


def _mosaic_params(semantics, vmem_bytes):
    """CompilerParams with an explicit VMEM limit derived from the block sizes."""
    limit = int(min(64 << 20, max(8 << 20, 2 * vmem_bytes)))
    return pltpu.CompilerParams(dimension_semantics=semantics,
                                vmem_limit_bytes=limit)


def _pick_row_tile(h, w, target_rows=512):
    """Largest divisor TH of H with TH*W a multiple of 16 (bf16 sublane packing)
    and TH*W <= target_rows; falls back to the smallest aligned divisor."""
    cands = [th for th in range(1, h + 1) if h % th == 0 and (th * w) % 16 == 0]
    if not cands:
        return h
    small = [th for th in cands if th * w <= target_rows]
    return max(small) if small else min(cands)


# ----------------------------- pass 1: branch convs ------------------------ #

def branch_conv_pass(bands, branch_ws, branch_taps, *, n, n_rt, th, iw, cin,
                     c_pad, pad):
    """All ASPP conv branches, one halo row-band per grid step.

    bands:      (N, n_rt, band_h, Wp, Cin) bf16 — overlapping halo row-bands.
    branch_ws:  list of dense per-branch K-folded weights (n_taps_b*Cin, Cout) bf16.
    branch_taps: matching list of (dr, dc) tap shifts per branch.
    Outputs the lane-dense (M, C_pad) bf16 slab plus per-tile BN partial sums.
    """
    band_h, wp = bands.shape[2], bands.shape[3]
    tm = th * iw
    m = n * n_rt * tm
    n_tiles = n * n_rt
    n_br = len(branch_ws)

    def kernel(xb_ref, *refs):
        w_refs = refs[:n_br]
        z_ref, st_ref = refs[n_br], refs[n_br + 1]
        parts = []
        for w_ref, taps in zip(w_refs, branch_taps):
            # Build the K-folded operand for this branch from shifted windows of
            # the band (all offsets are compile-time constants).
            wins = [xb_ref[pl.ds(pad + dr, th), pl.ds(pad + dc, iw), :]
                    for (dr, dc) in taps]
            op3 = wins[0] if len(wins) == 1 else jnp.concatenate(wins, axis=-1)
            op = op3.reshape(tm, len(taps) * cin)            # bf16, K = n_taps*Cin
            parts.append(jnp.dot(op, w_ref[...],
                                 preferred_element_type=jnp.float32))
        c_real = sum(p.shape[-1] for p in parts)
        if c_real < c_pad:
            parts.append(jnp.zeros((tm, c_pad - c_real), jnp.float32))
        acc = jnp.concatenate(parts, axis=-1)                # (tm, c_pad) f32
        z_ref[...] = acc.astype(z_ref.dtype)
        s = jnp.sum(acc, axis=0, keepdims=True)
        ss = jnp.sum(acc * acc, axis=0, keepdims=True)
        st_ref[...] = jnp.concatenate([s, ss], axis=0)[None]

    in_specs = [pl.BlockSpec((None, None, band_h, wp, cin),
                             lambda b, i: (b, i, 0, 0, 0))]
    for w in branch_ws:
        in_specs.append(pl.BlockSpec(w.shape, lambda b, i: (0, 0)))

    vmem = (2 * (band_h * wp * cin * 2
                 + sum(int(w.size) for w in branch_ws) * 2
                 + tm * c_pad * 2 + 2 * c_pad * 4)
            + 4 * tm * c_pad * 4)     # margin for in-kernel f32 accumulator/temps

    return pl.pallas_call(
        kernel,
        grid=(n, n_rt),
        out_shape=(jax.ShapeDtypeStruct((m, c_pad), jnp.bfloat16),
                   jax.ShapeDtypeStruct((n_tiles, 2, c_pad), jnp.float32)),
        in_specs=in_specs,
        out_specs=(
            pl.BlockSpec((tm, c_pad), lambda b, i: (b * n_rt + i, 0)),
            pl.BlockSpec((1, 2, c_pad), lambda b, i: (b * n_rt + i, 0, 0)),
        ),
        compiler_params=_mosaic_params(("parallel", "parallel"), vmem),
    )(bands, *branch_ws)


# --------------------- pass 2: branch BN + ReLU + cls1 conv ----------------- #

def bn_cls1_pass(z, scale, shift, w1, c5, *, n, n_rt, tm, ccls_pad):
    m, c_pad = z.shape
    n_tiles = n * n_rt

    def kernel(z_ref, sc_ref, sh_ref, w1_ref, c5_ref, h_ref, st_ref):
        y = jnp.maximum(z_ref[...].astype(jnp.float32) * sc_ref[...] + sh_ref[...],
                        0.0)
        h = jnp.dot(y.astype(jnp.bfloat16), w1_ref[...],
                    preferred_element_type=jnp.float32)
        h = h + c5_ref[...]                # per-image global-pool (aspp5) term
        h_ref[...] = h.astype(h_ref.dtype)
        s = jnp.sum(h, axis=0, keepdims=True)
        ss = jnp.sum(h * h, axis=0, keepdims=True)
        st_ref[...] = jnp.concatenate([s, ss], axis=0)[None]

    vmem = (2 * (tm * c_pad * 2 + 2 * c_pad * 4 + c_pad * ccls_pad * 2
                 + ccls_pad * 4 + tm * ccls_pad * 2 + 2 * ccls_pad * 4)
            + 4 * tm * ccls_pad * 4)

    return pl.pallas_call(
        kernel,
        grid=(n, n_rt),
        out_shape=(jax.ShapeDtypeStruct((m, ccls_pad), jnp.bfloat16),
                   jax.ShapeDtypeStruct((n_tiles, 2, ccls_pad), jnp.float32)),
        in_specs=[
            pl.BlockSpec((tm, c_pad), lambda b, i: (b * n_rt + i, 0)),
            pl.BlockSpec((1, c_pad), lambda b, i: (0, 0)),
            pl.BlockSpec((1, c_pad), lambda b, i: (0, 0)),
            pl.BlockSpec((c_pad, ccls_pad), lambda b, i: (0, 0)),
            pl.BlockSpec((None, 1, ccls_pad), lambda b, i: (b, 0, 0)),
        ],
        out_specs=(
            pl.BlockSpec((tm, ccls_pad), lambda b, i: (b * n_rt + i, 0)),
            pl.BlockSpec((1, 2, ccls_pad), lambda b, i: (b * n_rt + i, 0, 0)),
        ),
        compiler_params=_mosaic_params(("parallel", "parallel"), vmem),
    )(z, scale, shift, w1, c5)


# --------------------- pass 3: cls1 BN + ReLU + final conv ------------------ #

def bn_cls2_pass(hpre, scale, shift, w2, b2, *, tm, ncls_pad):
    m, ccls_pad = hpre.shape
    n_tiles = m // tm

    def kernel(h_ref, sc_ref, sh_ref, w2_ref, b2_ref, o_ref):
        y = jnp.maximum(h_ref[...].astype(jnp.float32) * sc_ref[...] + sh_ref[...],
                        0.0)
        o = jnp.dot(y.astype(jnp.bfloat16), w2_ref[...],
                    preferred_element_type=jnp.float32) + b2_ref[...]
        o_ref[...] = o.astype(o_ref.dtype)      # bf16 writeback: pass is mem-bound

    vmem = (2 * (tm * ccls_pad * 2 + 2 * ccls_pad * 4 + ccls_pad * ncls_pad * 2
                 + ncls_pad * 4 + tm * ncls_pad * 2)
            + 2 * tm * ncls_pad * 4)

    return pl.pallas_call(
        kernel,
        grid=(n_tiles,),
        out_shape=jax.ShapeDtypeStruct((m, ncls_pad), jnp.bfloat16),
        in_specs=[
            pl.BlockSpec((tm, ccls_pad), lambda i: (i, 0)),
            pl.BlockSpec((1, ccls_pad), lambda i: (0, 0)),
            pl.BlockSpec((1, ccls_pad), lambda i: (0, 0)),
            pl.BlockSpec((ccls_pad, ncls_pad), lambda i: (0, 0)),
            pl.BlockSpec((1, ncls_pad), lambda i: (0, 0)),
        ],
        out_specs=pl.BlockSpec((tm, ncls_pad), lambda i: (i, 0)),
        compiler_params=_mosaic_params(("parallel",), vmem),
    )(hpre, scale, shift, w2, b2)


def _bn_affine(stats, gamma_wide, beta_wide, count):
    """Finalise two-pass BN: per-tile partial sums -> folded per-channel scale/shift."""
    s = jnp.sum(stats[:, 0, :], axis=0)
    ss = jnp.sum(stats[:, 1, :], axis=0)
    mean = s / count
    var = jnp.maximum(ss / count - mean * mean, 0.0)    # biased var (training mode)
    scale = gamma_wide * jax.lax.rsqrt(var + EPS)
    shift = beta_wide - mean * scale
    return scale[None, :], shift[None, :]


# --------------------------------- params ---------------------------------- #

def init_aspp_params(key, in_channels, out_channels, num_classes, rates):
    assert len(rates) in (1, 3)
    counter = [0]

    def nk():
        counter[0] += 1
        return jax.random.fold_in(key, counter[0])

    def conv_w(shape, scale=0.1):
        return (scale * jax.random.normal(nk(), shape)).astype(jnp.float32)

    def bn(c):
        g = (1.0 + 0.1 * jax.random.normal(nk(), (c,))).astype(jnp.float32)
        b = (0.1 * jax.random.normal(nk(), (c,))).astype(jnp.float32)
        return g, b

    p = {}
    g, b = bn(out_channels)
    p['aspp1'] = dict(w=conv_w((out_channels, in_channels, 1, 1)), gamma=g, beta=b)
    g, b = bn(out_channels)
    p['aspp2'] = dict(w=conv_w((out_channels, in_channels, 3, 3)), gamma=g, beta=b)
    if len(rates) == 3:
        g, b = bn(out_channels)
        p['aspp3'] = dict(w=conv_w((out_channels, in_channels, 3, 3)), gamma=g, beta=b)
        g, b = bn(out_channels)
        p['aspp4'] = dict(w=conv_w((out_channels, in_channels, 3, 3)), gamma=g, beta=b)
    g, b = bn(out_channels)
    p['aspp5'] = dict(w=conv_w((out_channels, in_channels, 1, 1)), gamma=g, beta=b)
    g, b = bn(out_channels)
    p['cls1'] = dict(w=conv_w((out_channels, out_channels * (len(rates) + 2), 1, 1)),
                     gamma=g, beta=b)
    p['cls2'] = dict(w=conv_w((num_classes, out_channels, 1, 1)),
                     b=(0.1 * jax.random.normal(nk(), (num_classes,))).astype(jnp.float32))
    return p


# --------------------------------- forward --------------------------------- #

def aspp_forward(x_nchw, params, rates):
    N, Cin, H, W = x_nchw.shape
    n3 = len(rates)
    Cout = params['aspp1']['w'].shape[0]
    num_classes = params['cls2']['w'].shape[0]
    pad = max(rates)

    # Lane-dense (multiple-of-128) channel layouts.
    C_real = (1 + n3) * Cout                    # aspp1 + dilated branches
    C_pad = _round_up(max(C_real, 128), 128)
    Ccls_pad = _round_up(max(Cout, 128), 128)
    Ncls_pad = _round_up(max(num_classes, 128), 128)

    # Row tile: small target at toy sizes so the pipeline / halo banding is
    # actually exercised; target ~512-1024 activation rows at production sizes.
    target_rows = 128 if H * W <= 1024 else 512
    TH = _pick_row_tile(H, W, target_rows)
    assert H % TH == 0 and (TH * W) % 16 == 0, "row tiling needs even H (see TODO)"
    TM = TH * W
    n_rt = H // TH
    M = N * H * W

    x_nhwc = jnp.transpose(x_nchw, (0, 2, 3, 1)).astype(jnp.float32)
    # bf16 end-to-end for the conv path (MXU runs bf16 anyway; halves DMA bytes).
    xp = jnp.pad(x_nhwc.astype(jnp.bfloat16),
                 ((0, 0), (pad, pad), (pad, pad), (0, 0)))
    band_h = TH + 2 * pad
    # Overlapping halo row-bands in HBM; band i = padded rows [i*TH, i*TH+band_h).
    bands = jnp.stack([xp[:, i * TH:i * TH + band_h] for i in range(n_rt)], axis=1)

    # ---- per-branch dense K-folded weights (no zero-padded columns/rows) ----
    names = ['aspp2', 'aspp3', 'aspp4'][:n3]
    branch_taps = [((0, 0),)]
    branch_ws = [params['aspp1']['w'][:, :, 0, 0].T.astype(jnp.bfloat16)]  # (Cin, Cout)
    for name, r in zip(names, rates):
        wb = params[name]['w']                  # (Cout, Cin, 3, 3)
        taps, rows = [], []
        for kh in range(3):
            for kw in range(3):
                taps.append(((kh - 1) * r, (kw - 1) * r))
                rows.append(wb[:, :, kh, kw].T)
        branch_taps.append(tuple(taps))
        branch_ws.append(jnp.concatenate(rows, axis=0).astype(jnp.bfloat16))  # (9*Cin, Cout)

    # ---- pass 1: fused branch convs + BN partial stats ----
    z, stats_br = branch_conv_pass(bands, branch_ws, tuple(branch_taps),
                                   n=N, n_rt=n_rt, th=TH, iw=W, cin=Cin,
                                   c_pad=C_pad, pad=pad)

    gam_w = jnp.concatenate([params[nm]['gamma'] for nm in ['aspp1'] + names]
                            + [jnp.zeros((C_pad - C_real,), jnp.float32)])
    bet_w = jnp.concatenate([params[nm]['beta'] for nm in ['aspp1'] + names]
                            + [jnp.zeros((C_pad - C_real,), jnp.float32)])
    sc_br, sh_br = _bn_affine(stats_br, gam_w, bet_w, float(M))

    # ---- aspp5: global pool -> 1x1 conv -> BN(over N) -> ReLU; kept in plain JAX
    # (touches only (N,Cin)/(N,Cout) data).  Bilinear upsample of a 1x1 map with
    # align_corners=True is an exact broadcast, folded into cls1 as a per-image
    # rank-1 contribution so no (M, Cout) array is ever materialised.
    pooled = jnp.mean(x_nhwc, axis=(1, 2))                       # (N, Cin)
    z5 = pooled @ params['aspp5']['w'][:, :, 0, 0].T             # (N, Cout)
    m5 = jnp.mean(z5, axis=0)
    v5 = jnp.mean((z5 - m5) ** 2, axis=0)
    y5 = jnp.maximum((z5 - m5) * jax.lax.rsqrt(v5 + EPS)
                     * params['aspp5']['gamma'] + params['aspp5']['beta'], 0.0)
    w_cls1 = params['cls1']['w'][:, :, 0, 0].T                   # (nb*Cout, Cout)
    c5 = y5 @ w_cls1[C_real:C_real + Cout, :]                    # (N, Cout)
    c5_wide = jnp.zeros((N, 1, Ccls_pad), jnp.float32).at[:, 0, :Cout].set(c5)

    w1_wide = jnp.zeros((C_pad, Ccls_pad), jnp.float32)
    w1_wide = w1_wide.at[:C_real, :Cout].set(w_cls1[:C_real, :]).astype(jnp.bfloat16)

    # ---- pass 2: branch BN+ReLU apply, fused cls1 conv (+aspp5), cls1 stats ----
    hpre, stats_c1 = bn_cls1_pass(z, sc_br, sh_br, w1_wide, c5_wide,
                                  n=N, n_rt=n_rt, tm=TM, ccls_pad=Ccls_pad)

    gam_c1 = jnp.zeros((Ccls_pad,), jnp.float32).at[:Cout].set(params['cls1']['gamma'])
    bet_c1 = jnp.zeros((Ccls_pad,), jnp.float32).at[:Cout].set(params['cls1']['beta'])
    sc_c1, sh_c1 = _bn_affine(stats_c1, gam_c1, bet_c1, float(M))

    w2_wide = jnp.zeros((Ccls_pad, Ncls_pad), jnp.float32)
    w2_wide = w2_wide.at[:Cout, :num_classes].set(
        params['cls2']['w'][:, :, 0, 0].T).astype(jnp.bfloat16)
    b2_wide = jnp.zeros((1, Ncls_pad), jnp.float32).at[0, :num_classes].set(
        params['cls2']['b'])

    # ---- pass 3: cls1 BN+ReLU + final classifier conv (bf16 lane-dense output) ----
    out_wide = bn_cls2_pass(hpre, sc_c1, sh_c1, w2_wide, b2_wide,
                            tm=TM, ncls_pad=Ncls_pad)

    out = out_wide[:, :num_classes].astype(jnp.float32).reshape(N, H, W, num_classes)
    return jnp.transpose(out, (0, 3, 1, 2))                      # back to NCHW


# --------------------------- pure-JAX reference ----------------------------- #

def _conv2d(x, w, dilation=1, padding=0):
    return jax.lax.conv_general_dilated(
        x, w, window_strides=(1, 1),
        padding=((padding, padding), (padding, padding)),
        rhs_dilation=(dilation, dilation),
        dimension_numbers=('NCHW', 'OIHW', 'NCHW'))


def _bn_relu_ref(z, gamma, beta):
    mean = jnp.mean(z, axis=(0, 2, 3), keepdims=True)
    var = jnp.mean((z - mean) ** 2, axis=(0, 2, 3), keepdims=True)
    zn = (z - mean) * jax.lax.rsqrt(var + EPS)
    return jnp.maximum(zn * gamma[None, :, None, None] + beta[None, :, None, None], 0.0)


def aspp_reference(x, params, rates):
    N, _, H, W = x.shape
    x1 = _bn_relu_ref(_conv2d(x, params['aspp1']['w']),
                      params['aspp1']['gamma'], params['aspp1']['beta'])
    x2 = _bn_relu_ref(_conv2d(x, params['aspp2']['w'], rates[0], rates[0]),
                      params['aspp2']['gamma'], params['aspp2']['beta'])
    xs = [x1, x2]
    if len(rates) == 3:
        xs.append(_bn_relu_ref(_conv2d(x, params['aspp3']['w'], rates[1], rates[1]),
                               params['aspp3']['gamma'], params['aspp3']['beta']))
        xs.append(_bn_relu_ref(_conv2d(x, params['aspp4']['w'], rates[2], rates[2]),
                               params['aspp4']['gamma'], params['aspp4']['beta']))
    pooled = jnp.mean(x, axis=(2, 3), keepdims=True)
    x5 = _bn_relu_ref(_conv2d(pooled, params['aspp5']['w']),
                      params['aspp5']['gamma'], params['aspp5']['beta'])
    xs.append(jnp.broadcast_to(x5, (N, x5.shape[1], H, W)))
    xc = jnp.concatenate(xs, axis=1)
    h = _bn_relu_ref(_conv2d(xc, params['cls1']['w']),
                     params['cls1']['gamma'], params['cls1']['beta'])
    return _conv2d(h, params['cls2']['w']) + params['cls2']['b'][None, :, None, None]


if __name__ == "__main__":
    key = jax.random.PRNGKey(0)
    k_x, k_p = jax.random.split(key)

    N, in_channels, H, W = 2, 8, 16, 16
    out_channels, num_classes = 16, 6
    rates = [1, 2, 3]

    x = jax.random.normal(k_x, (N, in_channels, H, W), dtype=jnp.float32)
    params = init_aspp_params(k_p, in_channels, out_channels, num_classes, rates)

    fwd = jax.jit(functools.partial(aspp_forward, rates=rates))
    y = fwd(x, params)
    jax.block_until_ready(y)
    assert y.shape == (N, num_classes, H, W), y.shape
    assert bool(jnp.all(jnp.isfinite(y)))

    # Loose tolerance: kernel path feeds bf16 operands to the MXU (f32 accumulation,
    # f32 BN statistics) and writes the final slab in bf16.
    y_ref = aspp_reference(x, params, rates)
    err = float(jnp.max(jnp.abs(y - y_ref)))
    assert err < 1.5e-1, f"max abs error vs reference too large: {err}"
    print("KERNEL_OK")
</pallas_src>

<mosaic_0001>
module attributes {stable_mosaic.version = 11 : i64} {
  func.func @kernel(%arg0: i32, %arg1: i32, %arg2: memref<1x1x14x22x8xbf16, #tpu.memory_space<vmem>>, %arg3: memref<8x16xbf16, #tpu.memory_space<vmem>>, %arg4: memref<72x16xbf16, #tpu.memory_space<vmem>>, %arg5: memref<72x16xbf16, #tpu.memory_space<vmem>>, %arg6: memref<72x16xbf16, #tpu.memory_space<vmem>>, %arg7: memref<128x128xbf16, #tpu.memory_space<vmem>>, %arg8: memref<1x2x128xf32, #tpu.memory_space<vmem>>) attributes {dimension_semantics = [#tpu.dimension_semantics<parallel>, #tpu.dimension_semantics<parallel>], iteration_bounds = array<i64: 2, 2>, scalar_prefetch = 0 : i64, scratch_operands = 0 : i64, tpu.core_type = #tpu.core_type<tc>, window_params = [{transform_indices = @transform_0, window_bounds = array<i64: 1, 1, 14, 22, 8>}, {pipeline_mode = #tpu.pipeline_mode<synchronous>, transform_indices = @transform_1, window_bounds = array<i64: 8, 16>}, {pipeline_mode = #tpu.pipeline_mode<synchronous>, transform_indices = @transform_2, window_bounds = array<i64: 72, 16>}, {pipeline_mode = #tpu.pipeline_mode<synchronous>, transform_indices = @transform_3, window_bounds = array<i64: 72, 16>}, {pipeline_mode = #tpu.pipeline_mode<synchronous>, transform_indices = @transform_4, window_bounds = array<i64: 72, 16>}, {transform_indices = @transform_5, window_bounds = array<i64: 128, 128>}, {transform_indices = @transform_6, window_bounds = array<i64: 1, 2, 128>}]} {
    %c0 = arith.constant 0 : index
    %c0_0 = arith.constant 0 : index
    %c3 = arith.constant 3 : index
    %c3_1 = arith.constant 3 : index
    %c0_2 = arith.constant 0 : index
    %0 = vector.load %arg2[%c0, %c0_0, %c3, %c3_1, %c0_2] : memref<1x1x14x22x8xbf16, #tpu.memory_space<vmem>>, vector<1x1x8x16x8xbf16>
    %1 = vector.shape_cast %0 : vector<1x1x8x16x8xbf16> to vector<8x16x8xbf16>
    %2 = vector.shape_cast %1 : vector<8x16x8xbf16> to vector<128x8xbf16>
    %c0_3 = arith.constant 0 : index
    %c0_4 = arith.constant 0 : index
    %3 = vector.load %arg3[%c0_3, %c0_4] : memref<8x16xbf16, #tpu.memory_space<vmem>>, vector<8x16xbf16>
    %cst = arith.constant dense<0.000000e+00> : vector<128x16xf32>
    %4 = tpu.matmul %2, %3, %cst {dimension_numbers = #tpu.dot_dimension_numbers<[1], [0], [0], [1], [0, 0, 1, 1], [], []>} : vector<128x8xbf16>, vector<8x16xbf16>, vector<128x16xf32> -> vector<128x16xf32>
    %c0_5 = arith.constant 0 : index
    %c0_6 = arith.constant 0 : index
    %c2 = arith.constant 2 : index
    %c2_7 = arith.constant 2 : index
    %c0_8 = arith.constant 0 : index
    %5 = vector.load %arg2[%c0_5, %c0_6, %c2, %c2_7, %c0_8] : memref<1x1x14x22x8xbf16, #tpu.memory_space<vmem>>, vector<1x1x8x16x8xbf16>
    %6 = vector.shape_cast %5 : vector<1x1x8x16x8xbf16> to vector<8x16x8xbf16>
    %c0_9 = arith.constant 0 : index
    %c0_10 = arith.constant 0 : index
    %c2_11 = arith.constant 2 : index
    %c3_12 = arith.constant 3 : index
    %c0_13 = arith.constant 0 : index
    %7 = vector.load %arg2[%c0_9, %c0_10, %c2_11, %c3_12, %c0_13] : memref<1x1x14x22x8xbf16, #tpu.memory_space<vmem>>, vector<1x1x8x16x8xbf16>
    %8 = vector.shape_cast %7 : vector<1x1x8x16x8xbf16> to vector<8x16x8xbf16>
    %c0_14 = arith.constant 0 : index
    %c0_15 = arith.constant 0 : index
    %c2_16 = arith.constant 2 : index
    %c4 = arith.constant 4 : index
    %c0_17 = arith.constant 0 : index
    %9 = vector.load %arg2[%c0_14, %c0_15, %c2_16, %c4, %c0_17] : memref<1x1x14x22x8xbf16, #tpu.memory_space<vmem>>, vector<1x1x8x16x8xbf16>
    %10 = vector.shape_cast %9 : vector<1x1x8x16x8xbf16> to vector<8x16x8xbf16>
    %c0_18 = arith.constant 0 : index
    %c0_19 = arith.constant 0 : index
    %c3_20 = arith.constant 3 : index
    %c2_21 = arith.constant 2 : index
    %c0_22 = arith.constant 0 : index
    %11 = vector.load %arg2[%c0_18, %c0_19, %c3_20, %c2_21, %c0_22] : memref<1x1x14x22x8xbf16, #tpu.memory_space<vmem>>, vector<1x1x8x16x8xbf16>
    %12 = vector.shape_cast %11 : vector<1x1x8x16x8xbf16> to vector<8x16x8xbf16>
    %c0_23 = arith.constant 0 : index
    %c0_24 = arith.constant 0 : index
    %c3_25 = arith.constant 3 : index
    %c3_26 = arith.constant 3 : index
    %c0_27 = arith.constant 0 : index
    %13 = vector.load %arg2[%c0_23, %c0_24, %c3_25, %c3_26, %c0_27] : memref<1x1x14x22x8xbf16, #tpu.memory_space<vmem>>, vector<1x1x8x16x8xbf16>
    %14 = vector.shape_cast %13 : vector<1x1x8x16x8xbf16> to vector<8x16x8xbf16>
    %c0_28 = arith.constant 0 : index
    %c0_29 = arith.constant 0 : index
    %c3_30 = arith.constant 3 : index
    %c4_31 = arith.constant 4 : index
    %c0_32 = arith.constant 0 : index
    %15 = vector.load %arg2[%c0_28, %c0_29, %c3_30, %c4_31, %c0_32] : memref<1x1x14x22x8xbf16, #tpu.memory_space<vmem>>, vector<1x1x8x16x8xbf16>
    %16 = vector.shape_cast %15 : vector<1x1x8x16x8xbf16> to vector<8x16x8xbf16>
    %c0_33 = arith.constant 0 : index
    %c0_34 = arith.constant 0 : index
    %c4_35 = arith.constant 4 : index
    %c2_36 = arith.constant 2 : index
    %c0_37 = arith.constant 0 : index
    %17 = vector.load %arg2[%c0_33, %c0_34, %c4_35, %c2_36, %c0_37] : memref<1x1x14x22x8xbf16, #tpu.memory_space<vmem>>, vector<1x1x8x16x8xbf16>
    %18 = vector.shape_cast %17 : vector<1x1x8x16x8xbf16> to vector<8x16x8xbf16>
    %c0_38 = arith.constant 0 : index
    %c0_39 = arith.constant 0 : index
    %c4_40 = arith.constant 4 : index
    %c3_41 = arith.constant 3 : index
    %c0_42 = arith.constant 0 : index
    %19 = vector.load %arg2[%c0_38, %c0_39, %c4_40, %c3_41, %c0_42] : memref<1x1x14x22x8xbf16, #tpu.memory_space<vmem>>, vector<1x1x8x16x8xbf16>
    %20 = vector.shape_cast %19 : vector<1x1x8x16x8xbf16> to vector<8x16x8xbf16>
    %c0_43 = arith.constant 0 : index
    %c0_44 = arith.constant 0 : index
    %c4_45 = arith.constant 4 : index
    %c4_46 = arith.constant 4 : index
    %c0_47 = arith.constant 0 : index
    %21 = vector.load %arg2[%c0_43, %c0_44, %c4_45, %c4_46, %c0_47] : memref<1x1x14x22x8xbf16, #tpu.memory_space<vmem>>, vector<1x1x8x16x8xbf16>
    %22 = vector.shape_cast %21 : vector<1x1x8x16x8xbf16> to vector<8x16x8xbf16>
    %23 = tpu.concatenate %6, %8, %10, %12, %14, %16, %18, %20, %22 in 2 : vector<8x16x8xbf16>, vector<8x16x8xbf16>, vector<8x16x8xbf16>, vector<8x16x8xbf16>, vector<8x16x8xbf16>, vector<8x16x8xbf16>, vector<8x16x8xbf16>, vector<8x16x8xbf16>, vector<8x16x8xbf16> -> vector<8x16x72xbf16>
    %24 = vector.shape_cast %23 : vector<8x16x72xbf16> to vector<128x72xbf16>
    %c0_48 = arith.constant 0 : index
    %c0_49 = arith.constant 0 : index
    %25 = vector.load %arg4[%c0_48, %c0_49] : memref<72x16xbf16, #tpu.memory_space<vmem>>, vector<72x16xbf16>
    %cst_50 = arith.constant dense<0.000000e+00> : vector<128x16xf32>
    %26 = tpu.matmul %24, %25, %cst_50 {dimension_numbers = #tpu.dot_dimension_numbers<[1], [0], [0], [1], [0, 0, 1, 1], [], []>} : vector<128x72xbf16>, vector<72x16xbf16>, vector<128x16xf32> -> vector<128x16xf32>
    %c0_51 = arith.constant 0 : index
    %c0_52 = arith.constant 0 : index
    %c1 = arith.constant 1 : index
    %c1_53 = arith.constant 1 : index
    %c0_54 = arith.constant 0 : index
    %27 = vector.load %arg2[%c0_51, %c0_52, %c1, %c1_53, %c0_54] : memref<1x1x14x22x8xbf16, #tpu.memory_space<vmem>>, vector<1x1x8x16x8xbf16>
    %28 = vector.shape_cast %27 : vector<1x1x8x16x8xbf16> to vector<8x16x8xbf16>
    %c0_55 = arith.constant 0 : index
    %c0_56 = arith.constant 0 : index
    %c1_57 = arith.constant 1 : index
    %c3_58 = arith.constant 3 : index
    %c0_59 = arith.constant 0 : index
    %29 = vector.load %arg2[%c0_55, %c0_56, %c1_57, %c3_58, %c0_59] : memref<1x1x14x22x8xbf16, #tpu.memory_space<vmem>>, vector<1x1x8x16x8xbf16>
    %30 = vector.shape_cast %29 : vector<1x1x8x16x8xbf16> to vector<8x16x8xbf16>
    %c0_60 = arith.constant 0 : index
    %c0_61 = arith.constant 0 : index
    %c1_62 = arith.constant 1 : index
    %c5 = arith.constant 5 : index
    %c0_63 = arith.constant 0 : index
    %31 = vector.load %arg2[%c0_60, %c0_61, %c1_62, %c5, %c0_63] : memref<1x1x14x22x8xbf16, #tpu.memory_space<vmem>>, vector<1x1x8x16x8xbf16>
    %32 = vector.shape_cast %31 : vector<1x1x8x16x8xbf16> to vector<8x16x8xbf16>
    %c0_64 = arith.constant 0 : index
    %c0_65 = arith.constant 0 : index
    %c3_66 = arith.constant 3 : index
    %c1_67 = arith.constant 1 : index
    %c0_68 = arith.constant 0 : index
    %33 = vector.load %arg2[%c0_64, %c0_65, %c3_66, %c1_67, %c0_68] : memref<1x1x14x22x8xbf16, #tpu.memory_space<vmem>>, vector<1x1x8x16x8xbf16>
    %34 = vector.shape_cast %33 : vector<1x1x8x16x8xbf16> to vector<8x16x8xbf16>
    %c0_69 = arith.constant 0 : index
    %c0_70 = arith.constant 0 : index
    %c3_71 = arith.constant 3 : index
    %c3_72 = arith.constant 3 : index
    %c0_73 = arith.constant 0 : index
    %35 = vector.load %arg2[%c0_69, %c0_70, %c3_71, %c3_72, %c0_73] : memref<1x1x14x22x8xbf16, #tpu.memory_space<vmem>>, vector<1x1x8x16x8xbf16>
    %36 = vector.shape_cast %35 : vector<1x1x8x16x8xbf16> to vector<8x16x8xbf16>
    %c0_74 = arith.constant 0 : index
    %c0_75 = arith.constant 0 : index
    %c3_76 = arith.constant 3 : index
    %c5_77 = arith.constant 5 : index
    %c0_78 = arith.constant 0 : index
    %37 = vector.load %arg2[%c0_74, %c0_75, %c3_76, %c5_77, %c0_78] : memref<1x1x14x22x8xbf16, #tpu.memory_space<vmem>>, vector<1x1x8x16x8xbf16>
    %38 = vector.shape_cast %37 : vector<1x1x8x16x8xbf16> to vector<8x16x8xbf16>
    %c0_79 = arith.constant 0 : index
    %c0_80 = arith.constant 0 : index
    %c5_81 = arith.constant 5 : index
    %c1_82 = arith.constant 1 : index
    %c0_83 = arith.constant 0 : index
    %39 = vector.load %arg2[%c0_79, %c0_80, %c5_81, %c1_82, %c0_83] : memref<1x1x14x22x8xbf16, #tpu.memory_space<vmem>>, vector<1x1x8x16x8xbf16>
    %40 = vector.shape_cast %39 : vector<1x1x8x16x8xbf16> to vector<8x16x8xbf16>
    %c0_84 = arith.constant 0 : index
    %c0_85 = arith.constant 0 : index
    %c5_86 = arith.constant 5 : index
    %c3_87 = arith.constant 3 : index
    %c0_88 = arith.constant 0 : index
    %41 = vector.load %arg2[%c0_84, %c0_85, %c5_86, %c3_87, %c0_88] : memref<1x1x14x22x8xbf16, #tpu.memory_space<vmem>>, vector<1x1x8x16x8xbf16>
    %42 = vector.shape_cast %41 : vector<1x1x8x16x8xbf16> to vector<8x16x8xbf16>
    %c0_89 = arith.constant 0 : index
    %c0_90 = arith.constant 0 : index
    %c5_91 = arith.constant 5 : index
    %c5_92 = arith.constant 5 : index
    %c0_93 = arith.constant 0 : index
    %43 = vector.load %arg2[%c0_89, %c0_90, %c5_91, %c5_92, %c0_93] : memref<1x1x14x22x8xbf16, #tpu.memory_space<vmem>>, vector<1x1x8x16x8xbf16>
    %44 = vector.shape_cast %43 : vector<1x1x8x16x8xbf16> to vector<8x16x8xbf16>
    %45 = tpu.concatenate %28, %30, %32, %34, %36, %38, %40, %42, %44 in 2 : vector<8x16x8xbf16>, vector<8x16x8xbf16>, vector<8x16x8xbf16>, vector<8x16x8xbf16>, vector<8x16x8xbf16>, vector<8x16x8xbf16>, vector<8x16x8xbf16>, vector<8x16x8xbf16>, vector<8x16x8xbf16> -> vector<8x16x72xbf16>
    %46 = vector.shape_cast %45 : vector<8x16x72xbf16> to vector<128x72xbf16>
    %c0_94 = arith.constant 0 : index
    %c0_95 = arith.constant 0 : index
    %47 = vector.load %arg5[%c0_94, %c0_95] : memref<72x16xbf16, #tpu.memory_space<vmem>>, vector<72x16xbf16>
    %cst_96 = arith.constant dense<0.000000e+00> : vector<128x16xf32>
    %48 = tpu.matmul %46, %47, %cst_96 {dimension_numbers = #tpu.dot_dimension_numbers<[1], [0], [0], [1], [0, 0, 1, 1], [], []>} : vector<128x72xbf16>, vector<72x16xbf16>, vector<128x16xf32> -> vector<128x16xf32>
    %c0_97 = arith.constant 0 : index
    %c0_98 = arith.constant 0 : index
    %c0_99 = arith.constant 0 : index
    %c0_100 = arith.constant 0 : index
    %c0_101 = arith.constant 0 : index
    %49 = vector.load %arg2[%c0_97, %c0_98, %c0_99, %c0_100, %c0_101] : memref<1x1x14x22x8xbf16, #tpu.memory_space<vmem>>, vector<1x1x8x16x8xbf16>
    %50 = vector.shape_cast %49 : vector<1x1x8x16x8xbf16> to vector<8x16x8xbf16>
    %c0_102 = arith.constant 0 : index
    %c0_103 = arith.constant 0 : index
    %c0_104 = arith.constant 0 : index
    %c3_105 = arith.constant 3 : index
    %c0_106 = arith.constant 0 : index
    %51 = vector.load %arg2[%c0_102, %c0_103, %c0_104, %c3_105, %c0_106] : memref<1x1x14x22x8xbf16, #tpu.memory_space<vmem>>, vector<1x1x8x16x8xbf16>
    %52 = vector.shape_cast %51 : vector<1x1x8x16x8xbf16> to vector<8x16x8xbf16>
    %c0_107 = arith.constant 0 : index
    %c0_108 = arith.constant 0 : index
    %c0_109 = arith.constant 0 : index
    %c6 = arith.constant 6 : index
    %c0_110 = arith.constant 0 : index
    %53 = vector.load %arg2[%c0_107, %c0_108, %c0_109, %c6, %c0_110] : memref<1x1x14x22x8xbf16, #tpu.memory_space<vmem>>, vector<1x1x8x16x8xbf16>
    %54 = vector.shape_cast %53 : vector<1x1x8x16x8xbf16> to vector<8x16x8xbf16>
    %c0_111 = arith.constant 0 : index
    %c0_112 = arith.constant 0 : index
    %c3_113 = arith.constant 3 : index
    %c0_114 = arith.constant 0 : index
    %c0_115 = arith.constant 0 : index
    %55 = vector.load %arg2[%c0_111, %c0_112, %c3_113, %c0_114, %c0_115] : memref<1x1x14x22x8xbf16, #tpu.memory_space<vmem>>, vector<1x1x8x16x8xbf16>
    %56 = vector.shape_cast %55 : vector<1x1x8x16x8xbf16> to vector<8x16x8xbf16>
    %c0_116 = arith.constant 0 : index
    %c0_117 = arith.constant 0 : index
    %c3_118 = arith.constant 3 : index
    %c3_119 = arith.constant 3 : index
    %c0_120 = arith.constant 0 : index
    %57 = vector.load %arg2[%c0_116, %c0_117, %c3_118, %c3_119, %c0_120] : memref<1x1x14x22x8xbf16, #tpu.memory_space<vmem>>, vector<1x1x8x16x8xbf16>
    %58 = vector.shape_cast %57 : vector<1x1x8x16x8xbf16> to vector<8x16x8xbf16>
    %c0_121 = arith.constant 0 : index
    %c0_122 = arith.constant 0 : index
    %c3_123 = arith.constant 3 : index
    %c6_124 = arith.constant 6 : index
    %c0_125 = arith.constant 0 : index
    %59 = vector.load %arg2[%c0_121, %c0_122, %c3_123, %c6_124, %c0_125] : memref<1x1x14x22x8xbf16, #tpu.memory_space<vmem>>, vector<1x1x8x16x8xbf16>
    %60 = vector.shape_cast %59 : vector<1x1x8x16x8xbf16> to vector<8x16x8xbf16>
    %c0_126 = arith.constant 0 : index
    %c0_127 = arith.constant 0 : index
    %c6_128 = arith.constant 6 : index
    %c0_129 = arith.constant 0 : index
    %c0_130 = arith.constant 0 : index
    %61 = vector.load %arg2[%c0_126, %c0_127, %c6_128, %c0_129, %c0_130] : memref<1x1x14x22x8xbf16, #tpu.memory_space<vmem>>, vector<1x1x8x16x8xbf16>
    %62 = vector.shape_cast %61 : vector<1x1x8x16x8xbf16> to vector<8x16x8xbf16>
    %c0_131 = arith.constant 0 : index
    %c0_132 = arith.constant 0 : index
    %c6_133 = arith.constant 6 : index
    %c3_134 = arith.constant 3 : index
    %c0_135 = arith.constant 0 : index
    %63 = vector.load %arg2[%c0_131, %c0_132, %c6_133, %c3_134, %c0_135] : memref<1x1x14x22x8xbf16, #tpu.memory_space<vmem>>, vector<1x1x8x16x8xbf16>
    %64 = vector.shape_cast %63 : vector<1x1x8x16x8xbf16> to vector<8x16x8xbf16>
    %c0_136 = arith.constant 0 : index
    %c0_137 = arith.constant 0 : index
    %c6_138 = arith.constant 6 : index
    %c6_139 = arith.constant 6 : index
    %c0_140 = arith.constant 0 : index
    %65 = vector.load %arg2[%c0_136, %c0_137, %c6_138, %c6_139, %c0_140] : memref<1x1x14x22x8xbf16, #tpu.memory_space<vmem>>, vector<1x1x8x16x8xbf16>
    %66 = vector.shape_cast %65 : vector<1x1x8x16x8xbf16> to vector<8x16x8xbf16>
    %67 = tpu.concatenate %50, %52, %54, %56, %58, %60, %62, %64, %66 in 2 : vector<8x16x8xbf16>, vector<8x16x8xbf16>, vector<8x16x8xbf16>, vector<8x16x8xbf16>, vector<8x16x8xbf16>, vector<8x16x8xbf16>, vector<8x16x8xbf16>, vector<8x16x8xbf16>, vector<8x16x8xbf16> -> vector<8x16x72xbf16>
    %68 = vector.shape_cast %67 : vector<8x16x72xbf16> to vector<128x72xbf16>
    %c0_141 = arith.constant 0 : index
    %c0_142 = arith.constant 0 : index
    %69 = vector.load %arg6[%c0_141, %c0_142] : memref<72x16xbf16, #tpu.memory_space<vmem>>, vector<72x16xbf16>
    %cst_143 = arith.constant dense<0.000000e+00> : vector<128x16xf32>
    %70 = tpu.matmul %68, %69, %cst_143 {dimension_numbers = #tpu.dot_dimension_numbers<[1], [0], [0], [1], [0, 0, 1, 1], [], []>} : vector<128x72xbf16>, vector<72x16xbf16>, vector<128x16xf32> -> vector<128x16xf32>
    %cst_144 = arith.constant 0.000000e+00 : f32
    %71 = vector.broadcast %cst_144 : f32 to vector<128x64xf32>
    %72 = tpu.concatenate %4, %26, %48, %70, %71 in 1 : vector<128x16xf32>, vector<128x16xf32>, vector<128x16xf32>, vector<128x16xf32>, vector<128x64xf32> -> vector<128x128xf32>
    %73 = arith.truncf %72 : vector<128x128xf32> to vector<128x128xbf16>
    %c0_145 = arith.constant 0 : index
    %c0_146 = arith.constant 0 : index
    %74 = vector.load %arg7[%c0_145, %c0_146] : memref<128x128xbf16, #tpu.memory_space<vmem>>, vector<128x128xbf16>
    tpu.vector_store %arg7[%c0_145, %c0_146], %73 {strides = array<i32>} : memref<128x128xbf16, #tpu.memory_space<vmem>>, vector<128x128xbf16>,
    %cst_147 = arith.constant dense<0.000000e+00> : vector<128xf32>
    %75 = vector.multi_reduction <add>, %72, %cst_147 [0] : vector<128x128xf32> to vector<128xf32>
    %76 = vector.shape_cast %75 : vector<128xf32> to vector<1x128xf32>
    %77 = arith.mulf %72, %72 : vector<128x128xf32>
    %cst_148 = arith.constant dense<0.000000e+00> : vector<128xf32>
    %78 = vector.multi_reduction <add>, %77, %cst_148 [0] : vector<128x128xf32> to vector<128xf32>
    %79 = vector.shape_cast %78 : vector<128xf32> to vector<1x128xf32>
    %80 = tpu.concatenate %76, %79 in 0 : vector<1x128xf32>, vector<1x128xf32> -> vector<2x128xf32>
    %81 = vector.shape_cast %80 : vector<2x128xf32> to vector<1x2x128xf32>
    %c0_149 = arith.constant 0 : index
    %c0_150 = arith.constant 0 : index
    %c0_151 = arith.constant 0 : index
    %82 = vector.load %arg8[%c0_149, %c0_150, %c0_151] : memref<1x2x128xf32, #tpu.memory_space<vmem>>, vector<1x2x128xf32>
    tpu.vector_store %arg8[%c0_149, %c0_150, %c0_151], %81 {strides = array<i32>} : memref<1x2x128xf32, #tpu.memory_space<vmem>>, vector<1x2x128xf32>,
    return
  }
  func.func @transform_0(%arg0: i32, %arg1: i32) -> (i32, i32, i32, i32, i32) {
    %c0_i32 = arith.constant 0 : i32
    %c0_i32_0 = arith.constant 0 : i32
    %c0_i32_1 = arith.constant 0 : i32
    %c0_i32_2 = arith.constant 0 : i32
    return %arg0, %arg1, %c0_i32, %c0_i32_0, %c0_i32_1 : i32, i32, i32, i32, i32
  }
  func.func @transform_1(%arg0: i32, %arg1: i32) -> (i32, i32) {
    %c0_i32 = arith.constant 0 : i32
    %c0_i32_0 = arith.constant 0 : i32
    %c0_i32_1 = arith.constant 0 : i32
    return %c0_i32, %c0_i32_0 : i32, i32
  }
  func.func @transform_2(%arg0: i32, %arg1: i32) -> (i32, i32) {
    %c0_i32 = arith.constant 0 : i32
    %c0_i32_0 = arith.constant 0 : i32
    %c0_i32_1 = arith.constant 0 : i32
    return %c0_i32, %c0_i32_0 : i32, i32
  }
  func.func @transform_3(%arg0: i32, %arg1: i32) -> (i32, i32) {
    %c0_i32 = arith.constant 0 : i32
    %c0_i32_0 = arith.constant 0 : i32
    %c0_i32_1 = arith.constant 0 : i32
    return %c0_i32, %c0_i32_0 : i32, i32
  }
  func.func @transform_4(%arg0: i32, %arg1: i32) -> (i32, i32) {
    %c0_i32 = arith.constant 0 : i32
    %c0_i32_0 = arith.constant 0 : i32
    %c0_i32_1 = arith.constant 0 : i32
    return %c0_i32, %c0_i32_0 : i32, i32
  }
  func.func @transform_5(%arg0: i32, %arg1: i32) -> (i32, i32) {
    %c2_i32 = arith.constant 2 : i32
    %0 = arith.muli %arg0, %c2_i32 : i32
    %1 = arith.addi %0, %arg1 : i32
    %c0_i32 = arith.constant 0 : i32
    %c0_i32_0 = arith.constant 0 : i32
    return %1, %c0_i32 : i32, i32
  }
  func.func @transform_6(%arg0: i32, %arg1: i32) -> (i32, i32, i32) {
    %c2_i32 = arith.constant 2 : i32
    %0 = arith.muli %arg0, %c2_i32 : i32
    %1 = arith.addi %0, %arg1 : i32
    %c0_i32 = arith.constant 0 : i32
    %c0_i32_0 = arith.constant 0 : i32
    %c0_i32_1 = arith.constant 0 : i32
    return %1, %c0_i32, %c0_i32_0 : i32, i32, i32
  }
}

module attributes {stable_mosaic.version = 11 : i64} {
  func.func @kernel(%arg0: i32, %arg1: i32, %arg2: memref<128x128xbf16, #tpu.memory_space<vmem>>, %arg3: memref<1x128xf32, #tpu.memory_space<vmem>>, %arg4: memref<1x128xf32, #tpu.memory_space<vmem>>, %arg5: memref<128x128xbf16, #tpu.memory_space<vmem>>, %arg6: memref<1x1x128xf32, #tpu.memory_space<vmem>>, %arg7: memref<128x128xbf16, #tpu.memory_space<vmem>>, %arg8: memref<1x2x128xf32, #tpu.memory_space<vmem>>) attributes {dimension_semantics = [#tpu.dimension_semantics<parallel>, #tpu.dimension_semantics<parallel>], iteration_bounds = array<i64: 2, 2>, scalar_prefetch = 0 : i64, scratch_operands = 0 : i64, tpu.core_type = #tpu.core_type<tc>, window_params = [{transform_indices = @transform_0, window_bounds = array<i64: 128, 128>}, {pipeline_mode = #tpu.pipeline_mode<synchronous>, transform_indices = @transform_1, window_bounds = array<i64: 1, 128>}, {pipeline_mode = #tpu.pipeline_mode<synchronous>, transform_indices = @transform_2, window_bounds = array<i64: 1, 128>}, {pipeline_mode = #tpu.pipeline_mode<synchronous>, transform_indices = @transform_3, window_bounds = array<i64: 128, 128>}, {transform_indices = @transform_4, window_bounds = array<i64: 1, 1, 128>}, {transform_indices = @transform_5, window_bounds = array<i64: 128, 128>}, {transform_indices = @transform_6, window_bounds = array<i64: 1, 2, 128>}]} {
    %c0 = arith.constant 0 : index
    %c0_0 = arith.constant 0 : index
    %0 = vector.load %arg2[%c0, %c0_0] : memref<128x128xbf16, #tpu.memory_space<vmem>>, vector<128x128xbf16>
    %1 = arith.extf %0 : vector<128x128xbf16> to vector<128x128xf32>
    %c0_1 = arith.constant 0 : index
    %c0_2 = arith.constant 0 : index
    %2 = vector.load %arg3[%c0_1, %c0_2] : memref<1x128xf32, #tpu.memory_space<vmem>>, vector<1x128xf32>
    %3 = vector.broadcast %2 : vector<1x128xf32> to vector<128x128xf32>
    %4 = arith.mulf %1, %3 : vector<128x128xf32>
    %c0_3 = arith.constant 0 : index
    %c0_4 = arith.constant 0 : index
    %5 = vector.load %arg4[%c0_3, %c0_4] : memref<1x128xf32, #tpu.memory_space<vmem>>, vector<1x128xf32>
    %6 = vector.broadcast %5 : vector<1x128xf32> to vector<128x128xf32>
    %7 = arith.addf %4, %6 : vector<128x128xf32>
    %cst = arith.constant 0.000000e+00 : f32
    %8 = vector.broadcast %cst : f32 to vector<128x128xf32>
    %9 = arith.maximumf %7, %8 : vector<128x128xf32>
    %10 = arith.truncf %9 : vector<128x128xf32> to vector<128x128xbf16>
    %c0_5 = arith.constant 0 : index
    %c0_6 = arith.constant 0 : index
    %11 = vector.load %arg5[%c0_5, %c0_6] : memref<128x128xbf16, #tpu.memory_space<vmem>>, vector<128x128xbf16>
    %cst_7 = arith.constant dense<0.000000e+00> : vector<128x128xf32>
    %12 = tpu.matmul %10, %11, %cst_7 {dimension_numbers = #tpu.dot_dimension_numbers<[1], [0], [0], [1], [0, 0, 1, 1], [], []>} : vector<128x128xbf16>, vector<128x128xbf16>, vector<128x128xf32> -> vector<128x128xf32>
    %c0_8 = arith.constant 0 : index
    %c0_9 = arith.constant 0 : index
    %c0_10 = arith.constant 0 : index
    %13 = vector.load %arg6[%c0_8, %c0_9, %c0_10] : memref<1x1x128xf32, #tpu.memory_space<vmem>>, vector<1x1x128xf32>
    %14 = vector.shape_cast %13 : vector<1x1x128xf32> to vector<1x128xf32>
    %15 = vector.broadcast %14 : vector<1x128xf32> to vector<128x128xf32>
    %16 = arith.addf %12, %15 : vector<128x128xf32>
    %17 = arith.truncf %16 : vector<128x128xf32> to vector<128x128xbf16>
    %c0_11 = arith.constant 0 : index
    %c0_12 = arith.constant 0 : index
    %18 = vector.load %arg7[%c0_11, %c0_12] : memref<128x128xbf16, #tpu.memory_space<vmem>>, vector<128x128xbf16>
    tpu.vector_store %arg7[%c0_11, %c0_12], %17 {strides = array<i32>} : memref<128x128xbf16, #tpu.memory_space<vmem>>, vector<128x128xbf16>,
    %cst_13 = arith.constant dense<0.000000e+00> : vector<128xf32>
    %19 = vector.multi_reduction <add>, %16, %cst_13 [0] : vector<128x128xf32> to vector<128xf32>
    %20 = vector.shape_cast %19 : vector<128xf32> to vector<1x128xf32>
    %21 = arith.mulf %16, %16 : vector<128x128xf32>
    %cst_14 = arith.constant dense<0.000000e+00> : vector<128xf32>
    %22 = vector.multi_reduction <add>, %21, %cst_14 [0] : vector<128x128xf32> to vector<128xf32>
    %23 = vector.shape_cast %22 : vector<128xf32> to vector<1x128xf32>
    %24 = tpu.concatenate %20, %23 in 0 : vector<1x128xf32>, vector<1x128xf32> -> vector<2x128xf32>
    %25 = vector.shape_cast %24 : vector<2x128xf32> to vector<1x2x128xf32>
    %c0_15 = arith.constant 0 : index
    %c0_16 = arith.constant 0 : index
    %c0_17 = arith.constant 0 : index
    %26 = vector.load %arg8[%c0_15, %c0_16, %c0_17] : memref<1x2x128xf32, #tpu.memory_space<vmem>>, vector<1x2x128xf32>
    tpu.vector_store %arg8[%c0_15, %c0_16, %c0_17], %25 {strides = array<i32>} : memref<1x2x128xf32, #tpu.memory_space<vmem>>, vector<1x2x128xf32>,
    return
  }
  func.func @transform_0(%arg0: i32, %arg1: i32) -> (i32, i32) {
    %c2_i32 = arith.constant 2 : i32
    %0 = arith.muli %arg0, %c2_i32 : i32
    %1 = arith.addi %0, %arg1 : i32
    %c0_i32 = arith.constant 0 : i32
    %c0_i32_0 = arith.constant 0 : i32
    return %1, %c0_i32 : i32, i32
  }
  func.func @transform_1(%arg0: i32, %arg1: i32) -> (i32, i32) {
    %c0_i32 = arith.constant 0 : i32
    %c0_i32_0 = arith.constant 0 : i32
    %c0_i32_1 = arith.constant 0 : i32
    return %c0_i32, %c0_i32_0 : i32, i32
  }
  func.func @transform_2(%arg0: i32, %arg1: i32) -> (i32, i32) {
    %c0_i32 = arith.constant 0 : i32
    %c0_i32_0 = arith.constant 0 : i32
    %c0_i32_1 = arith.constant 0 : i32
    return %c0_i32, %c0_i32_0 : i32, i32
  }
  func.func @transform_3(%arg0: i32, %arg1: i32) -> (i32, i32) {
    %c0_i32 = arith.constant 0 : i32
    %c0_i32_0 = arith.constant 0 : i32
    %c0_i32_1 = arith.constant 0 : i32
    return %c0_i32, %c0_i32_0 : i32, i32
  }
  func.func @transform_4(%arg0: i32, %arg1: i32) -> (i32, i32, i32) {
    %c0_i32 = arith.constant 0 : i32
    %c0_i32_0 = arith.constant 0 : i32
    %c0_i32_1 = arith.constant 0 : i32
    return %arg0, %c0_i32, %c0_i32_0 : i32, i32, i32
  }
  func.func @transform_5(%arg0: i32, %arg1: i32) -> (i32, i32) {
    %c2_i32 = arith.constant 2 : i32
    %0 = arith.muli %arg0, %c2_i32 : i32
    %1 = arith.addi %0, %arg1 : i32
    %c0_i32 = arith.constant 0 : i32
    %c0_i32_0 = arith.constant 0 : i32
    return %1, %c0_i32 : i32, i32
  }
  func.func @transform_6(%arg0: i32, %arg1: i32) -> (i32, i32, i32) {
    %c2_i32 = arith.constant 2 : i32
    %0 = arith.muli %arg0, %c2_i32 : i32
    %1 = arith.addi %0, %arg1 : i32
    %c0_i32 = arith.constant 0 : i32
    %c0_i32_0 = arith.constant 0 : i32
    %c0_i32_1 = arith.constant 0 : i32
    return %1, %c0_i32, %c0_i32_0 : i32, i32, i32
  }
}

module attributes {stable_mosaic.version = 11 : i64} {
  func.func @kernel(%arg0: i32, %arg1: memref<128x128xbf16, #tpu.memory_space<vmem>>, %arg2: memref<1x128xf32, #tpu.memory_space<vmem>>, %arg3: memref<1x128xf32, #tpu.memory_space<vmem>>, %arg4: memref<128x128xbf16, #tpu.memory_space<vmem>>, %arg5: memref<1x128xf32, #tpu.memory_space<vmem>>, %arg6: memref<128x128xbf16, #tpu.memory_space<vmem>>) attributes {dimension_semantics = [#tpu.dimension_semantics<parallel>], iteration_bounds = array<i64: 4>, scalar_prefetch = 0 : i64, scratch_operands = 0 : i64, tpu.core_type = #tpu.core_type<tc>, window_params = [{transform_indices = @transform_0, window_bounds = array<i64: 128, 128>}, {pipeline_mode = #tpu.pipeline_mode<synchronous>, transform_indices = @transform_1, window_bounds = array<i64: 1, 128>}, {pipeline_mode = #tpu.pipeline_mode<synchronous>, transform_indices = @transform_2, window_bounds = array<i64: 1, 128>}, {pipeline_mode = #tpu.pipeline_mode<synchronous>, transform_indices = @transform_3, window_bounds = array<i64: 128, 128>}, {pipeline_mode = #tpu.pipeline_mode<synchronous>, transform_indices = @transform_4, window_bounds = array<i64: 1, 128>}, {transform_indices = @transform_5, window_bounds = array<i64: 128, 128>}]} {
    %c0 = arith.constant 0 : index
    %c0_0 = arith.constant 0 : index
    %0 = vector.load %arg1[%c0, %c0_0] : memref<128x128xbf16, #tpu.memory_space<vmem>>, vector<128x128xbf16>
    %1 = arith.extf %0 : vector<128x128xbf16> to vector<128x128xf32>
    %c0_1 = arith.constant 0 : index
    %c0_2 = arith.constant 0 : index
    %2 = vector.load %arg2[%c0_1, %c0_2] : memref<1x128xf32, #tpu.memory_space<vmem>>, vector<1x128xf32>
    %3 = vector.broadcast %2 : vector<1x128xf32> to vector<128x128xf32>
    %4 = arith.mulf %1, %3 : vector<128x128xf32>
    %c0_3 = arith.constant 0 : index
    %c0_4 = arith.constant 0 : index
    %5 = vector.load %arg3[%c0_3, %c0_4] : memref<1x128xf32, #tpu.memory_space<vmem>>, vector<1x128xf32>
    %6 = vector.broadcast %5 : vector<1x128xf32> to vector<128x128xf32>
    %7 = arith.addf %4, %6 : vector<128x128xf32>
    %cst = arith.constant 0.000000e+00 : f32
    %8 = vector.broadcast %cst : f32 to vector<128x128xf32>
    %9 = arith.maximumf %7, %8 : vector<128x128xf32>
    %10 = arith.truncf %9 : vector<128x128xf32> to vector<128x128xbf16>
    %c0_5 = arith.constant 0 : index
    %c0_6 = arith.constant 0 : index
    %11 = vector.load %arg4[%c0_5, %c0_6] : memref<128x128xbf16, #tpu.memory_space<vmem>>, vector<128x128xbf16>
    %cst_7 = arith.constant dense<0.000000e+00> : vector<128x128xf32>
    %12 = tpu.matmul %10, %11, %cst_7 {dimension_numbers = #tpu.dot_dimension_numbers<[1], [0], [0], [1], [0, 0, 1, 1], [], []>} : vector<128x128xbf16>, vector<128x128xbf16>, vector<128x128xf32> -> vector<128x128xf32>
    %c0_8 = arith.constant 0 : index
    %c0_9 = arith.constant 0 : index
    %13 = vector.load %arg5[%c0_8, %c0_9] : memref<1x128xf32, #tpu.memory_space<vmem>>, vector<1x128xf32>
    %14 = vector.broadcast %13 : vector<1x128xf32> to vector<128x128xf32>
    %15 = arith.addf %12, %14 : vector<128x128xf32>
    %16 = arith.truncf %15 : vector<128x128xf32> to vector<128x128xbf16>
    %c0_10 = arith.constant 0 : index
    %c0_11 = arith.constant 0 : index
    %17 = vector.load %arg6[%c0_10, %c0_11] : memref<128x128xbf16, #tpu.memory_space<vmem>>, vector<128x128xbf16>
    tpu.vector_store %arg6[%c0_10, %c0_11], %16 {strides = array<i32>} : memref<128x128xbf16, #tpu.memory_space<vmem>>, vector<128x128xbf16>,
    return
  }
  func.func @transform_0(%arg0: i32) -> (i32, i32) {
    %c0_i32 = arith.constant 0 : i32
    %c0_i32_0 = arith.constant 0 : i32
    return %arg0, %c0_i32 : i32, i32
  }
  func.func @transform_1(%arg0: i32) -> (i32, i32) {
    %c0_i32 = arith.constant 0 : i32
    %c0_i32_0 = arith.constant 0 : i32
    %c0_i32_1 = arith.constant 0 : i32
    return %c0_i32, %c0_i32_0 : i32, i32
  }
  func.func @transform_2(%arg0: i32) -> (i32, i32) {
    %c0_i32 = arith.constant 0 : i32
    %c0_i32_0 = arith.constant 0 : i32
    %c0_i32_1 = arith.constant 0 : i32
    return %c0_i32, %c0_i32_0 : i32, i32
  }
  func.func @transform_3(%arg0: i32) -> (i32, i32) {
    %c0_i32 = arith.constant 0 : i32
    %c0_i32_0 = arith.constant 0 : i32
    %c0_i32_1 = arith.constant 0 : i32
    return %c0_i32, %c0_i32_0 : i32, i32
  }
  func.func @transform_4(%arg0: i32) -> (i32, i32) {
    %c0_i32 = arith.constant 0 : i32
    %c0_i32_0 = arith.constant 0 : i32
    %c0_i32_1 = arith.constant 0 : i32
    return %c0_i32, %c0_i32_0 : i32, i32
  }
  func.func @transform_5(%arg0: i32) -> (i32, i32) {
    %c0_i32 = arith.constant 0 : i32
    %c0_i32_0 = arith.constant 0 : i32
    return %arg0, %c0_i32 : i32, i32
  }
}

</mosaic_0001>

<llo_original>
// kernel: aspp_forward.4
$region0: #{aspp_forward.4}
  #allocation0 [shape = 'u32[]', space=smem, size = 0x4, offset = 0x4, fixed_abs, tag = 'smem constant byte address 0x4 - core index']
  #allocation1 [shape = 'u32[144,128]{1,0:T(1,128)}', space=vmem, size = 0x12000, scoped, tag = 'internal scratch']
  %s0 = inlined_call_operand.vmem [shape: bf16[512,128], index: 0, kind: input, shape index: {}]
  %s1 = inlined_call_operand.vmem [shape: f32[1,128], index: 1, kind: input, shape index: {}]
  %s2 = inlined_call_operand.vmem [shape: f32[1,128], index: 2, kind: input, shape index: {}]
  %s3 = inlined_call_operand.vmem [shape: bf16[128,128], index: 3, kind: input, shape index: {}]
  %s4 = inlined_call_operand.vmem [shape: f32[2,1,128], index: 4, kind: input, shape index: {}]
  %s5 = inlined_call_operand.vmem [shape: bf16[512,128], index: 5, kind: output, shape index: {0}]
  %s6 = inlined_call_operand.vmem [shape: f32[4,2,128], index: 6, kind: output, shape index: {1}]
  %7 = xla_tuple %s5, %s6
  %s8 = sld [smem:[#allocation0]]
  $region61: #{aspp_forward.4} parent=0
    _
  %s10 = ssub.s32 1, %s8
  %s11 = scalar_select 0, %s10, %s8
  loop: start=0, step=1, limit=6
  $region2: #{aspp_forward.4} parent=0 // loop_pre_header
    _
  $region3: #{aspp_forward.4} parent=0 // loop_header
    %s13 = sphi 0, %s17
    %p14 = scmp.ge.s32.totalorder %s13, 6
    %s20 = sphi 0, %s32
    %s21 = sphi 0, %s28
    %s22 = sphi 0, %s20
    %s23 = sphi 0, %s21
    %s24 = sphi 0, %s22
    %s25 = sphi 0, %s23
    %s39 = sphi 0, %s41
    %s42 = sphi 0, %s39
    %s43 = sphi 0, %s42
    %s59 = sphi 0, %s43
    %s63 = sphi 0, %s63
    %s65 = sphi 0, %s63
    %s66 = sphi 0, %s65
    %s80 = sphi 0, %s66
    %s84 = sphi 0, %s84
    %s86 = sphi 0, %s84
    %s87 = sphi 0, %s86
    %s101 = sphi 0, %s87
    %s105 = sphi 0, %s105
    %s107 = sphi 0, %s105
    %s108 = sphi 0, %s107
    %s122 = sphi 0, %s108
    %s128 = sphi 0, %s130
    %s131 = sphi 0, %s128
    %s132 = sphi 0, %s131
    %s148 = sphi 0, %s132
    %s158 = sphi 0, %s160
    %s161 = sphi 0, %s158
    %s162 = sphi 0, %s161
    %s178 = sphi 0, %s162
    %s188 = sphi 0, %s190
    %s191 = sphi 0, %s188
    %s192 = sphi 0, %s191
    %s208 = sphi 0, %s192
  $region4: #{aspp_forward.4} parent=0 // loop_header_branch
    %16 = sbr.rel (%p14) target = $region8
  $region5: #{aspp_forward.4} parent=0 // loop_body
    %s18 = ssub.s32 %s13, 1
    %s19 = ssub.s32 %s13, 2
    %s26 = sadd.s32 1, %s21
    %p27 = scmp.ge.s32.totalorder %s26, 2
    %s28 = scalar_select %p27, 0, %s26
    %s29 = sadd.s32 1, %s20
    %s30 = scalar_select %p27, %s29, %s20
    %p31 = scmp.ge.s32.totalorder %s30, 2
    %s32 = scalar_select %p31, 0, %s30
    %s33 = smul.u32 %s20, 2
    %s34 = sadd.s32 %s33, %s21
    %s35 = smul.u32 %s32, 2
    %s36 = sadd.s32 %s35, %s28
    %s37 = ssub.s32 %s34, %s36
    %p38 = scmp.eq.s32.totalorder %s37, 0
    %s40 = sadd.s32 %s39, 1
    %s41 = scalar_select %p38, %s39, %s40
    %p44 = pneg %p38
    %p45 = scmp.eq.s32.totalorder %s13, 3
    %p46 = por %p44, %p45
    %p47 = scmp.ne.s32.totalorder %s39, %s42
    %p48 = scmp.eq.s32.totalorder %s13, 0
    %p49 = por %p47, %p48
    %p50 = scmp.ne.s32.totalorder %s39, %s42
    %p51 = scmp.eq.s32.totalorder %s18, 3
    %p52 = por %p50, %p51
    %p53 = scmp.ne.s32.totalorder %s42, %s43
    %p54 = scmp.eq.s32.totalorder %s18, 0
    %p55 = por %p53, %p54
    %p56 = scmp.ne.s32.totalorder %s42, %s43
    %p57 = scmp.eq.s32.totalorder %s19, 3
    %p58 = por %p56, %p57
    %p60 = scmp.ne.s32.totalorder %s43, %s59
    %p61 = scmp.eq.s32.totalorder %s19, 0
    %p62 = por %p60, %p61
    %s64 = sadd.s32 %s63, 1
    %p67 = scmp.eq.s32.totalorder %s13, 3
    %p68 = scmp.ne.s32.totalorder %s63, %s65
    %p69 = scmp.eq.s32.totalorder %s13, 0
    %p70 = por %p68, %p69
    %p71 = scmp.ne.s32.totalorder %s63, %s65
    %p72 = scmp.eq.s32.totalorder %s18, 3
    %p73 = por %p71, %p72
    %p74 = scmp.ne.s32.totalorder %s65, %s66
    %p75 = scmp.eq.s32.totalorder %s18, 0
    %p76 = por %p74, %p75
    %p77 = scmp.ne.s32.totalorder %s65, %s66
    %p78 = scmp.eq.s32.totalorder %s19, 3
    %p79 = por %p77, %p78
    %p81 = scmp.ne.s32.totalorder %s66, %s80
    %p82 = scmp.eq.s32.totalorder %s19, 0
    %p83 = por %p81, %p82
    %s85 = sadd.s32 %s84, 1
    %p88 = scmp.eq.s32.totalorder %s13, 3
    %p89 = scmp.ne.s32.totalorder %s84, %s86
    %p90 = scmp.eq.s32.totalorder %s13, 0
    %p91 = por %p89, %p90
    %p92 = scmp.ne.s32.totalorder %s84, %s86
    %p93 = scmp.eq.s32.totalorder %s18, 3
    %p94 = por %p92, %p93
    %p95 = scmp.ne.s32.totalorder %s86, %s87
    %p96 = scmp.eq.s32.totalorder %s18, 0
    %p97 = por %p95, %p96
    %p98 = scmp.ne.s32.totalorder %s86, %s87
    %p99 = scmp.eq.s32.totalorder %s19, 3
    %p100 = por %p98, %p99
    %p102 = scmp.ne.s32.totalorder %s87, %s101
    %p103 = scmp.eq.s32.totalorder %s19, 0
    %p104 = por %p102, %p103
    %s106 = sadd.s32 %s105, 1
    %p109 = scmp.eq.s32.totalorder %s13, 3
    %p110 = scmp.ne.s32.totalorder %s105, %s107
    %p111 = scmp.eq.s32.totalorder %s13, 0
    %p112 = por %p110, %p111
    %p113 = scmp.ne.s32.totalorder %s105, %s107
    %p114 = scmp.eq.s32.totalorder %s18, 3
    %p115 = por %p113, %p114
    %p116 = scmp.ne.s32.totalorder %s107, %s108
    %p117 = scmp.eq.s32.totalorder %s18, 0
    %p118 = por %p116, %p117
    %p119 = scmp.ne.s32.totalorder %s107, %s108
    %p120 = scmp.eq.s32.totalorder %s19, 3
    %p121 = por %p119, %p120
    %p123 = scmp.ne.s32.totalorder %s108, %s122
    %p124 = scmp.eq.s32.totalorder %s19, 0
    %p125 = por %p123, %p124
    %s126 = ssub.s32 %s20, %s32
    %p127 = scmp.eq.s32.totalorder %s126, 0
    %s129 = sadd.s32 %s128, 1
    %s130 = scalar_select %p127, %s128, %s129
    %p133 = pneg %p127
    %p134 = scmp.eq.s32.totalorder %s13, 3
    %p135 = por %p133, %p134
    %p136 = scmp.ne.s32.totalorder %s128, %s131
    %p137 = scmp.eq.s32.totalorder %s13, 0
    %p138 = por %p136, %p137
    %p139 = scmp.ne.s32.totalorder %s128, %s131
    %p140 = scmp.eq.s32.totalorder %s18, 3
    %p141 = por %p139, %p140
    %p142 = scmp.ne.s32.totalorder %s131, %s132
    %p143 = scmp.eq.s32.totalorder %s18, 0
    %p144 = por %p142, %p143
    %p145 = scmp.ne.s32.totalorder %s131, %s132
    %p146 = scmp.eq.s32.totalorder %s19, 3
    %p147 = por %p145, %p146
    %p149 = scmp.ne.s32.totalorder %s132, %s148
    %p150 = scmp.eq.s32.totalorder %s19, 0
    %p151 = por %p149, %p150
    %s152 = smul.u32 %s20, 2
    %s153 = sadd.s32 %s152, %s21
    %s154 = smul.u32 %s32, 2
    %s155 = sadd.s32 %s154, %s28
    %s156 = ssub.s32 %s153, %s155
    %p157 = scmp.eq.s32.totalorder %s156, 0
    %s159 = sadd.s32 %s158, 1
    %s160 = scalar_select %p157, %s158, %s159
    %p163 = pneg %p157
    %p164 = scmp.eq.s32.totalorder %s13, 3
    %p165 = por %p163, %p164
    %p166 = scmp.ne.s32.totalorder %s158, %s161
    %p167 = scmp.eq.s32.totalorder %s13, 0
    %p168 = por %p166, %p167
    %p169 = scmp.ne.s32.totalorder %s158, %s161
    %p170 = scmp.eq.s32.totalorder %s18, 3
    %p171 = por %p169, %p170
    %p172 = scmp.ne.s32.totalorder %s161, %s162
    %p173 = scmp.eq.s32.totalorder %s18, 0
    %p174 = por %p172, %p173
    %p175 = scmp.ne.s32.totalorder %s161, %s162
    %p176 = scmp.eq.s32.totalorder %s19, 3
    %p177 = por %p175, %p176
    %p179 = scmp.ne.s32.totalorder %s162, %s178
    %p180 = scmp.eq.s32.totalorder %s19, 0
    %p181 = por %p179, %p180
    %s182 = smul.u32 %s20, 2
    %s183 = sadd.s32 %s182, %s21
    %s184 = smul.u32 %s32, 2
    %s185 = sadd.s32 %s184, %s28
    %s186 = ssub.s32 %s183, %s185
    %p187 = scmp.eq.s32.totalorder %s186, 0
    %s189 = sadd.s32 %s188, 1
    %s190 = scalar_select %p187, %s188, %s189
    %p193 = pneg %p187
    %p194 = scmp.eq.s32.totalorder %s13, 3
    %p195 = por %p193, %p194
    %p196 = scmp.ne.s32.totalorder %s188, %s191
    %p197 = scmp.eq.s32.totalorder %s13, 0
    %p198 = por %p196, %p197
    %p199 = scmp.ne.s32.totalorder %s188, %s191
    %p200 = scmp.eq.s32.totalorder %s18, 3
    %p201 = por %p199, %p200
    %p202 = scmp.ne.s32.totalorder %s191, %s192
    %p203 = scmp.eq.s32.totalorder %s18, 0
    %p204 = por %p202, %p203
    %p205 = scmp.ne.s32.totalorder %s191, %s192
    %p206 = scmp.eq.s32.totalorder %s19, 3
    %p207 = por %p205, %p206
    %p209 = scmp.ne.s32.totalorder %s192, %s208
    %p210 = scmp.eq.s32.totalorder %s19, 0
    %p211 = por %p209, %p210
    %p212 = scmp.le.s32.totalorder 1, %s13
    %p213 = scmp.lt.s32.totalorder %s13, 5
    %p214 = pnand %p212, %p213
    %p215 = pneg %p214
    // Predicated region
    $region9: #{aspp_forward.4} parent=5 // pred_check
      _
    $region10: #{aspp_forward.4} parent=5 // pred_check_branch
      %217 = sbr.rel (%p214) target = $region12
    $region11: #{aspp_forward.4} parent=5 // pred_region
      %s218 = ssub.s32 %s13, 1
      // Predicated region
      $region13: #{aspp_forward.4} parent=11 // pred_check
        %p219 = pneg %p76
      $region14: #{aspp_forward.4} parent=11 // pred_check_branch
        %221 = sbr.rel (%p219) target = $region16
      $region15: #{aspp_forward.4} parent=11 // pred_region
        _
      $region16: #{aspp_forward.4} parent=11 // pred_fallthru
        _
      // Predicated region
      $region17: #{aspp_forward.4} parent=11 // pred_check
        %p222 = pneg %p97
      $region18: #{aspp_forward.4} parent=11 // pred_check_branch
        %224 = sbr.rel (%p222) target = $region20
      $region19: #{aspp_forward.4} parent=11 // pred_region
        _
      $region20: #{aspp_forward.4} parent=11 // pred_fallthru
        _
      // Predicated region
      $region21: #{aspp_forward.4} parent=11 // pred_check
        %p225 = pneg %p118
      $region22: #{aspp_forward.4} parent=11 // pred_check_branch
        %227 = sbr.rel (%p225) target = $region24
      $region23: #{aspp_forward.4} parent=11 // pred_region
        _
      $region24: #{aspp_forward.4} parent=11 // pred_fallthru
        _
    $region12: #{aspp_forward.4} parent=5 // pred_fallthru
      _
    %p228 = scmp.lt.s32.totalorder %s13, 4
    // Predicated region
    $region25: #{aspp_forward.4} parent=5 // pred_check
      %p229 = pneg %p228
    $region26: #{aspp_forward.4} parent=5 // pred_check_branch
      %231 = sbr.rel (%p229) target = $region28
    $region27: #{aspp_forward.4} parent=5 // pred_region
      // Predicated region
      $region29: #{aspp_forward.4} parent=27 // pred_check
        %p232 = pneg %p49
      $region30: #{aspp_forward.4} parent=27 // pred_check_branch
        %234 = sbr.rel (%p232) target = $region32
      $region31: #{aspp_forward.4} parent=27 // pred_region
        %s235 = smul.u32 %s20, 2
        %s236 = sadd.s32 %s235, %s21
        %s237 = smul.u32 16, %s236
        %p238 = scmp.lt.s32.totalorder %s237, 63
        %s239 = scalar_select %p238, %s237, 63
        %s240 = smul.addr %s239, 4
        %s241 = scalar_lea.vmem %s0, %s240
        %s242 = smul.u32 %s20, 2
        %s243 = sadd.s32 %s242, %s21
        %s244 = smul.u32 16, %s243
      $region32: #{aspp_forward.4} parent=27 // pred_fallthru
        _
      // Predicated region
      $region33: #{aspp_forward.4} parent=27 // pred_check
        %p245 = pneg %p138
      $region34: #{aspp_forward.4} parent=27 // pred_check_branch
        %247 = sbr.rel (%p245) target = $region36
      $region35: #{aspp_forward.4} parent=27 // pred_region
        %p248 = scmp.lt.s32.totalorder %s20, 1
        %s249 = scalar_select %p248, %s20, 1
        %s250 = scalar_lea.vmem %s4, %s249
      $region36: #{aspp_forward.4} parent=27 // pred_fallthru
        _
    $region28: #{aspp_forward.4} parent=5 // pred_fallthru
      _
    %p251 = scmp.le.s32.totalorder 1, %s13
    %p252 = scmp.lt.s32.totalorder %s13, 5
    %p253 = pnand %p251, %p252
    %p254 = pneg %p253
    // Predicated region
    $region37: #{aspp_forward.4} parent=5 // pred_check
      _
    $region38: #{aspp_forward.4} parent=5 // pred_check_branch
      %256 = sbr.rel (%p253) target = $region40
    $region39: #{aspp_forward.4} parent=5 // pred_region
      %s257 = ssub.s32 %s13, 1
      %s258 = smul.u32 %s22, 2
      %s259 = sadd.s32 %s258, %s23
      %s260 = smul.u32 16, %s259
      %p261 = scmp.lt.s32.totalorder %s260, 63
      %s262 = scalar_select %p261, %s260, 63
      %s263 = smul.addr %s262, 4
      %s264 = scalar_lea.vmem %s0, %s263
      %p265 = pneg %p55
      %p266 = pneg %p52
      %p267 = pneg %p76
      %p268 = pneg %p73
      %p269 = pneg %p97
      %p270 = pneg %p94
      %p271 = pneg %p118
      %p272 = pneg %p115
      %p273 = scmp.lt.s32.totalorder %s22, 1
      %s274 = scalar_select %p273, %s22, 1
      %s275 = scalar_lea.vmem %s4, %s274
      %p276 = pneg %p144
      %p277 = pneg %p141
      %p278 = pneg %p174
      %p279 = pneg %p171
      %s280 = smul.u32 %s22, 2
      %s281 = sadd.s32 %s280, %s23
      %s282 = smul.u32 16, %s281
      %p283 = scmp.lt.s32.totalorder %s282, 63
      %s284 = scalar_select %p283, %s282, 63
      %s285 = smul.addr %s284, 4
      %s286 = scalar_lea.vmem %s5, %s285
      %p287 = pneg %p204
      %p288 = pneg %p201
      %s289 = smul.u32 %s22, 2
      %s290 = sadd.s32 %s289, %s23
      %p291 = scmp.lt.s32.totalorder %s290, 3
      %s292 = scalar_select %p291, %s290, 3
      %s293 = smul.addr %s292, 2
      %s294 = scalar_lea.vmem %s6, %s293
      %s295 = smul.u32 %s22, 2
      %s296 = sadd.s32 %s295, %s23
      %s297 = smul.u32 16, %s296
      %p298 = scmp.lt.s32.totalorder %s297, 63
      %s299 = scalar_select %p298, %s297, 63
      %s300 = smul.addr %s299, 4
      %s301 = scalar_lea.vmem %s0, %s300
      %s302 = smul.u32 %s22, 2
      %s303 = sadd.s32 %s302, %s23
      %s304 = smul.u32 16, %s303
      %p305 = scmp.lt.s32.totalorder %s22, 1
      %s306 = scalar_select %p305, %s22, 1
      %s307 = scalar_lea.vmem %s4, %s306
      %s308 = smul.u32 %s22, 2
      %s309 = sadd.s32 %s308, %s23
      %s310 = smul.u32 16, %s309
      %p311 = scmp.lt.s32.totalorder %s310, 63
      %s312 = scalar_select %p311, %s310, 63
      %s313 = smul.addr %s312, 4
      %s314 = scalar_lea.vmem %s5, %s313
      %s315 = smul.u32 %s22, 2
      %s316 = sadd.s32 %s315, %s23
      %s317 = smul.u32 16, %s316
      %s318 = smul.u32 %s22, 2
      %s319 = sadd.s32 %s318, %s23
      %p320 = scmp.lt.s32.totalorder %s319, 3
      %s321 = scalar_select %p320, %s319, 3
      %s322 = smul.addr %s321, 2
      %s323 = scalar_lea.vmem %s6, %s322
      %s324 = smul.u32 %s22, 2
      %s325 = sadd.s32 %s324, %s23
      %v327 = vld [vmem:[%s301] sm:$0xf]
      %v328 = vld [vmem:[%s301 + $0x4] sm:$0xf]
      %v329 = vld [vmem:[%s301 + $0x8] sm:$0xf]
      %v330 = vld [vmem:[%s301 + $0xc] sm:$0xf]
      %v331 = vld [vmem:[%s301 + $0x10] sm:$0xf]
      %v332 = vld [vmem:[%s301 + $0x14] sm:$0xf]
      %v333 = vld [vmem:[%s301 + $0x18] sm:$0xf]
      %v334 = vld [vmem:[%s301 + $0x1c] sm:$0xf]
      %v335 = vld [vmem:[%s301 + $0x20] sm:$0xf]
      %v336 = vld [vmem:[%s301 + $0x24] sm:$0xf]
      %v337 = vld [vmem:[%s301 + $0x28] sm:$0xf]
      %v338 = vld [vmem:[%s301 + $0x2c] sm:$0xf]
      %v339 = vld [vmem:[%s301 + $0x30] sm:$0xf]
      %v340 = vld [vmem:[%s301 + $0x34] sm:$0xf]
      %v341 = vld [vmem:[%s301 + $0x38] sm:$0xf]
      %v342 = vld [vmem:[%s301 + $0x3c] sm:$0xf]
      %v343 = vunpack.c.l.bf16 %v327
      %v344 = vunpack.c.l.bf16 %v328
      %v345 = vunpack.c.l.bf16 %v329
      %v346 = vunpack.c.l.bf16 %v330
      %v347 = vunpack.c.l.bf16 %v331
      %v348 = vunpack.c.l.bf16 %v332
      %v349 = vunpack.c.l.bf16 %v333
      %v350 = vunpack.c.l.bf16 %v334
      %v351 = vunpack.c.l.bf16 %v335
      %v352 = vunpack.c.l.bf16 %v336
      %v353 = vunpack.c.l.bf16 %v337
      %v354 = vunpack.c.l.bf16 %v338
      %v355 = vunpack.c.l.bf16 %v339
      %v356 = vunpack.c.l.bf16 %v340
      %v357 = vunpack.c.l.bf16 %v341
      %v358 = vunpack.c.l.bf16 %v342
      %v359 = vld [vmem:[%s1] sm:$0x1]
      %v361 = vlaneseq
      %v362 = vshrl.u32 %v361, 7
      %v363 = vsub.s32 0, %v362
      %v364 = vrot.slane %v359, %v363
      %v366 = vmul.f32 %v343, %v364
      %v367 = vmul.f32 %v344, %v364
      %v368 = vmul.f32 %v345, %v364
      %v369 = vmul.f32 %v346, %v364
      %v370 = vmul.f32 %v347, %v364
      %v371 = vmul.f32 %v348, %v364
      %v372 = vmul.f32 %v349, %v364
      %v373 = vmul.f32 %v350, %v364
      %v374 = vmul.f32 %v351, %v364
      %v375 = vmul.f32 %v352, %v364
      %v376 = vmul.f32 %v353, %v364
      %v377 = vmul.f32 %v354, %v364
      %v378 = vmul.f32 %v355, %v364
      %v379 = vmul.f32 %v356, %v364
      %v380 = vmul.f32 %v357, %v364
      %v381 = vmul.f32 %v358, %v364
      %v382 = vld [vmem:[%s2] sm:$0x1]
      %v384 = vlaneseq
      %v385 = vshrl.u32 %v384, 7
      %v386 = vsub.s32 0, %v385
      %v387 = vrot.slane %v382, %v386
      %v389 = vadd.f32 %v366, %v387
      %v390 = vadd.f32 %v367, %v387
      %v391 = vadd.f32 %v368, %v387
      %v392 = vadd.f32 %v369, %v387
      %v393 = vadd.f32 %v370, %v387
      %v394 = vadd.f32 %v371, %v387
      %v395 = vadd.f32 %v372, %v387
      %v396 = vadd.f32 %v373, %v387
      %v397 = vadd.f32 %v374, %v387
      %v398 = vadd.f32 %v375, %v387
      %v399 = vadd.f32 %v376, %v387
      %v400 = vadd.f32 %v377, %v387
      %v401 = vadd.f32 %v378, %v387
      %v402 = vadd.f32 %v379, %v387
      %v403 = vadd.f32 %v380, %v387
      %v404 = vadd.f32 %v381, %v387
      %v405 = vmax.f32 %v389, 0.0
      %v406 = vmax.f32 %v390, 0.0
      %v407 = vmax.f32 %v391, 0.0
      %v408 = vmax.f32 %v392, 0.0
      %v409 = vmax.f32 %v393, 0.0
      %v410 = vmax.f32 %v394, 0.0
      %v411 = vmax.f32 %v395, 0.0
      %v412 = vmax.f32 %v396, 0.0
      %v413 = vmax.f32 %v397, 0.0
      %v414 = vmax.f32 %v398, 0.0
      %v415 = vmax.f32 %v399, 0.0
      %v416 = vmax.f32 %v400, 0.0
      %v417 = vmax.f32 %v401, 0.0
      %v418 = vmax.f32 %v402, 0.0
      %v419 = vmax.f32 %v403, 0.0
      %v420 = vmax.f32 %v404, 0.0
      %v421 = vpack.c.bf16 %v406, %v405
      %v422 = vpack.c.bf16 %v408, %v407
      %v423 = vpack.c.bf16 %v410, %v409
      %v424 = vpack.c.bf16 %v412, %v411
      %v425 = vpack.c.bf16 %v414, %v413
      %v426 = vpack.c.bf16 %v416, %v415
      %v427 = vpack.c.bf16 %v418, %v417
      %v428 = vpack.c.bf16 %v420, %v419
      %v429 = vld [vmem:[%s3] sm:$0xf]
      %v430 = vld [vmem:[%s3 + $0x4] sm:$0xf]
      %v431 = vld [vmem:[%s3 + $0x8] sm:$0xf]
      %v432 = vld [vmem:[%s3 + $0xc] sm:$0xf]
      %v433 = vld [vmem:[%s3 + $0x10] sm:$0xf]
      %v434 = vld [vmem:[%s3 + $0x14] sm:$0xf]
      %v435 = vld [vmem:[%s3 + $0x18] sm:$0xf]
      %v436 = vld [vmem:[%s3 + $0x1c] sm:$0xf]
      %v437 = vld [vmem:[%s3 + $0x20] sm:$0xf]
      %v438 = vld [vmem:[%s3 + $0x24] sm:$0xf]
      %v439 = vld [vmem:[%s3 + $0x28] sm:$0xf]
      %v440 = vld [vmem:[%s3 + $0x2c] sm:$0xf]
      %v441 = vld [vmem:[%s3 + $0x30] sm:$0xf]
      %v442 = vld [vmem:[%s3 + $0x34] sm:$0xf]
      %v443 = vld [vmem:[%s3 + $0x38] sm:$0xf]
      %v444 = vld [vmem:[%s3 + $0x3c] sm:$0xf]
      %v445 = vld [vmem:[%s307] sm:$0x1]
      %v447 = vlaneseq
      %v448 = vshrl.u32 %v447, 7
      %v449 = vsub.s32 0, %v448
      %v450 = vrot.slane %v445, %v449
      %v468 = vunpack.c.l.b16 %v429
      %v469 = vunpack.c.l.b16 %v430
      %v470 = vunpack.c.l.b16 %v431
      %v471 = vunpack.c.l.b16 %v432
      %v472 = vunpack.c.l.b16 %v433
      %v473 = vunpack.c.l.b16 %v434
      %v474 = vunpack.c.l.b16 %v435
      %v475 = vunpack.c.l.b16 %v436
      %v476 = vunpack.c.l.b16 %v437
      %v477 = vunpack.c.l.b16 %v438
      %v478 = vunpack.c.l.b16 %v439
      %v479 = vunpack.c.l.b16 %v440
      %v480 = vunpack.c.l.b16 %v441
      %v481 = vunpack.c.l.b16 %v442
      %v482 = vunpack.c.l.b16 %v443
      %v483 = vunpack.c.l.b16 %v444
      %v484 = vpack.c.b16 %v469, %v468
      %v485 = vpack.c.b16 %v471, %v470
      %v486 = vpack.c.b16 %v473, %v472
      %v487 = vpack.c.b16 %v475, %v474
      %v488 = vpack.c.b16 %v477, %v476
      %v489 = vpack.c.b16 %v479, %v478
      %v490 = vpack.c.b16 %v481, %v480
      %v491 = vpack.c.b16 %v483, %v482
      %500 = vmatprep.subr.bf16.mxu0 0
      %501 = vmatpush1.bf16.msra.mxu0 %v491
      %502 = vmatprep.subr.bf16.mxu0 0
      %503 = vmatpush1.bf16.msra.mxu0 %v490
      %504 = vmatprep.subr.bf16.mxu0 0
      %505 = vmatpush1.bf16.msra.mxu0 %v489
      %506 = vmatprep.subr.bf16.mxu0 0
      %507 = vmatpush1.bf16.msra.mxu0 %v488
      %508 = vmatprep.subr.bf16.mxu0 0
      %509 = vmatpush1.bf16.msra.mxu0 %v487
      %510 = vmatprep.subr.bf16.mxu0 0
      %511 = vmatpush1.bf16.msra.mxu0 %v486
      %512 = vmatprep.subr.bf16.mxu0 0
      %513 = vmatpush1.bf16.msra.mxu0 %v485
      %514 = vmatprep.subr.bf16.mxu0 0
      %515 = vmatpush1.bf16.msra.mxu0 %v484
      %516 = vmatprep.subr.bf16.mxu0 0
      %517 = vmatpush2.bf16.msra.mxu0 0
      %518 = vmatprep.subr.bf16.mxu0 0
      %519 = vmatpush2.bf16.msra.mxu0 0
      %520 = vmatprep.subr.bf16.mxu0 0
      %521 = vmatpush2.bf16.msra.mxu0 0
      %522 = vmatprep.subr.bf16.mxu0 0
      %523 = vmatpush2.bf16.msra.mxu0 0
      %524 = vmatprep.subr.bf16.mxu0 0
      %525 = vmatpush2.bf16.msra.mxu0 0
      %526 = vmatprep.subr.bf16.mxu0 0
      %527 = vmatpush2.bf16.msra.mxu0 0
      %528 = vmatprep.subr.bf16.mxu0 0
      %529 = vmatpush2.bf16.msra.mxu0 0
      %530 = vmatprep.subr.bf16.mxu0 0
      %531 = vmatpush2.bf16.msra.mxu0 0
      %532 = vmatprep.mubr.bf16.mxu0 0
      %533 = vmatmul.mubr.bf16.gmra.mxu0 %v421
      %v534 = vpop.f32.mrf.mxu0
      %v535 = vadd.f32 %v450, %v534
      %v536 = vpop.f32.mrf.mxu0
      %v537 = vpop.f32.mrf.mxu0
      %v538 = vadd.f32 %v450, %v537
      %v539 = vpop.f32.mrf.mxu0
      %540 = vmatprep.mubr.bf16.mxu0 0
      %541 = vmatmul.mubr.bf16.gmra.mxu0 %v422
      %v542 = vpop.f32.mrf.mxu0
      %v543 = vadd.f32 %v450, %v542
      %v544 = vpop.f32.mrf.mxu0
      %v545 = vpop.f32.mrf.mxu0
      %v546 = vadd.f32 %v450, %v545
      %v547 = vpop.f32.mrf.mxu0
      %548 = vmatprep.mubr.bf16.mxu0 0
      %549 = vmatmul.mubr.bf16.gmra.mxu0 %v423
      %v550 = vpop.f32.mrf.mxu0
      %v551 = vadd.f32 %v450, %v550
      %v552 = vpop.f32.mrf.mxu0
      %v553 = vpop.f32.mrf.mxu0
      %v554 = vadd.f32 %v450, %v553
      %v555 = vpop.f32.mrf.mxu0
      %556 = vmatprep.mubr.bf16.mxu0 0
      %557 = vmatmul.mubr.bf16.gmra.mxu0 %v424
      %v558 = vpop.f32.mrf.mxu0
      %v559 = vadd.f32 %v450, %v558
      %v560 = vpop.f32.mrf.mxu0
      %v561 = vpop.f32.mrf.mxu0
      %v562 = vadd.f32 %v450, %v561
      %v563 = vpop.f32.mrf.mxu0
      %564 = vmatprep.mubr.bf16.mxu0 0
      %565 = vmatmul.mubr.bf16.gmra.mxu0 %v425
      %v566 = vpop.f32.mrf.mxu0
      %v567 = vadd.f32 %v450, %v566
      %v568 = vpop.f32.mrf.mxu0
      %v569 = vpop.f32.mrf.mxu0
      %v570 = vadd.f32 %v450, %v569
      %v571 = vpop.f32.mrf.mxu0
      %572 = vmatprep.mubr.bf16.mxu0 0
      %573 = vmatmul.mubr.bf16.gmra.mxu0 %v426
      %v574 = vpop.f32.mrf.mxu0
      %v575 = vadd.f32 %v450, %v574
      %v576 = vpop.f32.mrf.mxu0
      %v577 = vpop.f32.mrf.mxu0
      %v578 = vadd.f32 %v450, %v577
      %v579 = vpop.f32.mrf.mxu0
      %580 = vmatprep.mubr.bf16.mxu0 0
      %581 = vmatmul.mubr.bf16.gmra.mxu0 %v427
      %v582 = vpop.f32.mrf.mxu0
      %v583 = vadd.f32 %v450, %v582
      %v584 = vpop.f32.mrf.mxu0
      %v585 = vpop.f32.mrf.mxu0
      %v586 = vadd.f32 %v450, %v585
      %v587 = vpop.f32.mrf.mxu0
      %588 = vmatprep.mubr.bf16.mxu0 0
      %589 = vmatmul.mubr.bf16.gmra.mxu0 %v428
      %v590 = vpop.f32.mrf.mxu0
      %v591 = vadd.f32 %v450, %v590
      %v592 = vpop.f32.mrf.mxu0
      %v593 = vpop.f32.mrf.mxu0
      %v594 = vadd.f32 %v450, %v593
      %v595 = vpop.f32.mrf.mxu0
      %596 = vdwg.mxu0
      %v597 = vpack.c.bf16 %v538, %v535
      %v598 = vpack.c.bf16 %v546, %v543
      %v599 = vpack.c.bf16 %v554, %v551
      %v600 = vpack.c.bf16 %v562, %v559
      %v601 = vpack.c.bf16 %v570, %v567
      %v602 = vpack.c.bf16 %v578, %v575
      %v603 = vpack.c.bf16 %v586, %v583
      %v604 = vpack.c.bf16 %v594, %v591
      %v613 = vunpack.c.l.b16 %v597
      %v614 = vunpack.c.h.b16 %v597
      %v615 = vunpack.c.l.b16 %v598
      %v616 = vunpack.c.h.b16 %v598
      %v617 = vunpack.c.l.b16 %v599
      %v618 = vunpack.c.h.b16 %v599
      %v619 = vunpack.c.l.b16 %v600
      %v620 = vunpack.c.h.b16 %v600
      %v621 = vunpack.c.l.b16 %v601
      %v622 = vunpack.c.h.b16 %v601
      %v623 = vunpack.c.l.b16 %v602
      %v624 = vunpack.c.h.b16 %v602
      %v625 = vunpack.c.l.b16 %v603
      %v626 = vunpack.c.h.b16 %v603
      %v627 = vunpack.c.l.b16 %v604
      %v628 = vunpack.c.h.b16 %v604
      %v629 = vpack.c.b16 %v613, %v613
      %v630 = vpack.c.b16 %v614, %v614
      %v631 = vpack.c.b16 %v615, %v615
      %v632 = vpack.c.b16 %v616, %v616
      %v633 = vpack.c.b16 %v617, %v617
      %v634 = vpack.c.b16 %v618, %v618
      %v635 = vpack.c.b16 %v619, %v619
      %v636 = vpack.c.b16 %v620, %v620
      %v637 = vpack.c.b16 %v621, %v621
      %v638 = vpack.c.b16 %v622, %v622
      %v639 = vpack.c.b16 %v623, %v623
      %v640 = vpack.c.b16 %v624, %v624
      %v641 = vpack.c.b16 %v625, %v625
      %v642 = vpack.c.b16 %v626, %v626
      %v643 = vpack.c.b16 %v627, %v627
      %v644 = vpack.c.b16 %v628, %v628
      %661 = vst [vmem:[%s314] sm:$0xf] %v629
      %662 = vst [vmem:[%s314 + $0x4] sm:$0xf] %v630
      %663 = vst [vmem:[%s314 + $0x8] sm:$0xf] %v631
      %664 = vst [vmem:[%s314 + $0xc] sm:$0xf] %v632
      %665 = vst [vmem:[%s314 + $0x10] sm:$0xf] %v633
      %666 = vst [vmem:[%s314 + $0x14] sm:$0xf] %v634
      %667 = vst [vmem:[%s314 + $0x18] sm:$0xf] %v635
      %668 = vst [vmem:[%s314 + $0x1c] sm:$0xf] %v636
      %669 = vst [vmem:[%s314 + $0x20] sm:$0xf] %v637
      %670 = vst [vmem:[%s314 + $0x24] sm:$0xf] %v638
      %671 = vst [vmem:[%s314 + $0x28] sm:$0xf] %v639
      %672 = vst [vmem:[%s314 + $0x2c] sm:$0xf] %v640
      %673 = vst [vmem:[%s314 + $0x30] sm:$0xf] %v641
      %674 = vst [vmem:[%s314 + $0x34] sm:$0xf] %v642
      %675 = vst [vmem:[%s314 + $0x38] sm:$0xf] %v643
      %676 = vst [vmem:[%s314 + $0x3c] sm:$0xf] %v644
      %v677 = vadd.f32 %v535, %v538
      %v678 = vadd.f32 %v677, %v543
      %v679 = vadd.f32 %v678, %v546
      %v680 = vadd.f32 %v679, %v551
      %v681 = vadd.f32 %v680, %v554
      %v682 = vadd.f32 %v681, %v559
      %v683 = vadd.f32 %v682, %v562
      %v684 = vadd.f32 %v683, %v567
      %v685 = vadd.f32 %v684, %v570
      %v686 = vadd.f32 %v685, %v575
      %v687 = vadd.f32 %v686, %v578
      %v688 = vadd.f32 %v687, %v583
      %v689 = vadd.f32 %v688, %v586
      %v690 = vadd.f32 %v689, %v591
      %v691 = vadd.f32 %v690, %v594
      %v692 = vrot.slane %v691, 4
      %v693 = vadd.f32 %v691, %v692
      %v694 = vrot.slane %v693, 2
      %v695 = vadd.f32 %v693, %v694
      %v696 = vrot.slane %v695, 1
      %v697 = vadd.f32 %v695, %v696
      %v698 = vmul.f32 %v535, %v535
      %v699 = vmul.f32 %v538, %v538
      %v700 = vmul.f32 %v543, %v543
      %v701 = vmul.f32 %v546, %v546
      %v702 = vmul.f32 %v551, %v551
      %v703 = vmul.f32 %v554, %v554
      %v704 = vmul.f32 %v559, %v559
      %v705 = vmul.f32 %v562, %v562
      %v706 = vmul.f32 %v567, %v567
      %v707 = vmul.f32 %v570, %v570
      %v708 = vmul.f32 %v575, %v575
      %v709 = vmul.f32 %v578, %v578
      %v710 = vmul.f32 %v583, %v583
      %v711 = vmul.f32 %v586, %v586
      %v712 = vmul.f32 %v591, %v591
      %v713 = vmul.f32 %v594, %v594
      %v714 = vadd.f32 %v698, %v699
      %v715 = vadd.f32 %v714, %v700
      %v716 = vadd.f32 %v715, %v701
      %v717 = vadd.f32 %v716, %v702
      %v718 = vadd.f32 %v717, %v703
      %v719 = vadd.f32 %v718, %v704
      %v720 = vadd.f32 %v719, %v705
      %v721 = vadd.f32 %v720, %v706
      %v722 = vadd.f32 %v721, %v707
      %v723 = vadd.f32 %v722, %v708
      %v724 = vadd.f32 %v723, %v709
      %v725 = vadd.f32 %v724, %v710
      %v726 = vadd.f32 %v725, %v711
      %v727 = vadd.f32 %v726, %v712
      %v728 = vadd.f32 %v727, %v713
      %v729 = vrot.slane %v728, 4
      %v730 = vadd.f32 %v728, %v729
      %v731 = vrot.slane %v730, 2
      %v732 = vadd.f32 %v730, %v731
      %v733 = vrot.slane %v732, 1
      %v734 = vadd.f32 %v732, %v733
      %vm735 = vcmask 1040384
      %v736 = vsel %vm735, %v697, %v734
      %737 = vst [vmem:[%s323] sm:$0x3] %v736
      %s738 = smul.u32 %s22, 2
      %s739 = sadd.s32 %s738, %s23
      %s740 = smul.u32 16, %s739
      %p741 = scmp.lt.s32.totalorder %s740, 63
      %s742 = scalar_select %p741, %s740, 63
      %s743 = smul.addr %s742, 4
      %s744 = scalar_lea.vmem %s5, %s743
      %s745 = smul.u32 %s22, 2
      %s746 = sadd.s32 %s745, %s23
      %p747 = scmp.lt.s32.totalorder %s746, 3
      %s748 = scalar_select %p747, %s746, 3
      %s749 = smul.addr %s748, 2
      %s750 = scalar_lea.vmem %s6, %s749
      // Predicated region
      $region41: #{aspp_forward.4} parent=39 // pred_check
        %p751 = pneg %p171
      $region42: #{aspp_forward.4} parent=39 // pred_check_branch
        %753 = sbr.rel (%p751) target = $region44
      $region43: #{aspp_forward.4} parent=39 // pred_region
        %s754 = smul.u32 %s22, 2
        %s755 = sadd.s32 %s754, %s23
        %s756 = smul.u32 16, %s755
      $region44: #{aspp_forward.4} parent=39 // pred_fallthru
        _
      // Predicated region
      $region45: #{aspp_forward.4} parent=39 // pred_check
        %p757 = pneg %p201
      $region46: #{aspp_forward.4} parent=39 // pred_check_branch
        %759 = sbr.rel (%p757) target = $region48
      $region47: #{aspp_forward.4} parent=39 // pred_region
        %s760 = smul.u32 %s22, 2
        %s761 = sadd.s32 %s760, %s23
      $region48: #{aspp_forward.4} parent=39 // pred_fallthru
        _
    $region40: #{aspp_forward.4} parent=5 // pred_fallthru
      _
    %p762 = scmp.le.s32.totalorder 2, %s13
    // Predicated region
    $region49: #{aspp_forward.4} parent=5 // pred_check
      %p763 = pneg %p762
    $region50: #{aspp_forward.4} parent=5 // pred_check_branch
      %765 = sbr.rel (%p763) target = $region52
    $region51: #{aspp_forward.4} parent=5 // pred_region
      %s766 = ssub.s32 %s13, 2
      // Predicated region
      $region53: #{aspp_forward.4} parent=51 // pred_check
        %p767 = pneg %p177
      $region54: #{aspp_forward.4} parent=51 // pred_check_branch
        %769 = sbr.rel (%p767) target = $region56
      $region55: #{aspp_forward.4} parent=51 // pred_region
        %s770 = smul.u32 %s24, 2
        %s771 = sadd.s32 %s770, %s25
        %s772 = smul.u32 16, %s771
        %p773 = scmp.lt.s32.totalorder %s772, 63
        %s774 = scalar_select %p773, %s772, 63
        %s775 = smul.addr %s774, 4
        %s776 = scalar_lea.vmem %s5, %s775
      $region56: #{aspp_forward.4} parent=51 // pred_fallthru
        _
      // Predicated region
      $region57: #{aspp_forward.4} parent=51 // pred_check
        %p777 = pneg %p207
      $region58: #{aspp_forward.4} parent=51 // pred_check_branch
        %779 = sbr.rel (%p777) target = $region60
      $region59: #{aspp_forward.4} parent=51 // pred_region
        %s780 = smul.u32 %s24, 2
        %s781 = sadd.s32 %s780, %s25
        %p782 = scmp.lt.s32.totalorder %s781, 3
        %s783 = scalar_select %p782, %s781, 3
        %s784 = smul.addr %s783, 2
        %s785 = scalar_lea.vmem %s6, %s784
      $region60: #{aspp_forward.4} parent=51 // pred_fallthru
        _
    $region52: #{aspp_forward.4} parent=5 // pred_fallthru
      _
  $region6: #{aspp_forward.4} parent=0 // loop_footer
    %s17 = sadd.s32 1, %s13
  $region7: #{aspp_forward.4} parent=0 // loop_footer_branch
    %12 = sbr.rel target = $region3
  $region8: #{aspp_forward.4} parent=0 // loop_exit
    _

// kernel: aspp_forward.5
$region0: #{aspp_forward.5}
  #allocation0 [shape = 'u32[]', space=smem, size = 0x4, offset = 0x4, fixed_abs, tag = 'smem constant byte address 0x4 - core index']
  #allocation1 [shape = 'u32[144,128]{1,0:T(1,128)}', space=vmem, size = 0x12000, scoped, tag = 'internal scratch']
  %s0 = inlined_call_operand.vmem [shape: bf16[512,128], index: 0, kind: input, shape index: {}]
  %s1 = inlined_call_operand.vmem [shape: f32[1,128], index: 1, kind: input, shape index: {}]
  %s2 = inlined_call_operand.vmem [shape: f32[1,128], index: 2, kind: input, shape index: {}]
  %s3 = inlined_call_operand.vmem [shape: bf16[128,128], index: 3, kind: input, shape index: {}]
  %s4 = inlined_call_operand.vmem [shape: f32[1,128], index: 4, kind: input, shape index: {}]
  %s5 = inlined_call_operand.vmem [shape: bf16[512,128], index: 5, kind: output, shape index: {}]
  %s6 = sld [smem:[#allocation0]]
  $region53: #{aspp_forward.5} parent=0
    _
  %s8 = ssub.s32 1, %s6
  %s9 = scalar_select 0, %s8, %s6
  loop: start=0, step=1, limit=6
  $region2: #{aspp_forward.5} parent=0 // loop_pre_header
    _
  $region3: #{aspp_forward.5} parent=0 // loop_header
    %s11 = sphi 0, %s15
    %p12 = scmp.ge.s32.totalorder %s11, 6
    %s21 = sphi 0, %s23
    %s24 = sphi 0, %s21
    %s25 = sphi 0, %s24
    %s41 = sphi 0, %s25
    %s45 = sphi 0, %s45
    %s47 = sphi 0, %s45
    %s48 = sphi 0, %s47
    %s62 = sphi 0, %s48
    %s66 = sphi 0, %s66
    %s68 = sphi 0, %s66
    %s69 = sphi 0, %s68
    %s83 = sphi 0, %s69
    %s87 = sphi 0, %s87
    %s89 = sphi 0, %s87
    %s90 = sphi 0, %s89
    %s104 = sphi 0, %s90
    %s108 = sphi 0, %s108
    %s110 = sphi 0, %s108
    %s111 = sphi 0, %s110
    %s125 = sphi 0, %s111
    %s131 = sphi 0, %s133
    %s134 = sphi 0, %s131
    %s135 = sphi 0, %s134
    %s151 = sphi 0, %s135
  $region4: #{aspp_forward.5} parent=0 // loop_header_branch
    %14 = sbr.rel (%p12) target = $region8
  $region5: #{aspp_forward.5} parent=0 // loop_body
    %s16 = ssub.s32 %s11, 1
    %s17 = ssub.s32 %s11, 2
    %s18 = sadd.s32 %s11, 1
    %s19 = ssub.s32 %s11, %s18
    %p20 = scmp.eq.s32.totalorder %s19, 0
    %s22 = sadd.s32 %s21, 1
    %s23 = scalar_select %p20, %s21, %s22
    %p26 = pneg %p20
    %p27 = scmp.eq.s32.totalorder %s11, 3
    %p28 = por %p26, %p27
    %p29 = scmp.ne.s32.totalorder %s21, %s24
    %p30 = scmp.eq.s32.totalorder %s11, 0
    %p31 = por %p29, %p30
    %p32 = scmp.ne.s32.totalorder %s21, %s24
    %p33 = scmp.eq.s32.totalorder %s16, 3
    %p34 = por %p32, %p33
    %p35 = scmp.ne.s32.totalorder %s24, %s25
    %p36 = scmp.eq.s32.totalorder %s16, 0
    %p37 = por %p35, %p36
    %p38 = scmp.ne.s32.totalorder %s24, %s25
    %p39 = scmp.eq.s32.totalorder %s17, 3
    %p40 = por %p38, %p39
    %p42 = scmp.ne.s32.totalorder %s25, %s41
    %p43 = scmp.eq.s32.totalorder %s17, 0
    %p44 = por %p42, %p43
    %s46 = sadd.s32 %s45, 1
    %p49 = scmp.eq.s32.totalorder %s11, 3
    %p50 = scmp.ne.s32.totalorder %s45, %s47
    %p51 = scmp.eq.s32.totalorder %s11, 0
    %p52 = por %p50, %p51
    %p53 = scmp.ne.s32.totalorder %s45, %s47
    %p54 = scmp.eq.s32.totalorder %s16, 3
    %p55 = por %p53, %p54
    %p56 = scmp.ne.s32.totalorder %s47, %s48
    %p57 = scmp.eq.s32.totalorder %s16, 0
    %p58 = por %p56, %p57
    %p59 = scmp.ne.s32.totalorder %s47, %s48
    %p60 = scmp.eq.s32.totalorder %s17, 3
    %p61 = por %p59, %p60
    %p63 = scmp.ne.s32.totalorder %s48, %s62
    %p64 = scmp.eq.s32.totalorder %s17, 0
    %p65 = por %p63, %p64
    %s67 = sadd.s32 %s66, 1
    %p70 = scmp.eq.s32.totalorder %s11, 3
    %p71 = scmp.ne.s32.totalorder %s66, %s68
    %p72 = scmp.eq.s32.totalorder %s11, 0
    %p73 = por %p71, %p72
    %p74 = scmp.ne.s32.totalorder %s66, %s68
    %p75 = scmp.eq.s32.totalorder %s16, 3
    %p76 = por %p74, %p75
    %p77 = scmp.ne.s32.totalorder %s68, %s69
    %p78 = scmp.eq.s32.totalorder %s16, 0
    %p79 = por %p77, %p78
    %p80 = scmp.ne.s32.totalorder %s68, %s69
    %p81 = scmp.eq.s32.totalorder %s17, 3
    %p82 = por %p80, %p81
    %p84 = scmp.ne.s32.totalorder %s69, %s83
    %p85 = scmp.eq.s32.totalorder %s17, 0
    %p86 = por %p84, %p85
    %s88 = sadd.s32 %s87, 1
    %p91 = scmp.eq.s32.totalorder %s11, 3
    %p92 = scmp.ne.s32.totalorder %s87, %s89
    %p93 = scmp.eq.s32.totalorder %s11, 0
    %p94 = por %p92, %p93
    %p95 = scmp.ne.s32.totalorder %s87, %s89
    %p96 = scmp.eq.s32.totalorder %s16, 3
    %p97 = por %p95, %p96
    %p98 = scmp.ne.s32.totalorder %s89, %s90
    %p99 = scmp.eq.s32.totalorder %s16, 0
    %p100 = por %p98, %p99
    %p101 = scmp.ne.s32.totalorder %s89, %s90
    %p102 = scmp.eq.s32.totalorder %s17, 3
    %p103 = por %p101, %p102
    %p105 = scmp.ne.s32.totalorder %s90, %s104
    %p106 = scmp.eq.s32.totalorder %s17, 0
    %p107 = por %p105, %p106
    %s109 = sadd.s32 %s108, 1
    %p112 = scmp.eq.s32.totalorder %s11, 3
    %p113 = scmp.ne.s32.totalorder %s108, %s110
    %p114 = scmp.eq.s32.totalorder %s11, 0
    %p115 = por %p113, %p114
    %p116 = scmp.ne.s32.totalorder %s108, %s110
    %p117 = scmp.eq.s32.totalorder %s16, 3
    %p118 = por %p116, %p117
    %p119 = scmp.ne.s32.totalorder %s110, %s111
    %p120 = scmp.eq.s32.totalorder %s16, 0
    %p121 = por %p119, %p120
    %p122 = scmp.ne.s32.totalorder %s110, %s111
    %p123 = scmp.eq.s32.totalorder %s17, 3
    %p124 = por %p122, %p123
    %p126 = scmp.ne.s32.totalorder %s111, %s125
    %p127 = scmp.eq.s32.totalorder %s17, 0
    %p128 = por %p126, %p127
    %s129 = ssub.s32 %s11, %s18
    %p130 = scmp.eq.s32.totalorder %s129, 0
    %s132 = sadd.s32 %s131, 1
    %s133 = scalar_select %p130, %s131, %s132
    %p136 = pneg %p130
    %p137 = scmp.eq.s32.totalorder %s11, 3
    %p138 = por %p136, %p137
    %p139 = scmp.ne.s32.totalorder %s131, %s134
    %p140 = scmp.eq.s32.totalorder %s11, 0
    %p141 = por %p139, %p140
    %p142 = scmp.ne.s32.totalorder %s131, %s134
    %p143 = scmp.eq.s32.totalorder %s16, 3
    %p144 = por %p142, %p143
    %p145 = scmp.ne.s32.totalorder %s134, %s135
    %p146 = scmp.eq.s32.totalorder %s16, 0
    %p147 = por %p145, %p146
    %p148 = scmp.ne.s32.totalorder %s134, %s135
    %p149 = scmp.eq.s32.totalorder %s17, 3
    %p150 = por %p148, %p149
    %p152 = scmp.ne.s32.totalorder %s135, %s151
    %p153 = scmp.eq.s32.totalorder %s17, 0
    %p154 = por %p152, %p153
    %p155 = scmp.le.s32.totalorder 1, %s11
    %p156 = scmp.lt.s32.totalorder %s11, 5
    %p157 = pnand %p155, %p156
    %p158 = pneg %p157
    // Predicated region
    $region9: #{aspp_forward.5} parent=5 // pred_check
      _
    $region10: #{aspp_forward.5} parent=5 // pred_check_branch
      %160 = sbr.rel (%p157) target = $region12
    $region11: #{aspp_forward.5} parent=5 // pred_region
      %s161 = ssub.s32 %s11, 1
      // Predicated region
      $region13: #{aspp_forward.5} parent=11 // pred_check
        %p162 = pneg %p58
      $region14: #{aspp_forward.5} parent=11 // pred_check_branch
        %164 = sbr.rel (%p162) target = $region16
      $region15: #{aspp_forward.5} parent=11 // pred_region
        _
      $region16: #{aspp_forward.5} parent=11 // pred_fallthru
        _
      // Predicated region
      $region17: #{aspp_forward.5} parent=11 // pred_check
        %p165 = pneg %p79
      $region18: #{aspp_forward.5} parent=11 // pred_check_branch
        %167 = sbr.rel (%p165) target = $region20
      $region19: #{aspp_forward.5} parent=11 // pred_region
        _
      $region20: #{aspp_forward.5} parent=11 // pred_fallthru
        _
      // Predicated region
      $region21: #{aspp_forward.5} parent=11 // pred_check
        %p168 = pneg %p100
      $region22: #{aspp_forward.5} parent=11 // pred_check_branch
        %170 = sbr.rel (%p168) target = $region24
      $region23: #{aspp_forward.5} parent=11 // pred_region
        _
      $region24: #{aspp_forward.5} parent=11 // pred_fallthru
        _
      // Predicated region
      $region25: #{aspp_forward.5} parent=11 // pred_check
        %p171 = pneg %p121
      $region26: #{aspp_forward.5} parent=11 // pred_check_branch
        %173 = sbr.rel (%p171) target = $region28
      $region27: #{aspp_forward.5} parent=11 // pred_region
        _
      $region28: #{aspp_forward.5} parent=11 // pred_fallthru
        _
    $region12: #{aspp_forward.5} parent=5 // pred_fallthru
      _
    %p174 = scmp.lt.s32.totalorder %s11, 4
    // Predicated region
    $region29: #{aspp_forward.5} parent=5 // pred_check
      %p175 = pneg %p174
    $region30: #{aspp_forward.5} parent=5 // pred_check_branch
      %177 = sbr.rel (%p175) target = $region32
    $region31: #{aspp_forward.5} parent=5 // pred_region
      // Predicated region
      $region33: #{aspp_forward.5} parent=31 // pred_check
        %p178 = pneg %p31
      $region34: #{aspp_forward.5} parent=31 // pred_check_branch
        %180 = sbr.rel (%p178) target = $region36
      $region35: #{aspp_forward.5} parent=31 // pred_region
        %s181 = smul.u32 16, %s11
        %p182 = scmp.lt.s32.totalorder %s181, 63
        %s183 = scalar_select %p182, %s181, 63
        %s184 = smul.addr %s183, 4
        %s185 = scalar_lea.vmem %s0, %s184
        %s186 = smul.u32 16, %s11
      $region36: #{aspp_forward.5} parent=31 // pred_fallthru
        _
    $region32: #{aspp_forward.5} parent=5 // pred_fallthru
      _
    %p187 = scmp.le.s32.totalorder 1, %s11
    %p188 = scmp.lt.s32.totalorder %s11, 5
    %p189 = pnand %p187, %p188
    %p190 = pneg %p189
    // Predicated region
    $region37: #{aspp_forward.5} parent=5 // pred_check
      _
    $region38: #{aspp_forward.5} parent=5 // pred_check_branch
      %192 = sbr.rel (%p189) target = $region40
    $region39: #{aspp_forward.5} parent=5 // pred_region
      %s193 = ssub.s32 %s11, 1
      %s194 = smul.u32 16, %s16
      %p195 = scmp.lt.s32.totalorder %s194, 63
      %s196 = scalar_select %p195, %s194, 63
      %s197 = smul.addr %s196, 4
      %s198 = scalar_lea.vmem %s0, %s197
      %p199 = pneg %p37
      %p200 = pneg %p34
      %p201 = pneg %p58
      %p202 = pneg %p55
      %p203 = pneg %p79
      %p204 = pneg %p76
      %p205 = pneg %p100
      %p206 = pneg %p97
      %p207 = pneg %p121
      %p208 = pneg %p118
      %p209 = pneg %p147
      %p210 = pneg %p144
      %s211 = smul.u32 16, %s16
      %p212 = scmp.lt.s32.totalorder %s211, 63
      %s213 = scalar_select %p212, %s211, 63
      %s214 = smul.addr %s213, 4
      %s215 = scalar_lea.vmem %s5, %s214
      %s216 = smul.u32 16, %s16
      %p217 = scmp.lt.s32.totalorder %s216, 63
      %s218 = scalar_select %p217, %s216, 63
      %s219 = smul.addr %s218, 4
      %s220 = scalar_lea.vmem %s0, %s219
      %s221 = smul.u32 16, %s16
      %s222 = smul.u32 16, %s16
      %p223 = scmp.lt.s32.totalorder %s222, 63
      %s224 = scalar_select %p223, %s222, 63
      %s225 = smul.addr %s224, 4
      %s226 = scalar_lea.vmem %s5, %s225
      %s227 = smul.u32 16, %s16
      %v229 = vld [vmem:[%s220] sm:$0xf]
      %v230 = vld [vmem:[%s220 + $0x4] sm:$0xf]
      %v231 = vld [vmem:[%s220 + $0x8] sm:$0xf]
      %v232 = vld [vmem:[%s220 + $0xc] sm:$0xf]
      %v233 = vld [vmem:[%s220 + $0x10] sm:$0xf]
      %v234 = vld [vmem:[%s220 + $0x14] sm:$0xf]
      %v235 = vld [vmem:[%s220 + $0x18] sm:$0xf]
      %v236 = vld [vmem:[%s220 + $0x1c] sm:$0xf]
      %v237 = vld [vmem:[%s220 + $0x20] sm:$0xf]
      %v238 = vld [vmem:[%s220 + $0x24] sm:$0xf]
      %v239 = vld [vmem:[%s220 + $0x28] sm:$0xf]
      %v240 = vld [vmem:[%s220 + $0x2c] sm:$0xf]
      %v241 = vld [vmem:[%s220 + $0x30] sm:$0xf]
      %v242 = vld [vmem:[%s220 + $0x34] sm:$0xf]
      %v243 = vld [vmem:[%s220 + $0x38] sm:$0xf]
      %v244 = vld [vmem:[%s220 + $0x3c] sm:$0xf]
      %v245 = vunpack.c.l.bf16 %v229
      %v246 = vunpack.c.l.bf16 %v230
      %v247 = vunpack.c.l.bf16 %v231
      %v248 = vunpack.c.l.bf16 %v232
      %v249 = vunpack.c.l.bf16 %v233
      %v250 = vunpack.c.l.bf16 %v234
      %v251 = vunpack.c.l.bf16 %v235
      %v252 = vunpack.c.l.bf16 %v236
      %v253 = vunpack.c.l.bf16 %v237
      %v254 = vunpack.c.l.bf16 %v238
      %v255 = vunpack.c.l.bf16 %v239
      %v256 = vunpack.c.l.bf16 %v240
      %v257 = vunpack.c.l.bf16 %v241
      %v258 = vunpack.c.l.bf16 %v242
      %v259 = vunpack.c.l.bf16 %v243
      %v260 = vunpack.c.l.bf16 %v244
      %v261 = vld [vmem:[%s1] sm:$0x1]
      %v263 = vlaneseq
      %v264 = vshrl.u32 %v263, 7
      %v265 = vsub.s32 0, %v264
      %v266 = vrot.slane %v261, %v265
      %v268 = vmul.f32 %v245, %v266
      %v269 = vmul.f32 %v246, %v266
      %v270 = vmul.f32 %v247, %v266
      %v271 = vmul.f32 %v248, %v266
      %v272 = vmul.f32 %v249, %v266
      %v273 = vmul.f32 %v250, %v266
      %v274 = vmul.f32 %v251, %v266
      %v275 = vmul.f32 %v252, %v266
      %v276 = vmul.f32 %v253, %v266
      %v277 = vmul.f32 %v254, %v266
      %v278 = vmul.f32 %v255, %v266
      %v279 = vmul.f32 %v256, %v266
      %v280 = vmul.f32 %v257, %v266
      %v281 = vmul.f32 %v258, %v266
      %v282 = vmul.f32 %v259, %v266
      %v283 = vmul.f32 %v260, %v266
      %v284 = vld [vmem:[%s2] sm:$0x1]
      %v286 = vlaneseq
      %v287 = vshrl.u32 %v286, 7
      %v288 = vsub.s32 0, %v287
      %v289 = vrot.slane %v284, %v288
      %v291 = vadd.f32 %v268, %v289
      %v292 = vadd.f32 %v269, %v289
      %v293 = vadd.f32 %v270, %v289
      %v294 = vadd.f32 %v271, %v289
      %v295 = vadd.f32 %v272, %v289
      %v296 = vadd.f32 %v273, %v289
      %v297 = vadd.f32 %v274, %v289
      %v298 = vadd.f32 %v275, %v289
      %v299 = vadd.f32 %v276, %v289
      %v300 = vadd.f32 %v277, %v289
      %v301 = vadd.f32 %v278, %v289
      %v302 = vadd.f32 %v279, %v289
      %v303 = vadd.f32 %v280, %v289
      %v304 = vadd.f32 %v281, %v289
      %v305 = vadd.f32 %v282, %v289
      %v306 = vadd.f32 %v283, %v289
      %v307 = vmax.f32 %v291, 0.0
      %v308 = vmax.f32 %v292, 0.0
      %v309 = vmax.f32 %v293, 0.0
      %v310 = vmax.f32 %v294, 0.0
      %v311 = vmax.f32 %v295, 0.0
      %v312 = vmax.f32 %v296, 0.0
      %v313 = vmax.f32 %v297, 0.0
      %v314 = vmax.f32 %v298, 0.0
      %v315 = vmax.f32 %v299, 0.0
      %v316 = vmax.f32 %v300, 0.0
      %v317 = vmax.f32 %v301, 0.0
      %v318 = vmax.f32 %v302, 0.0
      %v319 = vmax.f32 %v303, 0.0
      %v320 = vmax.f32 %v304, 0.0
      %v321 = vmax.f32 %v305, 0.0
      %v322 = vmax.f32 %v306, 0.0
      %v323 = vpack.c.bf16 %v308, %v307
      %v324 = vpack.c.bf16 %v310, %v309
      %v325 = vpack.c.bf16 %v312, %v311
      %v326 = vpack.c.bf16 %v314, %v313
      %v327 = vpack.c.bf16 %v316, %v315
      %v328 = vpack.c.bf16 %v318, %v317
      %v329 = vpack.c.bf16 %v320, %v319
      %v330 = vpack.c.bf16 %v322, %v321
      %v331 = vld [vmem:[%s3] sm:$0xf]
      %v332 = vld [vmem:[%s3 + $0x4] sm:$0xf]
      %v333 = vld [vmem:[%s3 + $0x8] sm:$0xf]
      %v334 = vld [vmem:[%s3 + $0xc] sm:$0xf]
      %v335 = vld [vmem:[%s3 + $0x10] sm:$0xf]
      %v336 = vld [vmem:[%s3 + $0x14] sm:$0xf]
      %v337 = vld [vmem:[%s3 + $0x18] sm:$0xf]
      %v338 = vld [vmem:[%s3 + $0x1c] sm:$0xf]
      %v339 = vld [vmem:[%s3 + $0x20] sm:$0xf]
      %v340 = vld [vmem:[%s3 + $0x24] sm:$0xf]
      %v341 = vld [vmem:[%s3 + $0x28] sm:$0xf]
      %v342 = vld [vmem:[%s3 + $0x2c] sm:$0xf]
      %v343 = vld [vmem:[%s3 + $0x30] sm:$0xf]
      %v344 = vld [vmem:[%s3 + $0x34] sm:$0xf]
      %v345 = vld [vmem:[%s3 + $0x38] sm:$0xf]
      %v346 = vld [vmem:[%s3 + $0x3c] sm:$0xf]
      %v347 = vld [vmem:[%s4] sm:$0x1]
      %v349 = vlaneseq
      %v350 = vshrl.u32 %v349, 7
      %v351 = vsub.s32 0, %v350
      %v352 = vrot.slane %v347, %v351
      %v370 = vunpack.c.l.b16 %v331
      %v371 = vunpack.c.l.b16 %v332
      %v372 = vunpack.c.l.b16 %v333
      %v373 = vunpack.c.l.b16 %v334
      %v374 = vunpack.c.l.b16 %v335
      %v375 = vunpack.c.l.b16 %v336
      %v376 = vunpack.c.l.b16 %v337
      %v377 = vunpack.c.l.b16 %v338
      %v378 = vunpack.c.l.b16 %v339
      %v379 = vunpack.c.l.b16 %v340
      %v380 = vunpack.c.l.b16 %v341
      %v381 = vunpack.c.l.b16 %v342
      %v382 = vunpack.c.l.b16 %v343
      %v383 = vunpack.c.l.b16 %v344
      %v384 = vunpack.c.l.b16 %v345
      %v385 = vunpack.c.l.b16 %v346
      %v386 = vpack.c.b16 %v371, %v370
      %v387 = vpack.c.b16 %v373, %v372
      %v388 = vpack.c.b16 %v375, %v374
      %v389 = vpack.c.b16 %v377, %v376
      %v390 = vpack.c.b16 %v379, %v378
      %v391 = vpack.c.b16 %v381, %v380
      %v392 = vpack.c.b16 %v383, %v382
      %v393 = vpack.c.b16 %v385, %v384
      %402 = vmatprep.subr.bf16.mxu0 0
      %403 = vmatpush1.bf16.msra.mxu0 %v393
      %404 = vmatprep.subr.bf16.mxu0 0
      %405 = vmatpush1.bf16.msra.mxu0 %v392
      %406 = vmatprep.subr.bf16.mxu0 0
      %407 = vmatpush1.bf16.msra.mxu0 %v391
      %408 = vmatprep.subr.bf16.mxu0 0
      %409 = vmatpush1.bf16.msra.mxu0 %v390
      %410 = vmatprep.subr.bf16.mxu0 0
      %411 = vmatpush1.bf16.msra.mxu0 %v389
      %412 = vmatprep.subr.bf16.mxu0 0
      %413 = vmatpush1.bf16.msra.mxu0 %v388
      %414 = vmatprep.subr.bf16.mxu0 0
      %415 = vmatpush1.bf16.msra.mxu0 %v387
      %416 = vmatprep.subr.bf16.mxu0 0
      %417 = vmatpush1.bf16.msra.mxu0 %v386
      %418 = vmatprep.subr.bf16.mxu0 0
      %419 = vmatpush2.bf16.msra.mxu0 0
      %420 = vmatprep.subr.bf16.mxu0 0
      %421 = vmatpush2.bf16.msra.mxu0 0
      %422 = vmatprep.subr.bf16.mxu0 0
      %423 = vmatpush2.bf16.msra.mxu0 0
      %424 = vmatprep.subr.bf16.mxu0 0
      %425 = vmatpush2.bf16.msra.mxu0 0
      %426 = vmatprep.subr.bf16.mxu0 0
      %427 = vmatpush2.bf16.msra.mxu0 0
      %428 = vmatprep.subr.bf16.mxu0 0
      %429 = vmatpush2.bf16.msra.mxu0 0
      %430 = vmatprep.subr.bf16.mxu0 0
      %431 = vmatpush2.bf16.msra.mxu0 0
      %432 = vmatprep.subr.bf16.mxu0 0
      %433 = vmatpush2.bf16.msra.mxu0 0
      %434 = vmatprep.mubr.bf16.mxu0 0
      %435 = vmatmul.mubr.bf16.gmra.mxu0 %v323
      %v436 = vpop.f32.mrf.mxu0
      %v437 = vadd.f32 %v352, %v436
      %v438 = vpop.f32.mrf.mxu0
      %v439 = vpop.f32.mrf.mxu0
      %v440 = vadd.f32 %v352, %v439
      %v441 = vpop.f32.mrf.mxu0
      %442 = vmatprep.mubr.bf16.mxu0 0
      %443 = vmatmul.mubr.bf16.gmra.mxu0 %v324
      %v444 = vpop.f32.mrf.mxu0
      %v445 = vadd.f32 %v352, %v444
      %v446 = vpop.f32.mrf.mxu0
      %v447 = vpop.f32.mrf.mxu0
      %v448 = vadd.f32 %v352, %v447
      %v449 = vpop.f32.mrf.mxu0
      %450 = vmatprep.mubr.bf16.mxu0 0
      %451 = vmatmul.mubr.bf16.gmra.mxu0 %v325
      %v452 = vpop.f32.mrf.mxu0
      %v453 = vadd.f32 %v352, %v452
      %v454 = vpop.f32.mrf.mxu0
      %v455 = vpop.f32.mrf.mxu0
      %v456 = vadd.f32 %v352, %v455
      %v457 = vpop.f32.mrf.mxu0
      %458 = vmatprep.mubr.bf16.mxu0 0
      %459 = vmatmul.mubr.bf16.gmra.mxu0 %v326
      %v460 = vpop.f32.mrf.mxu0
      %v461 = vadd.f32 %v352, %v460
      %v462 = vpop.f32.mrf.mxu0
      %v463 = vpop.f32.mrf.mxu0
      %v464 = vadd.f32 %v352, %v463
      %v465 = vpop.f32.mrf.mxu0
      %466 = vmatprep.mubr.bf16.mxu0 0
      %467 = vmatmul.mubr.bf16.gmra.mxu0 %v327
      %v468 = vpop.f32.mrf.mxu0
      %v469 = vadd.f32 %v352, %v468
      %v470 = vpop.f32.mrf.mxu0
      %v471 = vpop.f32.mrf.mxu0
      %v472 = vadd.f32 %v352, %v471
      %v473 = vpop.f32.mrf.mxu0
      %474 = vmatprep.mubr.bf16.mxu0 0
      %475 = vmatmul.mubr.bf16.gmra.mxu0 %v328
      %v476 = vpop.f32.mrf.mxu0
      %v477 = vadd.f32 %v352, %v476
      %v478 = vpop.f32.mrf.mxu0
      %v479 = vpop.f32.mrf.mxu0
      %v480 = vadd.f32 %v352, %v479
      %v481 = vpop.f32.mrf.mxu0
      %482 = vmatprep.mubr.bf16.mxu0 0
      %483 = vmatmul.mubr.bf16.gmra.mxu0 %v329
      %v484 = vpop.f32.mrf.mxu0
      %v485 = vadd.f32 %v352, %v484
      %v486 = vpop.f32.mrf.mxu0
      %v487 = vpop.f32.mrf.mxu0
      %v488 = vadd.f32 %v352, %v487
      %v489 = vpop.f32.mrf.mxu0
      %490 = vmatprep.mubr.bf16.mxu0 0
      %491 = vmatmul.mubr.bf16.gmra.mxu0 %v330
      %v492 = vpop.f32.mrf.mxu0
      %v493 = vadd.f32 %v352, %v492
      %v494 = vpop.f32.mrf.mxu0
      %v495 = vpop.f32.mrf.mxu0
      %v496 = vadd.f32 %v352, %v495
      %v497 = vpop.f32.mrf.mxu0
      %498 = vdwg.mxu0
      %v499 = vpack.c.bf16 %v440, %v437
      %v500 = vpack.c.bf16 %v448, %v445
      %v501 = vpack.c.bf16 %v456, %v453
      %v502 = vpack.c.bf16 %v464, %v461
      %v503 = vpack.c.bf16 %v472, %v469
      %v504 = vpack.c.bf16 %v480, %v477
      %v505 = vpack.c.bf16 %v488, %v485
      %v506 = vpack.c.bf16 %v496, %v493
      %v515 = vunpack.c.l.b16 %v499
      %v516 = vunpack.c.h.b16 %v499
      %v517 = vunpack.c.l.b16 %v500
      %v518 = vunpack.c.h.b16 %v500
      %v519 = vunpack.c.l.b16 %v501
      %v520 = vunpack.c.h.b16 %v501
      %v521 = vunpack.c.l.b16 %v502
      %v522 = vunpack.c.h.b16 %v502
      %v523 = vunpack.c.l.b16 %v503
      %v524 = vunpack.c.h.b16 %v503
      %v525 = vunpack.c.l.b16 %v504
      %v526 = vunpack.c.h.b16 %v504
      %v527 = vunpack.c.l.b16 %v505
      %v528 = vunpack.c.h.b16 %v505
      %v529 = vunpack.c.l.b16 %v506
      %v530 = vunpack.c.h.b16 %v506
      %v531 = vpack.c.b16 %v515, %v515
      %v532 = vpack.c.b16 %v516, %v516
      %v533 = vpack.c.b16 %v517, %v517
      %v534 = vpack.c.b16 %v518, %v518
      %v535 = vpack.c.b16 %v519, %v519
      %v536 = vpack.c.b16 %v520, %v520
      %v537 = vpack.c.b16 %v521, %v521
      %v538 = vpack.c.b16 %v522, %v522
      %v539 = vpack.c.b16 %v523, %v523
      %v540 = vpack.c.b16 %v524, %v524
      %v541 = vpack.c.b16 %v525, %v525
      %v542 = vpack.c.b16 %v526, %v526
      %v543 = vpack.c.b16 %v527, %v527
      %v544 = vpack.c.b16 %v528, %v528
      %v545 = vpack.c.b16 %v529, %v529
      %v546 = vpack.c.b16 %v530, %v530
      %563 = vst [vmem:[%s226] sm:$0xf] %v531
      %564 = vst [vmem:[%s226 + $0x4] sm:$0xf] %v532
      %565 = vst [vmem:[%s226 + $0x8] sm:$0xf] %v533
      %566 = vst [vmem:[%s226 + $0xc] sm:$0xf] %v534
      %567 = vst [vmem:[%s226 + $0x10] sm:$0xf] %v535
      %568 = vst [vmem:[%s226 + $0x14] sm:$0xf] %v536
      %569 = vst [vmem:[%s226 + $0x18] sm:$0xf] %v537
      %570 = vst [vmem:[%s226 + $0x1c] sm:$0xf] %v538
      %571 = vst [vmem:[%s226 + $0x20] sm:$0xf] %v539
      %572 = vst [vmem:[%s226 + $0x24] sm:$0xf] %v540
      %573 = vst [vmem:[%s226 + $0x28] sm:$0xf] %v541
      %574 = vst [vmem:[%s226 + $0x2c] sm:$0xf] %v542
      %575 = vst [vmem:[%s226 + $0x30] sm:$0xf] %v543
      %576 = vst [vmem:[%s226 + $0x34] sm:$0xf] %v544
      %577 = vst [vmem:[%s226 + $0x38] sm:$0xf] %v545
      %578 = vst [vmem:[%s226 + $0x3c] sm:$0xf] %v546
      %s579 = smul.u32 16, %s16
      %p580 = scmp.lt.s32.totalorder %s579, 63
      %s581 = scalar_select %p580, %s579, 63
      %s582 = smul.addr %s581, 4
      %s583 = scalar_lea.vmem %s5, %s582
      // Predicated region
      $region41: #{aspp_forward.5} parent=39 // pred_check
        %p584 = pneg %p144
      $region42: #{aspp_forward.5} parent=39 // pred_check_branch
        %586 = sbr.rel (%p584) target = $region44
      $region43: #{aspp_forward.5} parent=39 // pred_region
        %s587 = smul.u32 16, %s16
      $region44: #{aspp_forward.5} parent=39 // pred_fallthru
        _
    $region40: #{aspp_forward.5} parent=5 // pred_fallthru
      _
    %p588 = scmp.le.s32.totalorder 2, %s11
    // Predicated region
    $region45: #{aspp_forward.5} parent=5 // pred_check
      %p589 = pneg %p588
    $region46: #{aspp_forward.5} parent=5 // pred_check_branch
      %591 = sbr.rel (%p589) target = $region48
    $region47: #{aspp_forward.5} parent=5 // pred_region
      %s592 = ssub.s32 %s11, 2
      // Predicated region
      $region49: #{aspp_forward.5} parent=47 // pred_check
        %p593 = pneg %p150
      $region50: #{aspp_forward.5} parent=47 // pred_check_branch
        %595 = sbr.rel (%p593) target = $region52
      $region51: #{aspp_forward.5} parent=47 // pred_region
        %s596 = smul.u32 16, %s17
        %p597 = scmp.lt.s32.totalorder %s596, 63
        %s598 = scalar_select %p597, %s596, 63
        %s599 = smul.addr %s598, 4
        %s600 = scalar_lea.vmem %s5, %s599
      $region52: #{aspp_forward.5} parent=47 // pred_fallthru
        _
    $region48: #{aspp_forward.5} parent=5 // pred_fallthru
      _
  $region6: #{aspp_forward.5} parent=0 // loop_footer
    %s15 = sadd.s32 1, %s11
  $region7: #{aspp_forward.5} parent=0 // loop_footer_branch
    %10 = sbr.rel target = $region3
  $region8: #{aspp_forward.5} parent=0 // loop_exit
    _

// kernel: aspp_forward.3
$region0: #{aspp_forward.3}
  #allocation0 [shape = 'u32[]', space=smem, size = 0x4, offset = 0x4, fixed_abs, tag = 'smem constant byte address 0x4 - core index']
  #allocation1 [shape = 'u32[144,128]{1,0:T(1,128)}', space=vmem, size = 0x12000, scoped, tag = 'internal scratch']
  %s0 = inlined_call_operand.vmem [shape: bf16[2,2,14,22,8], index: 0, kind: input, shape index: {}]
  %s1 = inlined_call_operand.vmem [shape: bf16[8,16], index: 1, kind: input, shape index: {}]
  %s2 = inlined_call_operand.vmem [shape: bf16[72,16], index: 2, kind: input, shape index: {}]
  %s3 = inlined_call_operand.vmem [shape: bf16[72,16], index: 3, kind: input, shape index: {}]
  %s4 = inlined_call_operand.vmem [shape: bf16[72,16], index: 4, kind: input, shape index: {}]
  %s5 = inlined_call_operand.vmem [shape: bf16[512,128], index: 5, kind: output, shape index: {0}]
  %s6 = inlined_call_operand.vmem [shape: f32[4,2,128], index: 6, kind: output, shape index: {1}]
  %7 = xla_tuple %s5, %s6
  %s8 = sld [smem:[#allocation0]]
  $region61: #{aspp_forward.3} parent=0
    _
  %s10 = ssub.s32 1, %s8
  %s11 = scalar_select 0, %s10, %s8
  loop: start=0, step=1, limit=6
  $region2: #{aspp_forward.3} parent=0 // loop_pre_header
    _
  $region3: #{aspp_forward.3} parent=0 // loop_header
    %s13 = sphi 0, %s17
    %p14 = scmp.ge.s32.totalorder %s13, 6
    %s20 = sphi 0, %s32
    %s21 = sphi 0, %s28
    %s22 = sphi 0, %s20
    %s23 = sphi 0, %s21
    %s24 = sphi 0, %s22
    %s25 = sphi 0, %s23
    %s37 = sphi 0, %s39
    %s40 = sphi 0, %s37
    %s41 = sphi 0, %s40
    %s57 = sphi 0, %s41
    %s61 = sphi 0, %s61
    %s63 = sphi 0, %s61
    %s64 = sphi 0, %s63
    %s78 = sphi 0, %s64
    %s82 = sphi 0, %s82
    %s84 = sphi 0, %s82
    %s85 = sphi 0, %s84
    %s99 = sphi 0, %s85
    %s103 = sphi 0, %s103
    %s105 = sphi 0, %s103
    %s106 = sphi 0, %s105
    %s120 = sphi 0, %s106
    %s124 = sphi 0, %s124
    %s126 = sphi 0, %s124
    %s127 = sphi 0, %s126
    %s141 = sphi 0, %s127
    %s151 = sphi 0, %s153
    %s154 = sphi 0, %s151
    %s155 = sphi 0, %s154
    %s171 = sphi 0, %s155
    %s181 = sphi 0, %s183
    %s184 = sphi 0, %s181
    %s185 = sphi 0, %s184
    %s201 = sphi 0, %s185
  $region4: #{aspp_forward.3} parent=0 // loop_header_branch
    %16 = sbr.rel (%p14) target = $region8
  $region5: #{aspp_forward.3} parent=0 // loop_body
    %s18 = ssub.s32 %s13, 1
    %s19 = ssub.s32 %s13, 2
    %s26 = sadd.s32 1, %s21
    %p27 = scmp.ge.s32.totalorder %s26, 2
    %s28 = scalar_select %p27, 0, %s26
    %s29 = sadd.s32 1, %s20
    %s30 = scalar_select %p27, %s29, %s20
    %p31 = scmp.ge.s32.totalorder %s30, 2
    %s32 = scalar_select %p31, 0, %s30
    %s33 = ssub.s32 %s20, %s32
    %s34 = ssub.s32 %s21, %s28
    %s35 = sor.u32 %s33, %s34
    %p36 = scmp.eq.s32.totalorder %s35, 0
    %s38 = sadd.s32 %s37, 1
    %s39 = scalar_select %p36, %s37, %s38
    %p42 = pneg %p36
    %p43 = scmp.eq.s32.totalorder %s13, 3
    %p44 = por %p42, %p43
    %p45 = scmp.ne.s32.totalorder %s37, %s40
    %p46 = scmp.eq.s32.totalorder %s13, 0
    %p47 = por %p45, %p46
    %p48 = scmp.ne.s32.totalorder %s37, %s40
    %p49 = scmp.eq.s32.totalorder %s18, 3
    %p50 = por %p48, %p49
    %p51 = scmp.ne.s32.totalorder %s40, %s41
    %p52 = scmp.eq.s32.totalorder %s18, 0
    %p53 = por %p51, %p52
    %p54 = scmp.ne.s32.totalorder %s40, %s41
    %p55 = scmp.eq.s32.totalorder %s19, 3
    %p56 = por %p54, %p55
    %p58 = scmp.ne.s32.totalorder %s41, %s57
    %p59 = scmp.eq.s32.totalorder %s19, 0
    %p60 = por %p58, %p59
    %s62 = sadd.s32 %s61, 1
    %p65 = scmp.eq.s32.totalorder %s13, 3
    %p66 = scmp.ne.s32.totalorder %s61, %s63
    %p67 = scmp.eq.s32.totalorder %s13, 0
    %p68 = por %p66, %p67
    %p69 = scmp.ne.s32.totalorder %s61, %s63
    %p70 = scmp.eq.s32.totalorder %s18, 3
    %p71 = por %p69, %p70
    %p72 = scmp.ne.s32.totalorder %s63, %s64
    %p73 = scmp.eq.s32.totalorder %s18, 0
    %p74 = por %p72, %p73
    %p75 = scmp.ne.s32.totalorder %s63, %s64
    %p76 = scmp.eq.s32.totalorder %s19, 3
    %p77 = por %p75, %p76
    %p79 = scmp.ne.s32.totalorder %s64, %s78
    %p80 = scmp.eq.s32.totalorder %s19, 0
    %p81 = por %p79, %p80
    %s83 = sadd.s32 %s82, 1
    %p86 = scmp.eq.s32.totalorder %s13, 3
    %p87 = scmp.ne.s32.totalorder %s82, %s84
    %p88 = scmp.eq.s32.totalorder %s13, 0
    %p89 = por %p87, %p88
    %p90 = scmp.ne.s32.totalorder %s82, %s84
    %p91 = scmp.eq.s32.totalorder %s18, 3
    %p92 = por %p90, %p91
    %p93 = scmp.ne.s32.totalorder %s84, %s85
    %p94 = scmp.eq.s32.totalorder %s18, 0
    %p95 = por %p93, %p94
    %p96 = scmp.ne.s32.totalorder %s84, %s85
    %p97 = scmp.eq.s32.totalorder %s19, 3
    %p98 = por %p96, %p97
    %p100 = scmp.ne.s32.totalorder %s85, %s99
    %p101 = scmp.eq.s32.totalorder %s19, 0
    %p102 = por %p100, %p101
    %s104 = sadd.s32 %s103, 1
    %p107 = scmp.eq.s32.totalorder %s13, 3
    %p108 = scmp.ne.s32.totalorder %s103, %s105
    %p109 = scmp.eq.s32.totalorder %s13, 0
    %p110 = por %p108, %p109
    %p111 = scmp.ne.s32.totalorder %s103, %s105
    %p112 = scmp.eq.s32.totalorder %s18, 3
    %p113 = por %p111, %p112
    %p114 = scmp.ne.s32.totalorder %s105, %s106
    %p115 = scmp.eq.s32.totalorder %s18, 0
    %p116 = por %p114, %p115
    %p117 = scmp.ne.s32.totalorder %s105, %s106
    %p118 = scmp.eq.s32.totalorder %s19, 3
    %p119 = por %p117, %p118
    %p121 = scmp.ne.s32.totalorder %s106, %s120
    %p122 = scmp.eq.s32.totalorder %s19, 0
    %p123 = por %p121, %p122
    %s125 = sadd.s32 %s124, 1
    %p128 = scmp.eq.s32.totalorder %s13, 3
    %p129 = scmp.ne.s32.totalorder %s124, %s126
    %p130 = scmp.eq.s32.totalorder %s13, 0
    %p131 = por %p129, %p130
    %p132 = scmp.ne.s32.totalorder %s124, %s126
    %p133 = scmp.eq.s32.totalorder %s18, 3
    %p134 = por %p132, %p133
    %p135 = scmp.ne.s32.totalorder %s126, %s127
    %p136 = scmp.eq.s32.totalorder %s18, 0
    %p137 = por %p135, %p136
    %p138 = scmp.ne.s32.totalorder %s126, %s127
    %p139 = scmp.eq.s32.totalorder %s19, 3
    %p140 = por %p138, %p139
    %p142 = scmp.ne.s32.totalorder %s127, %s141
    %p143 = scmp.eq.s32.totalorder %s19, 0
    %p144 = por %p142, %p143
    %s145 = smul.u32 %s20, 2
    %s146 = sadd.s32 %s145, %s21
    %s147 = smul.u32 %s32, 2
    %s148 = sadd.s32 %s147, %s28
    %s149 = ssub.s32 %s146, %s148
    %p150 = scmp.eq.s32.totalorder %s149, 0
    %s152 = sadd.s32 %s151, 1
    %s153 = scalar_select %p150, %s151, %s152
    %p156 = pneg %p150
    %p157 = scmp.eq.s32.totalorder %s13, 3
    %p158 = por %p156, %p157
    %p159 = scmp.ne.s32.totalorder %s151, %s154
    %p160 = scmp.eq.s32.totalorder %s13, 0
    %p161 = por %p159, %p160
    %p162 = scmp.ne.s32.totalorder %s151, %s154
    %p163 = scmp.eq.s32.totalorder %s18, 3
    %p164 = por %p162, %p163
    %p165 = scmp.ne.s32.totalorder %s154, %s155
    %p166 = scmp.eq.s32.totalorder %s18, 0
    %p167 = por %p165, %p166
    %p168 = scmp.ne.s32.totalorder %s154, %s155
    %p169 = scmp.eq.s32.totalorder %s19, 3
    %p170 = por %p168, %p169
    %p172 = scmp.ne.s32.totalorder %s155, %s171
    %p173 = scmp.eq.s32.totalorder %s19, 0
    %p174 = por %p172, %p173
    %s175 = smul.u32 %s20, 2
    %s176 = sadd.s32 %s175, %s21
    %s177 = smul.u32 %s32, 2
    %s178 = sadd.s32 %s177, %s28
    %s179 = ssub.s32 %s176, %s178
    %p180 = scmp.eq.s32.totalorder %s179, 0
    %s182 = sadd.s32 %s181, 1
    %s183 = scalar_select %p180, %s181, %s182
    %p186 = pneg %p180
    %p187 = scmp.eq.s32.totalorder %s13, 3
    %p188 = por %p186, %p187
    %p189 = scmp.ne.s32.totalorder %s181, %s184
    %p190 = scmp.eq.s32.totalorder %s13, 0
    %p191 = por %p189, %p190
    %p192 = scmp.ne.s32.totalorder %s181, %s184
    %p193 = scmp.eq.s32.totalorder %s18, 3
    %p194 = por %p192, %p193
    %p195 = scmp.ne.s32.totalorder %s184, %s185
    %p196 = scmp.eq.s32.totalorder %s18, 0
    %p197 = por %p195, %p196
    %p198 = scmp.ne.s32.totalorder %s184, %s185
    %p199 = scmp.eq.s32.totalorder %s19, 3
    %p200 = por %p198, %p199
    %p202 = scmp.ne.s32.totalorder %s185, %s201
    %p203 = scmp.eq.s32.totalorder %s19, 0
    %p204 = por %p202, %p203
    %p205 = scmp.le.s32.totalorder 1, %s13
    %p206 = scmp.lt.s32.totalorder %s13, 5
    %p207 = pnand %p205, %p206
    %p208 = pneg %p207
    // Predicated region
    $region9: #{aspp_forward.3} parent=5 // pred_check
      _
    $region10: #{aspp_forward.3} parent=5 // pred_check_branch
      %210 = sbr.rel (%p207) target = $region12
    $region11: #{aspp_forward.3} parent=5 // pred_region
      %s211 = ssub.s32 %s13, 1
      // Predicated region
      $region13: #{aspp_forward.3} parent=11 // pred_check
        %p212 = pneg %p74
      $region14: #{aspp_forward.3} parent=11 // pred_check_branch
        %214 = sbr.rel (%p212) target = $region16
      $region15: #{aspp_forward.3} parent=11 // pred_region
        _
      $region16: #{aspp_forward.3} parent=11 // pred_fallthru
        _
      // Predicated region
      $region17: #{aspp_forward.3} parent=11 // pred_check
        %p215 = pneg %p95
      $region18: #{aspp_forward.3} parent=11 // pred_check_branch
        %217 = sbr.rel (%p215) target = $region20
      $region19: #{aspp_forward.3} parent=11 // pred_region
        _
      $region20: #{aspp_forward.3} parent=11 // pred_fallthru
        _
      // Predicated region
      $region21: #{aspp_forward.3} parent=11 // pred_check
        %p218 = pneg %p116
      $region22: #{aspp_forward.3} parent=11 // pred_check_branch
        %220 = sbr.rel (%p218) target = $region24
      $region23: #{aspp_forward.3} parent=11 // pred_region
        _
      $region24: #{aspp_forward.3} parent=11 // pred_fallthru
        _
      // Predicated region
      $region25: #{aspp_forward.3} parent=11 // pred_check
        %p221 = pneg %p137
      $region26: #{aspp_forward.3} parent=11 // pred_check_branch
        %223 = sbr.rel (%p221) target = $region28
      $region27: #{aspp_forward.3} parent=11 // pred_region
        _
      $region28: #{aspp_forward.3} parent=11 // pred_fallthru
        _
    $region12: #{aspp_forward.3} parent=5 // pred_fallthru
      _
    %p224 = scmp.lt.s32.totalorder %s13, 4
    // Predicated region
    $region29: #{aspp_forward.3} parent=5 // pred_check
      %p225 = pneg %p224
    $region30: #{aspp_forward.3} parent=5 // pred_check_branch
      %227 = sbr.rel (%p225) target = $region32
    $region31: #{aspp_forward.3} parent=5 // pred_region
      // Predicated region
      $region33: #{aspp_forward.3} parent=31 // pred_check
        %p228 = pneg %p47
      $region34: #{aspp_forward.3} parent=31 // pred_check_branch
        %230 = sbr.rel (%p228) target = $region36
      $region35: #{aspp_forward.3} parent=31 // pred_region
        %p231 = scmp.lt.s32.totalorder %s20, 1
        %s232 = scalar_select %p231, %s20, 1
        %p233 = scmp.lt.s32.totalorder %s21, 1
        %s234 = scalar_select %p233, %s21, 1
        %s235 = smul.addr %s234, 42
        %s236 = smul.addr %s232, 84
        %s237 = sadd.s32 %s235, %s236
        %s238 = smul.addr %s237, 4
        %s239 = scalar_lea.vmem %s0, %s238
      $region36: #{aspp_forward.3} parent=31 // pred_fallthru
        _
    $region32: #{aspp_forward.3} parent=5 // pred_fallthru
      _
    %p240 = scmp.le.s32.totalorder 1, %s13
    %p241 = scmp.lt.s32.totalorder %s13, 5
    %p242 = pnand %p240, %p241
    %p243 = pneg %p242
    // Predicated region
    $region37: #{aspp_forward.3} parent=5 // pred_check
      _
    $region38: #{aspp_forward.3} parent=5 // pred_check_branch
      %245 = sbr.rel (%p242) target = $region40
    $region39: #{aspp_forward.3} parent=5 // pred_region
      %s246 = ssub.s32 %s13, 1
      %p247 = scmp.lt.s32.totalorder %s22, 1
      %s248 = scalar_select %p247, %s22, 1
      %p249 = scmp.lt.s32.totalorder %s23, 1
      %s250 = scalar_select %p249, %s23, 1
      %s251 = smul.addr %s250, 42
      %s252 = smul.addr %s248, 84
      %s253 = sadd.s32 %s251, %s252
      %s254 = smul.addr %s253, 4
      %s255 = scalar_lea.vmem %s0, %s254
      %p256 = pneg %p53
      %p257 = pneg %p50
      %p258 = pneg %p74
      %p259 = pneg %p71
      %p260 = pneg %p95
      %p261 = pneg %p92
      %p262 = pneg %p116
      %p263 = pneg %p113
      %p264 = pneg %p137
      %p265 = pneg %p134
      %p266 = pneg %p167
      %p267 = pneg %p164
      %s268 = smul.u32 %s22, 2
      %s269 = sadd.s32 %s268, %s23
      %s270 = smul.u32 16, %s269
      %p271 = scmp.lt.s32.totalorder %s270, 63
      %s272 = scalar_select %p271, %s270, 63
      %s273 = smul.addr %s272, 4
      %s274 = scalar_lea.vmem %s5, %s273
      %p275 = pneg %p197
      %p276 = pneg %p194
      %s277 = smul.u32 %s22, 2
      %s278 = sadd.s32 %s277, %s23
      %p279 = scmp.lt.s32.totalorder %s278, 3
      %s280 = scalar_select %p279, %s278, 3
      %s281 = smul.addr %s280, 2
      %s282 = scalar_lea.vmem %s6, %s281
      %p283 = scmp.lt.s32.totalorder %s22, 1
      %s284 = scalar_select %p283, %s22, 1
      %p285 = scmp.lt.s32.totalorder %s23, 1
      %s286 = scalar_select %p285, %s23, 1
      %s287 = smul.addr %s286, 42
      %s288 = smul.addr %s284, 84
      %s289 = sadd.s32 %s287, %s288
      %s290 = smul.addr %s289, 4
      %s291 = scalar_lea.vmem %s0, %s290
      %s292 = smul.u32 %s22, 2
      %s293 = sadd.s32 %s292, %s23
      %s294 = smul.u32 16, %s293
      %p295 = scmp.lt.s32.totalorder %s294, 63
      %s296 = scalar_select %p295, %s294, 63
      %s297 = smul.addr %s296, 4
      %s298 = scalar_lea.vmem %s5, %s297
      %s299 = smul.u32 %s22, 2
      %s300 = sadd.s32 %s299, %s23
      %s301 = smul.u32 16, %s300
      %s302 = smul.u32 %s22, 2
      %s303 = sadd.s32 %s302, %s23
      %p304 = scmp.lt.s32.totalorder %s303, 3
      %s305 = scalar_select %p304, %s303, 3
      %s306 = smul.addr %s305, 2
      %s307 = scalar_lea.vmem %s6, %s306
      %s308 = smul.u32 %s22, 2
      %s309 = sadd.s32 %s308, %s23
      %s311 = scalar_lea.vmem %s291, 36
      %v312 = vld [vmem:[%s311] sm:$0xe]
      %v313 = vld [vmem:[%s311 + $0x4] sm:$0xf]
      %v314 = vld [vmem:[%s311 + $0x8] sm:$0x3]
      %v315 = vld [vmem:[%s311 + $0xc] sm:$0xe]
      %v316 = vld [vmem:[%s311 + $0x10] sm:$0xf]
      %v317 = vld [vmem:[%s311 + $0x14] sm:$0x3]
      %v318 = vld [vmem:[%s311 + $0x18] sm:$0xe]
      %v319 = vld [vmem:[%s311 + $0x1c] sm:$0xf]
      %v320 = vld [vmem:[%s311 + $0x20] sm:$0x3]
      %v321 = vld [vmem:[%s311 + $0x24] sm:$0xe]
      %v322 = vld [vmem:[%s311 + $0x28] sm:$0xf]
      %v323 = vld [vmem:[%s311 + $0x2c] sm:$0x3]
      %v324 = vld [vmem:[%s311 + $0x30] sm:$0xe]
      %v325 = vld [vmem:[%s311 + $0x34] sm:$0xf]
      %v326 = vld [vmem:[%s311 + $0x38] sm:$0x3]
      %v327 = vld [vmem:[%s311 + $0x3c] sm:$0xe]
      %v328 = vld [vmem:[%s311 + $0x40] sm:$0xf]
      %v329 = vld [vmem:[%s311 + $0x44] sm:$0x3]
      %v330 = vld [vmem:[%s311 + $0x48] sm:$0xe]
      %v331 = vld [vmem:[%s311 + $0x4c] sm:$0xf]
      %v332 = vld [vmem:[%s311 + $0x50] sm:$0x3]
      %v333 = vld [vmem:[%s311 + $0x54] sm:$0xe]
      %v334 = vld [vmem:[%s311 + $0x58] sm:$0xf]
      %v335 = vld [vmem:[%s311 + $0x5c] sm:$0x3]
      %vm336 = vsmask.f32 2304
      %vm337 = vsmask.f32 6416
      %vm338 = vmor %vm336, %vm337
      %v340 = vshrl.u32 %v312, 16
      %v342 = vrot.slane %v340, 5
      %v343 = vshll.u32 %v312, 16
      %v345 = vrot.slane %v343, 6
      %v346 = vor.u32 %v342, %v345
      %v347 = vrot.slane %v346, 4
      %v349 = vshrl.u32 %v313, 16
      %v351 = vrot.slane %v349, 5
      %v352 = vshll.u32 %v313, 16
      %v354 = vrot.slane %v352, 6
      %v355 = vor.u32 %v351, %v354
      %v356 = vsel %vm338, %v347, %v355
      %v357 = vrot.slane %v355, 4
      %v359 = vshrl.u32 %v314, 16
      %v361 = vrot.slane %v359, 5
      %v362 = vshll.u32 %v314, 16
      %v364 = vrot.slane %v362, 6
      %v365 = vor.u32 %v361, %v364
      %v366 = vsel %vm338, %v357, %v365
      %v368 = vshrl.u32 %v315, 16
      %v370 = vrot.slane %v368, 5
      %v371 = vshll.u32 %v315, 16
      %v373 = vrot.slane %v371, 6
      %v374 = vor.u32 %v370, %v373
      %v375 = vrot.slane %v374, 4
      %v377 = vshrl.u32 %v316, 16
      %v379 = vrot.slane %v377, 5
      %v380 = vshll.u32 %v316, 16
      %v382 = vrot.slane %v380, 6
      %v383 = vor.u32 %v379, %v382
      %v384 = vsel %vm338, %v375, %v383
      %v385 = vrot.slane %v383, 4
      %v387 = vshrl.u32 %v317, 16
      %v389 = vrot.slane %v387, 5
      %v390 = vshll.u32 %v317, 16
      %v392 = vrot.slane %v390, 6
      %v393 = vor.u32 %v389, %v392
      %v394 = vsel %vm338, %v385, %v393
      %v396 = vshrl.u32 %v318, 16
      %v398 = vrot.slane %v396, 5
      %v399 = vshll.u32 %v318, 16
      %v401 = vrot.slane %v399, 6
      %v402 = vor.u32 %v398, %v401
      %v403 = vrot.slane %v402, 4
      %v405 = vshrl.u32 %v319, 16
      %v407 = vrot.slane %v405, 5
      %v408 = vshll.u32 %v319, 16
      %v410 = vrot.slane %v408, 6
      %v411 = vor.u32 %v407, %v410
      %v412 = vsel %vm338, %v403, %v411
      %v413 = vrot.slane %v411, 4
      %v415 = vshrl.u32 %v320, 16
      %v417 = vrot.slane %v415, 5
      %v418 = vshll.u32 %v320, 16
      %v420 = vrot.slane %v418, 6
      %v421 = vor.u32 %v417, %v420
      %v422 = vsel %vm338, %v413, %v421
      %v424 = vshrl.u32 %v321, 16
      %v426 = vrot.slane %v424, 5
      %v427 = vshll.u32 %v321, 16
      %v429 = vrot.slane %v427, 6
      %v430 = vor.u32 %v426, %v429
      %v431 = vrot.slane %v430, 4
      %v433 = vshrl.u32 %v322, 16
      %v435 = vrot.slane %v433, 5
      %v436 = vshll.u32 %v322, 16
      %v438 = vrot.slane %v436, 6
      %v439 = vor.u32 %v435, %v438
      %v440 = vsel %vm338, %v431, %v439
      %v441 = vrot.slane %v439, 4
      %v443 = vshrl.u32 %v323, 16
      %v445 = vrot.slane %v443, 5
      %v446 = vshll.u32 %v323, 16
      %v448 = vrot.slane %v446, 6
      %v449 = vor.u32 %v445, %v448
      %v450 = vsel %vm338, %v441, %v449
      %v452 = vshrl.u32 %v324, 16
      %v454 = vrot.slane %v452, 5
      %v455 = vshll.u32 %v324, 16
      %v457 = vrot.slane %v455, 6
      %v458 = vor.u32 %v454, %v457
      %v459 = vrot.slane %v458, 4
      %v461 = vshrl.u32 %v325, 16
      %v463 = vrot.slane %v461, 5
      %v464 = vshll.u32 %v325, 16
      %v466 = vrot.slane %v464, 6
      %v467 = vor.u32 %v463, %v466
      %v468 = vsel %vm338, %v459, %v467
      %v469 = vrot.slane %v467, 4
      %v471 = vshrl.u32 %v326, 16
      %v473 = vrot.slane %v471, 5
      %v474 = vshll.u32 %v326, 16
      %v476 = vrot.slane %v474, 6
      %v477 = vor.u32 %v473, %v476
      %v478 = vsel %vm338, %v469, %v477
      %v480 = vshrl.u32 %v327, 16
      %v482 = vrot.slane %v480, 5
      %v483 = vshll.u32 %v327, 16
      %v485 = vrot.slane %v483, 6
      %v486 = vor.u32 %v482, %v485
      %v487 = vrot.slane %v486, 4
      %v489 = vshrl.u32 %v328, 16
      %v491 = vrot.slane %v489, 5
      %v492 = vshll.u32 %v328, 16
      %v494 = vrot.slane %v492, 6
      %v495 = vor.u32 %v491, %v494
      %v496 = vsel %vm338, %v487, %v495
      %v497 = vrot.slane %v495, 4
      %v499 = vshrl.u32 %v329, 16
      %v501 = vrot.slane %v499, 5
      %v502 = vshll.u32 %v329, 16
      %v504 = vrot.slane %v502, 6
      %v505 = vor.u32 %v501, %v504
      %v506 = vsel %vm338, %v497, %v505
      %v508 = vshrl.u32 %v330, 16
      %v510 = vrot.slane %v508, 5
      %v511 = vshll.u32 %v330, 16
      %v513 = vrot.slane %v511, 6
      %v514 = vor.u32 %v510, %v513
      %v515 = vrot.slane %v514, 4
      %v517 = vshrl.u32 %v331, 16
      %v519 = vrot.slane %v517, 5
      %v520 = vshll.u32 %v331, 16
      %v522 = vrot.slane %v520, 6
      %v523 = vor.u32 %v519, %v522
      %v524 = vsel %vm338, %v515, %v523
      %v525 = vrot.slane %v523, 4
      %v527 = vshrl.u32 %v332, 16
      %v529 = vrot.slane %v527, 5
      %v530 = vshll.u32 %v332, 16
      %v532 = vrot.slane %v530, 6
      %v533 = vor.u32 %v529, %v532
      %v534 = vsel %vm338, %v525, %v533
      %v536 = vshrl.u32 %v333, 16
      %v538 = vrot.slane %v536, 5
      %v539 = vshll.u32 %v333, 16
      %v541 = vrot.slane %v539, 6
      %v542 = vor.u32 %v538, %v541
      %v543 = vrot.slane %v542, 4
      %v545 = vshrl.u32 %v334, 16
      %v547 = vrot.slane %v545, 5
      %v548 = vshll.u32 %v334, 16
      %v550 = vrot.slane %v548, 6
      %v551 = vor.u32 %v547, %v550
      %v552 = vsel %vm338, %v543, %v551
      %v553 = vrot.slane %v551, 4
      %v555 = vshrl.u32 %v335, 16
      %v557 = vrot.slane %v555, 5
      %v558 = vshll.u32 %v335, 16
      %v560 = vrot.slane %v558, 6
      %v561 = vor.u32 %v557, %v560
      %v562 = vsel %vm338, %v553, %v561
      %v563 = vld [vmem:[%s1] sm:$0xf]
      %v564 = vunpack.c.l.b16 %v356
      %v565 = vunpack.c.l.b16 %v366
      %v566 = vunpack.c.l.b16 %v384
      %v567 = vunpack.c.l.b16 %v394
      %v568 = vunpack.c.l.b16 %v412
      %v569 = vunpack.c.l.b16 %v422
      %v570 = vunpack.c.l.b16 %v440
      %v571 = vunpack.c.l.b16 %v450
      %v572 = vunpack.c.l.b16 %v468
      %v573 = vunpack.c.l.b16 %v478
      %v574 = vunpack.c.l.b16 %v496
      %v575 = vunpack.c.l.b16 %v506
      %v576 = vunpack.c.l.b16 %v524
      %v577 = vunpack.c.l.b16 %v534
      %v578 = vunpack.c.l.b16 %v552
      %v579 = vunpack.c.l.b16 %v562
      %v580 = vpack.c.b16 %v565, %v564
      %v581 = vpack.c.b16 %v567, %v566
      %v582 = vpack.c.b16 %v569, %v568
      %v583 = vpack.c.b16 %v571, %v570
      %v584 = vpack.c.b16 %v573, %v572
      %v585 = vpack.c.b16 %v575, %v574
      %v586 = vpack.c.b16 %v577, %v576
      %v587 = vpack.c.b16 %v579, %v578
      %vm588 = vcmask 64512
      %v590 = vsel %vm588, %v580, 0
      %v593 = vsel %vm588, %v581, 0
      %v596 = vsel %vm588, %v582, 0
      %v599 = vsel %vm588, %v583, 0
      %v602 = vsel %vm588, %v584, 0
      %v605 = vsel %vm588, %v585, 0
      %v608 = vsel %vm588, %v586, 0
      %v611 = vsel %vm588, %v587, 0
      %vm613 = vcmask 1043456
      %v615 = vsel %vm613, %v563, 0
      %617 = vmatprep.subr.bf16.mxu0 0
      %618 = vmatpush1.bf16.msra.mxu0 0
      %619 = vmatprep.subr.bf16.mxu0 0
      %620 = vmatpush1.bf16.msra.mxu0 0
      %621 = vmatprep.subr.bf16.mxu0 0
      %622 = vmatpush1.bf16.msra.mxu0 0
      %623 = vmatprep.subr.bf16.mxu0 0
      %624 = vmatpush1.bf16.msra.mxu0 0
      %625 = vmatprep.subr.bf16.mxu0 0
      %626 = vmatpush1.bf16.msra.mxu0 0
      %627 = vmatprep.subr.bf16.mxu0 0
      %628 = vmatpush1.bf16.msra.mxu0 0
      %629 = vmatprep.subr.bf16.mxu0 0
      %630 = vmatpush1.bf16.msra.mxu0 0
      %631 = vmatprep.subr.bf16.mxu0 0
      %632 = vmatpush1.bf16.msra.mxu0 %v615
      %633 = vmatprep.subr.bf16.mxu0 0
      %634 = vmatpush2.bf16.msra.mxu0 0
      %635 = vmatprep.subr.bf16.mxu0 0
      %636 = vmatpush2.bf16.msra.mxu0 0
      %637 = vmatprep.subr.bf16.mxu0 0
      %638 = vmatpush2.bf16.msra.mxu0 0
      %639 = vmatprep.subr.bf16.mxu0 0
      %640 = vmatpush2.bf16.msra.mxu0 0
      %641 = vmatprep.subr.bf16.mxu0 0
      %642 = vmatpush2.bf16.msra.mxu0 0
      %643 = vmatprep.subr.bf16.mxu0 0
      %644 = vmatpush2.bf16.msra.mxu0 0
      %645 = vmatprep.subr.bf16.mxu0 0
      %646 = vmatpush2.bf16.msra.mxu0 0
      %647 = vmatprep.subr.bf16.mxu0 0
      %648 = vmatpush2.bf16.msra.mxu0 0
      %649 = vmatprep.mubr.bf16.mxu0 0
      %650 = vmatmul.mubr.bf16.gmra.mxu0 %v590
      %v651 = vpop.f32.mrf.mxu0
      %v652 = vadd.f32 0.0, %v651
      %v653 = vpop.f32.mrf.mxu0
      %v654 = vpop.f32.mrf.mxu0
      %v655 = vadd.f32 0.0, %v654
      %v656 = vpop.f32.mrf.mxu0
      %657 = vmatprep.mubr.bf16.mxu0 0
      %658 = vmatmul.mubr.bf16.gmra.mxu0 %v593
      %v659 = vpop.f32.mrf.mxu0
      %v660 = vadd.f32 0.0, %v659
      %v661 = vpop.f32.mrf.mxu0
      %v662 = vpop.f32.mrf.mxu0
      %v663 = vadd.f32 0.0, %v662
      %v664 = vpop.f32.mrf.mxu0
      %665 = vmatprep.mubr.bf16.mxu0 0
      %666 = vmatmul.mubr.bf16.gmra.mxu0 %v596
      %v667 = vpop.f32.mrf.mxu0
      %v668 = vadd.f32 0.0, %v667
      %v669 = vpop.f32.mrf.mxu0
      %v670 = vpop.f32.mrf.mxu0
      %v671 = vadd.f32 0.0, %v670
      %v672 = vpop.f32.mrf.mxu0
      %673 = vmatprep.mubr.bf16.mxu0 0
      %674 = vmatmul.mubr.bf16.gmra.mxu0 %v599
      %v675 = vpop.f32.mrf.mxu0
      %v676 = vadd.f32 0.0, %v675
      %v677 = vpop.f32.mrf.mxu0
      %v678 = vpop.f32.mrf.mxu0
      %v679 = vadd.f32 0.0, %v678
      %v680 = vpop.f32.mrf.mxu0
      %681 = vmatprep.mubr.bf16.mxu0 0
      %682 = vmatmul.mubr.bf16.gmra.mxu0 %v602
      %v683 = vpop.f32.mrf.mxu0
      %v684 = vadd.f32 0.0, %v683
      %v685 = vpop.f32.mrf.mxu0
      %v686 = vpop.f32.mrf.mxu0
      %v687 = vadd.f32 0.0, %v686
      %v688 = vpop.f32.mrf.mxu0
      %689 = vmatprep.mubr.bf16.mxu0 0
      %690 = vmatmul.mubr.bf16.gmra.mxu0 %v605
      %v691 = vpop.f32.mrf.mxu0
      %v692 = vadd.f32 0.0, %v691
      %v693 = vpop.f32.mrf.mxu0
      %v694 = vpop.f32.mrf.mxu0
      %v695 = vadd.f32 0.0, %v694
      %v696 = vpop.f32.mrf.mxu0
      %697 = vmatprep.mubr.bf16.mxu0 0
      %698 = vmatmul.mubr.bf16.gmra.mxu0 %v608
      %v699 = vpop.f32.mrf.mxu0
      %v700 = vadd.f32 0.0, %v699
      %v701 = vpop.f32.mrf.mxu0
      %v702 = vpop.f32.mrf.mxu0
      %v703 = vadd.f32 0.0, %v702
      %v704 = vpop.f32.mrf.mxu0
      %705 = vmatprep.mubr.bf16.mxu0 0
      %706 = vmatmul.mubr.bf16.gmra.mxu0 %v611
      %v707 = vpop.f32.mrf.mxu0
      %v708 = vadd.f32 0.0, %v707
      %v709 = vpop.f32.mrf.mxu0
      %v710 = vpop.f32.mrf.mxu0
      %v711 = vadd.f32 0.0, %v710
      %v712 = vpop.f32.mrf.mxu0
      %713 = vdwg.mxu0
      %s714 = scalar_lea.vmem %s291, 24
      %v715 = vld [vmem:[%s714] sm:$0xe]
      %v716 = vld [vmem:[%s714 + $0x4] sm:$0xf]
      %v717 = vld [vmem:[%s714 + $0x8] sm:$0x1]
      %v718 = vld [vmem:[%s714 + $0xc] sm:$0xe]
      %v719 = vld [vmem:[%s714 + $0x10] sm:$0xf]
      %v720 = vld [vmem:[%s714 + $0x14] sm:$0x1]
      %v721 = vld [vmem:[%s714 + $0x18] sm:$0xe]
      %v722 = vld [vmem:[%s714 + $0x1c] sm:$0xf]
      %v723 = vld [vmem:[%s714 + $0x20] sm:$0x1]
      %v724 = vld [vmem:[%s714 + $0x24] sm:$0xe]
      %v725 = vld [vmem:[%s714 + $0x28] sm:$0xf]
      %v726 = vld [vmem:[%s714 + $0x2c] sm:$0x1]
      %v727 = vld [vmem:[%s714 + $0x30] sm:$0xe]
      %v728 = vld [vmem:[%s714 + $0x34] sm:$0xf]
      %v729 = vld [vmem:[%s714 + $0x38] sm:$0x1]
      %v730 = vld [vmem:[%s714 + $0x3c] sm:$0xe]
      %v731 = vld [vmem:[%s714 + $0x40] sm:$0xf]
      %v732 = vld [vmem:[%s714 + $0x44] sm:$0x1]
      %v733 = vld [vmem:[%s714 + $0x48] sm:$0xe]
      %v734 = vld [vmem:[%s714 + $0x4c] sm:$0xf]
      %v735 = vld [vmem:[%s714 + $0x50] sm:$0x1]
      %v736 = vld [vmem:[%s714 + $0x54] sm:$0xe]
      %v737 = vld [vmem:[%s714 + $0x58] sm:$0xf]
      %v738 = vld [vmem:[%s714 + $0x5c] sm:$0x1]
      %v739 = vld [vmem:[%s714 + $0x8] sm:$0x3]
      %v740 = vld [vmem:[%s714 + $0x14] sm:$0x3]
      %v741 = vld [vmem:[%s714 + $0x20] sm:$0x3]
      %v742 = vld [vmem:[%s714 + $0x2c] sm:$0x3]
      %v743 = vld [vmem:[%s714 + $0x38] sm:$0x3]
      %v744 = vld [vmem:[%s714 + $0x44] sm:$0x3]
      %v745 = vld [vmem:[%s714 + $0x50] sm:$0x3]
      %v746 = vld [vmem:[%s714 + $0x5c] sm:$0x3]
      %v747 = vld [vmem:[%s714] sm:$0xc]
      %v748 = vld [vmem:[%s714 + $0xc] sm:$0xc]
      %v749 = vld [vmem:[%s714 + $0x18] sm:$0xc]
      %v750 = vld [vmem:[%s714 + $0x24] sm:$0xc]
      %v751 = vld [vmem:[%s714 + $0x30] sm:$0xc]
      %v752 = vld [vmem:[%s714 + $0x3c] sm:$0xc]
      %v753 = vld [vmem:[%s714 + $0x48] sm:$0xc]
      %v754 = vld [vmem:[%s714 + $0x54] sm:$0xc]
      %v755 = vld [vmem:[%s311 + $0x8] sm:$0x1]
      %v756 = vld [vmem:[%s311 + $0x14] sm:$0x1]
      %v757 = vld [vmem:[%s311 + $0x20] sm:$0x1]
      %v758 = vld [vmem:[%s311 + $0x2c] sm:$0x1]
      %v759 = vld [vmem:[%s311 + $0x38] sm:$0x1]
      %v760 = vld [vmem:[%s311 + $0x44] sm:$0x1]
      %v761 = vld [vmem:[%s311 + $0x50] sm:$0x1]
      %v762 = vld [vmem:[%s311 + $0x5c] sm:$0x1]
      %v763 = vld [vmem:[%s311] sm:$0xc]
      %v764 = vld [vmem:[%s311 + $0xc] sm:$0xc]
      %v765 = vld [vmem:[%s311 + $0x18] sm:$0xc]
      %v766 = vld [vmem:[%s311 + $0x24] sm:$0xc]
      %v767 = vld [vmem:[%s311 + $0x30] sm:$0xc]
      %v768 = vld [vmem:[%s311 + $0x3c] sm:$0xc]
      %v769 = vld [vmem:[%s311 + $0x48] sm:$0xc]
      %v770 = vld [vmem:[%s311 + $0x54] sm:$0xc]
      %s771 = scalar_lea.vmem %s291, 48
      %v772 = vld [vmem:[%s771] sm:$0xe]
      %v773 = vld [vmem:[%s771 + $0x4] sm:$0xf]
      %v774 = vld [vmem:[%s771 + $0x8] sm:$0x1]
      %v775 = vld [vmem:[%s771 + $0xc] sm:$0xe]
      %v776 = vld [vmem:[%s771 + $0x10] sm:$0xf]
      %v777 = vld [vmem:[%s771 + $0x14] sm:$0x1]
      %v778 = vld [vmem:[%s771 + $0x18] sm:$0xe]
      %v779 = vld [vmem:[%s771 + $0x1c] sm:$0xf]
      %v780 = vld [vmem:[%s771 + $0x20] sm:$0x1]
      %v781 = vld [vmem:[%s771 + $0x24] sm:$0xe]
      %v782 = vld [vmem:[%s771 + $0x28] sm:$0xf]
      %v783 = vld [vmem:[%s771 + $0x2c] sm:$0x1]
      %v784 = vld [vmem:[%s771 + $0x30] sm:$0xe]
      %v785 = vld [vmem:[%s771 + $0x34] sm:$0xf]
      %v786 = vld [vmem:[%s771 + $0x38] sm:$0x1]
      %v787 = vld [vmem:[%s771 + $0x3c] sm:$0xe]
      %v788 = vld [vmem:[%s771 + $0x40] sm:$0xf]
      %v789 = vld [vmem:[%s771 + $0x44] sm:$0x1]
      %v790 = vld [vmem:[%s771 + $0x48] sm:$0xe]
      %v791 = vld [vmem:[%s771 + $0x4c] sm:$0xf]
      %v792 = vld [vmem:[%s771 + $0x50] sm:$0x1]
      %v793 = vld [vmem:[%s771 + $0x54] sm:$0xe]
      %v794 = vld [vmem:[%s771 + $0x58] sm:$0xf]
      %v795 = vld [vmem:[%s771 + $0x5c] sm:$0x1]
      %v796 = vld [vmem:[%s771 + $0x8] sm:$0x3]
      %v797 = vld [vmem:[%s771 + $0x14] sm:$0x3]
      %v798 = vld [vmem:[%s771 + $0x20] sm:$0x3]
      %v799 = vld [vmem:[%s771 + $0x2c] sm:$0x3]
      %v800 = vld [vmem:[%s771 + $0x38] sm:$0x3]
      %v801 = vld [vmem:[%s771 + $0x44] sm:$0x3]
      %v802 = vld [vmem:[%s771 + $0x50] sm:$0x3]
      %v803 = vld [vmem:[%s771 + $0x5c] sm:$0x3]
      %v804 = vld [vmem:[%s771] sm:$0xc]
      %v805 = vld [vmem:[%s771 + $0xc] sm:$0xc]
      %v806 = vld [vmem:[%s771 + $0x18] sm:$0xc]
      %v807 = vld [vmem:[%s771 + $0x24] sm:$0xc]
      %v808 = vld [vmem:[%s771 + $0x30] sm:$0xc]
      %v809 = vld [vmem:[%s771 + $0x3c] sm:$0xc]
      %v810 = vld [vmem:[%s771 + $0x48] sm:$0xc]
      %v811 = vld [vmem:[%s771 + $0x54] sm:$0xc]
      %v836 = vunpack.c.l.b16 %v715
      %v837 = vunpack.c.l.b16 %v716
      %v838 = vunpack.c.l.b16 %v717
      %v839 = vunpack.c.l.b16 %v718
      %v840 = vunpack.c.l.b16 %v719
      %v841 = vunpack.c.l.b16 %v720
      %v842 = vunpack.c.l.b16 %v721
      %v843 = vunpack.c.l.b16 %v722
      %v844 = vunpack.c.l.b16 %v723
      %v845 = vunpack.c.l.b16 %v724
      %v846 = vunpack.c.l.b16 %v725
      %v847 = vunpack.c.l.b16 %v726
      %v848 = vunpack.c.l.b16 %v727
      %v849 = vunpack.c.l.b16 %v728
      %v850 = vunpack.c.l.b16 %v729
      %v851 = vunpack.c.l.b16 %v730
      %v852 = vunpack.c.l.b16 %v731
      %v853 = vunpack.c.l.b16 %v732
      %v854 = vunpack.c.l.b16 %v733
      %v855 = vunpack.c.l.b16 %v734
      %v856 = vunpack.c.l.b16 %v735
      %v857 = vunpack.c.l.b16 %v736
      %v858 = vunpack.c.l.b16 %v737
      %v859 = vunpack.c.l.b16 %v738
      %v860 = vpack.c.b16 %v837, %v836
      %v861 = vpack.c.b16 %v838, %v838
      %v862 = vpack.c.b16 %v840, %v839
      %v863 = vpack.c.b16 %v841, %v841
      %v864 = vpack.c.b16 %v843, %v842
      %v865 = vpack.c.b16 %v844, %v844
      %v866 = vpack.c.b16 %v846, %v845
      %v867 = vpack.c.b16 %v847, %v847
      %v868 = vpack.c.b16 %v849, %v848
      %v869 = vpack.c.b16 %v850, %v850
      %v870 = vpack.c.b16 %v852, %v851
      %v871 = vpack.c.b16 %v853, %v853
      %v872 = vpack.c.b16 %v855, %v854
      %v873 = vpack.c.b16 %v856, %v856
      %v874 = vpack.c.b16 %v858, %v857
      %v875 = vpack.c.b16 %v859, %v859
      %v884 = vunpack.c.l.b16 %v739
      %v885 = vunpack.c.l.b16 %v740
      %v886 = vunpack.c.l.b16 %v741
      %v887 = vunpack.c.l.b16 %v742
      %v888 = vunpack.c.l.b16 %v743
      %v889 = vunpack.c.l.b16 %v744
      %v890 = vunpack.c.l.b16 %v745
      %v891 = vunpack.c.l.b16 %v746
      %v892 = vpack.c.b16 %v884, %v884
      %v893 = vpack.c.b16 %v885, %v885
      %v894 = vpack.c.b16 %v886, %v886
      %v895 = vpack.c.b16 %v887, %v887
      %v896 = vpack.c.b16 %v888, %v888
      %v897 = vpack.c.b16 %v889, %v889
      %v898 = vpack.c.b16 %v890, %v890
      %v899 = vpack.c.b16 %v891, %v891
      %vm900 = vsmask.f32 7424
      %v902 = vshrl.u32 %v860, 16
      %v904 = vshll.u32 %v860, 16
      %v906 = vrot.slane %v904, 1
      %v907 = vor.u32 %v902, %v906
      %v909 = vshll.u32 %v892, 16
      %v911 = vrot.slane %v909, 1
      %v912 = vsel %vm900, %v907, %v911
      %v913 = vshrl.u32 %v892, 16
      %v915 = vor.u32 %v913, %v911
      %v917 = vshrl.u32 %v862, 16
      %v919 = vshll.u32 %v862, 16
      %v921 = vrot.slane %v919, 1
      %v922 = vor.u32 %v917, %v921
      %v924 = vshll.u32 %v893, 16
      %v926 = vrot.slane %v924, 1
      %v927 = vsel %vm900, %v922, %v926
      %v928 = vshrl.u32 %v893, 16
      %v930 = vor.u32 %v928, %v926
      %v932 = vshrl.u32 %v864, 16
      %v934 = vshll.u32 %v864, 16
      %v936 = vrot.slane %v934, 1
      %v937 = vor.u32 %v932, %v936
      %v939 = vshll.u32 %v894, 16
      %v941 = vrot.slane %v939, 1
      %v942 = vsel %vm900, %v937, %v941
      %v943 = vshrl.u32 %v894, 16
      %v945 = vor.u32 %v943, %v941
      %v947 = vshrl.u32 %v866, 16
      %v949 = vshll.u32 %v866, 16
      %v951 = vrot.slane %v949, 1
      %v952 = vor.u32 %v947, %v951
      %v954 = vshll.u32 %v895, 16
      %v956 = vrot.slane %v954, 1
      %v957 = vsel %vm900, %v952, %v956
      %v958 = vshrl.u32 %v895, 16
      %v960 = vor.u32 %v958, %v956
      %v962 = vshrl.u32 %v868, 16
      %v964 = vshll.u32 %v868, 16
      %v966 = vrot.slane %v964, 1
      %v967 = vor.u32 %v962, %v966
      %v969 = vshll.u32 %v896, 16
      %v971 = vrot.slane %v969, 1
      %v972 = vsel %vm900, %v967, %v971
      %v973 = vshrl.u32 %v896, 16
      %v975 = vor.u32 %v973, %v971
      %v977 = vshrl.u32 %v870, 16
      %v979 = vshll.u32 %v870, 16
      %v981 = vrot.slane %v979, 1
      %v982 = vor.u32 %v977, %v981
      %v984 = vshll.u32 %v897, 16
      %v986 = vrot.slane %v984, 1
      %v987 = vsel %vm900, %v982, %v986
      %v988 = vshrl.u32 %v897, 16
      %v990 = vor.u32 %v988, %v986
      %v992 = vshrl.u32 %v872, 16
      %v994 = vshll.u32 %v872, 16
      %v996 = vrot.slane %v994, 1
      %v997 = vor.u32 %v992, %v996
      %v999 = vshll.u32 %v898, 16
      %v1001 = vrot.slane %v999, 1
      %v1002 = vsel %vm900, %v997, %v1001
      %v1003 = vshrl.u32 %v898, 16
      %v1005 = vor.u32 %v1003, %v1001
      %v1007 = vshrl.u32 %v874, 16
      %v1009 = vshll.u32 %v874, 16
      %v1011 = vrot.slane %v1009, 1
      %v1012 = vor.u32 %v1007, %v1011
      %v1014 = vshll.u32 %v899, 16
      %v1016 = vrot.slane %v1014, 1
      %v1017 = vsel %vm900, %v1012, %v1016
      %v1018 = vshrl.u32 %v899, 16
      %v1020 = vor.u32 %v1018, %v1016
      %1021 = vrot.lane.b32.xlu0 %v912, 8
      %v1022 = vpop.permute.xlu0 %1021
      %1023 = vrot.lane.b32.xlu0 %v915, 8
      %v1024 = vpop.permute.xlu0 %1023
      %1025 = vrot.lane.b32.xlu0 %v927, 8
      %v1026 = vpop.permute.xlu0 %1025
      %1027 = vrot.lane.b32.xlu0 %v930, 8
      %v1028 = vpop.permute.xlu0 %1027
      %1029 = vrot.lane.b32.xlu0 %v942, 8
      %v1030 = vpop.permute.xlu0 %1029
      %1031 = vrot.lane.b32.xlu0 %v945, 8
      %v1032 = vpop.permute.xlu0 %1031
      %1033 = vrot.lane.b32.xlu0 %v957, 8
      %v1034 = vpop.permute.xlu0 %1033
      %1035 = vrot.lane.b32.xlu0 %v960, 8
      %v1036 = vpop.permute.xlu0 %1035
      %1037 = vrot.lane.b32.xlu0 %v972, 8
      %v1038 = vpop.permute.xlu0 %1037
      %1039 = vrot.lane.b32.xlu0 %v975, 8
      %v1040 = vpop.permute.xlu0 %1039
      %1041 = vrot.lane.b32.xlu0 %v987, 8
      %v1042 = vpop.permute.xlu0 %1041
      %1043 = vrot.lane.b32.xlu0 %v990, 8
      %v1044 = vpop.permute.xlu0 %1043
      %1045 = vrot.lane.b32.xlu0 %v1002, 8
      %v1046 = vpop.permute.xlu0 %1045
      %1047 = vrot.lane.b32.xlu0 %v1005, 8
      %v1048 = vpop.permute.xlu0 %1047
      %1049 = vrot.lane.b32.xlu0 %v1017, 8
      %v1050 = vpop.permute.xlu0 %1049
      %1051 = vrot.lane.b32.xlu0 %v1020, 8
      %v1052 = vpop.permute.xlu0 %1051
      %v1061 = vunpack.c.l.b16 %v747
      %v1062 = vunpack.c.l.b16 %v748
      %v1063 = vunpack.c.l.b16 %v749
      %v1064 = vunpack.c.l.b16 %v750
      %v1065 = vunpack.c.l.b16 %v751
      %v1066 = vunpack.c.l.b16 %v752
      %v1067 = vunpack.c.l.b16 %v753
      %v1068 = vunpack.c.l.b16 %v754
      %v1069 = vpack.c.b16 %v837, %v1061
      %v1070 = vpack.c.b16 %v840, %v1062
      %v1071 = vpack.c.b16 %v843, %v1063
      %v1072 = vpack.c.b16 %v846, %v1064
      %v1073 = vpack.c.b16 %v849, %v1065
      %v1074 = vpack.c.b16 %v852, %v1066
      %v1075 = vpack.c.b16 %v855, %v1067
      %v1076 = vpack.c.b16 %v858, %v1068
      %vm1077 = vcmask 1046528
      %v1078 = vrot.slane %v1069, 1
      %v1079 = vrot.slane %v892, 1
      %v1080 = vsel %vm1077, %v1078, %v1079
      %v1081 = vrot.slane %v1070, 1
      %v1082 = vrot.slane %v893, 1
      %v1083 = vsel %vm1077, %v1081, %v1082
      %v1084 = vrot.slane %v1071, 1
      %v1085 = vrot.slane %v894, 1
      %v1086 = vsel %vm1077, %v1084, %v1085
      %v1087 = vrot.slane %v1072, 1
      %v1088 = vrot.slane %v895, 1
      %v1089 = vsel %vm1077, %v1087, %v1088
      %v1090 = vrot.slane %v1073, 1
      %v1091 = vrot.slane %v896, 1
      %v1092 = vsel %vm1077, %v1090, %v1091
      %v1093 = vrot.slane %v1074, 1
      %v1094 = vrot.slane %v897, 1
      %v1095 = vsel %vm1077, %v1093, %v1094
      %v1096 = vrot.slane %v1075, 1
      %v1097 = vrot.slane %v898, 1
      %v1098 = vsel %vm1077, %v1096, %v1097
      %v1099 = vrot.slane %v1076, 1
      %v1100 = vrot.slane %v899, 1
      %v1101 = vsel %vm1077, %v1099, %v1100
      %1102 = vrot.lane.b32.xlu0 %v1080, 16
      %v1103 = vpop.permute.xlu0 %1102
      %1104 = vrot.lane.b32.xlu0 %v1079, 16
      %v1105 = vpop.permute.xlu0 %1104
      %1106 = vrot.lane.b32.xlu0 %v1083, 16
      %v1107 = vpop.permute.xlu0 %1106
      %1108 = vrot.lane.b32.xlu0 %v1082, 16
      %v1109 = vpop.permute.xlu0 %1108
      %1110 = vrot.lane.b32.xlu0 %v1086, 16
      %v1111 = vpop.permute.xlu0 %1110
      %1112 = vrot.lane.b32.xlu0 %v1085, 16
      %v1113 = vpop.permute.xlu0 %1112
      %1114 = vrot.lane.b32.xlu0 %v1089, 16
      %v1115 = vpop.permute.xlu0 %1114
      %1116 = vrot.lane.b32.xlu0 %v1088, 16
      %v1117 = vpop.permute.xlu0 %1116
      %1118 = vrot.lane.b32.xlu0 %v1092, 16
      %v1119 = vpop.permute.xlu0 %1118
      %1120 = vrot.lane.b32.xlu0 %v1091, 16
      %v1121 = vpop.permute.xlu0 %1120
      %1122 = vrot.lane.b32.xlu0 %v1095, 16
      %v1123 = vpop.permute.xlu0 %1122
      %1124 = vrot.lane.b32.xlu0 %v1094, 16
      %v1125 = vpop.permute.xlu0 %1124
      %1126 = vrot.lane.b32.xlu0 %v1098, 16
      %v1127 = vpop.permute.xlu0 %1126
      %1128 = vrot.lane.b32.xlu0 %v1097, 16
      %v1129 = vpop.permute.xlu0 %1128
      %1130 = vrot.lane.b32.xlu0 %v1101, 16
      %v1131 = vpop.permute.xlu0 %1130
      %1132 = vrot.lane.b32.xlu0 %v1100, 16
      %v1133 = vpop.permute.xlu0 %1132
      %v1158 = vunpack.c.l.b16 %v312
      %v1159 = vunpack.c.l.b16 %v313
      %v1160 = vunpack.c.l.b16 %v755
      %v1161 = vunpack.c.l.b16 %v315
      %v1162 = vunpack.c.l.b16 %v316
      %v1163 = vunpack.c.l.b16 %v756
      %v1164 = vunpack.c.l.b16 %v318
      %v1165 = vunpack.c.l.b16 %v319
      %v1166 = vunpack.c.l.b16 %v757
      %v1167 = vunpack.c.l.b16 %v321
      %v1168 = vunpack.c.l.b16 %v322
      %v1169 = vunpack.c.l.b16 %v758
      %v1170 = vunpack.c.l.b16 %v324
      %v1171 = vunpack.c.l.b16 %v325
      %v1172 = vunpack.c.l.b16 %v759
      %v1173 = vunpack.c.l.b16 %v327
      %v1174 = vunpack.c.l.b16 %v328
      %v1175 = vunpack.c.l.b16 %v760
      %v1176 = vunpack.c.l.b16 %v330
      %v1177 = vunpack.c.l.b16 %v331
      %v1178 = vunpack.c.l.b16 %v761
      %v1179 = vunpack.c.l.b16 %v333
      %v1180 = vunpack.c.l.b16 %v334
      %v1181 = vunpack.c.l.b16 %v762
      %v1182 = vpack.c.b16 %v1159, %v1158
      %v1183 = vpack.c.b16 %v1160, %v1160
      %v1184 = vpack.c.b16 %v1162, %v1161
      %v1185 = vpack.c.b16 %v1163, %v1163
      %v1186 = vpack.c.b16 %v1165, %v1164
      %v1187 = vpack.c.b16 %v1166, %v1166
      %v1188 = vpack.c.b16 %v1168, %v1167
      %v1189 = vpack.c.b16 %v1169, %v1169
      %v1190 = vpack.c.b16 %v1171, %v1170
      %v1191 = vpack.c.b16 %v1172, %v1172
      %v1192 = vpack.c.b16 %v1174, %v1173
      %v1193 = vpack.c.b16 %v1175, %v1175
      %v1194 = vpack.c.b16 %v1177, %v1176
      %v1195 = vpack.c.b16 %v1178, %v1178
      %v1196 = vpack.c.b16 %v1180, %v1179
      %v1197 = vpack.c.b16 %v1181, %v1181
      %1198 = vrot.lane.b32.xlu0 %v1182, 24
      %v1199 = vpop.permute.xlu0 %1198
      %1200 = vrot.lane.b32.xlu0 %v1183, 24
      %v1201 = vpop.permute.xlu0 %1200
      %1202 = vrot.lane.b32.xlu0 %v1184, 24
      %v1203 = vpop.permute.xlu0 %1202
      %1204 = vrot.lane.b32.xlu0 %v1185, 24
      %v1205 = vpop.permute.xlu0 %1204
      %1206 = vrot.lane.b32.xlu0 %v1186, 24
      %v1207 = vpop.permute.xlu0 %1206
      %1208 = vrot.lane.b32.xlu0 %v1187, 24
      %v1209 = vpop.permute.xlu0 %1208
      %1210 = vrot.lane.b32.xlu0 %v1188, 24
      %v1211 = vpop.permute.xlu0 %1210
      %1212 = vrot.lane.b32.xlu0 %v1189, 24
      %v1213 = vpop.permute.xlu0 %1212
      %1214 = vrot.lane.b32.xlu0 %v1190, 24
      %v1215 = vpop.permute.xlu0 %1214
      %1216 = vrot.lane.b32.xlu0 %v1191, 24
      %v1217 = vpop.permute.xlu0 %1216
      %1218 = vrot.lane.b32.xlu0 %v1192, 24
      %v1219 = vpop.permute.xlu0 %1218
      %1220 = vrot.lane.b32.xlu0 %v1193, 24
      %v1221 = vpop.permute.xlu0 %1220
      %1222 = vrot.lane.b32.xlu0 %v1194, 24
      %v1223 = vpop.permute.xlu0 %1222
      %1224 = vrot.lane.b32.xlu0 %v1195, 24
      %v1225 = vpop.permute.xlu0 %1224
      %1226 = vrot.lane.b32.xlu0 %v1196, 24
      %v1227 = vpop.permute.xlu0 %1226
      %1228 = vrot.lane.b32.xlu0 %v1197, 24
      %v1229 = vpop.permute.xlu0 %1228
      %v1238 = vunpack.c.l.b16 %v314
      %v1239 = vunpack.c.l.b16 %v317
      %v1240 = vunpack.c.l.b16 %v320
      %v1241 = vunpack.c.l.b16 %v323
      %v1242 = vunpack.c.l.b16 %v326
      %v1243 = vunpack.c.l.b16 %v329
      %v1244 = vunpack.c.l.b16 %v332
      %v1245 = vunpack.c.l.b16 %v335
      %v1246 = vpack.c.b16 %v1238, %v1238
      %v1247 = vpack.c.b16 %v1239, %v1239
      %v1248 = vpack.c.b16 %v1240, %v1240
      %v1249 = vpack.c.b16 %v1241, %v1241
      %v1250 = vpack.c.b16 %v1242, %v1242
      %v1251 = vpack.c.b16 %v1243, %v1243
      %v1252 = vpack.c.b16 %v1244, %v1244
      %v1253 = vpack.c.b16 %v1245, %v1245
      %v1255 = vshrl.u32 %v1182, 16
      %v1257 = vshll.u32 %v1182, 16
      %v1259 = vrot.slane %v1257, 1
      %v1260 = vor.u32 %v1255, %v1259
      %v1262 = vshll.u32 %v1246, 16
      %v1264 = vrot.slane %v1262, 1
      %v1265 = vsel %vm900, %v1260, %v1264
      %v1266 = vshrl.u32 %v1246, 16
      %v1268 = vor.u32 %v1266, %v1264
      %v1270 = vshrl.u32 %v1184, 16
      %v1272 = vshll.u32 %v1184, 16
      %v1274 = vrot.slane %v1272, 1
      %v1275 = vor.u32 %v1270, %v1274
      %v1277 = vshll.u32 %v1247, 16
      %v1279 = vrot.slane %v1277, 1
      %v1280 = vsel %vm900, %v1275, %v1279
      %v1281 = vshrl.u32 %v1247, 16
      %v1283 = vor.u32 %v1281, %v1279
      %v1285 = vshrl.u32 %v1186, 16
      %v1287 = vshll.u32 %v1186, 16
      %v1289 = vrot.slane %v1287, 1
      %v1290 = vor.u32 %v1285, %v1289
      %v1292 = vshll.u32 %v1248, 16
      %v1294 = vrot.slane %v1292, 1
      %v1295 = vsel %vm900, %v1290, %v1294
      %v1296 = vshrl.u32 %v1248, 16
      %v1298 = vor.u32 %v1296, %v1294
      %v1300 = vshrl.u32 %v1188, 16
      %v1302 = vshll.u32 %v1188, 16
      %v1304 = vrot.slane %v1302, 1
      %v1305 = vor.u32 %v1300, %v1304
      %v1307 = vshll.u32 %v1249, 16
      %v1309 = vrot.slane %v1307, 1
      %v1310 = vsel %vm900, %v1305, %v1309
      %v1311 = vshrl.u32 %v1249, 16
      %v1313 = vor.u32 %v1311, %v1309
      %v1315 = vshrl.u32 %v1190, 16
      %v1317 = vshll.u32 %v1190, 16
      %v1319 = vrot.slane %v1317, 1
      %v1320 = vor.u32 %v1315, %v1319
      %v1322 = vshll.u32 %v1250, 16
      %v1324 = vrot.slane %v1322, 1
      %v1325 = vsel %vm900, %v1320, %v1324
      %v1326 = vshrl.u32 %v1250, 16
      %v1328 = vor.u32 %v1326, %v1324
      %v1330 = vshrl.u32 %v1192, 16
      %v1332 = vshll.u32 %v1192, 16
      %v1334 = vrot.slane %v1332, 1
      %v1335 = vor.u32 %v1330, %v1334
      %v1337 = vshll.u32 %v1251, 16
      %v1339 = vrot.slane %v1337, 1
      %v1340 = vsel %vm900, %v1335, %v1339
      %v1341 = vshrl.u32 %v1251, 16
      %v1343 = vor.u32 %v1341, %v1339
      %v1345 = vshrl.u32 %v1194, 16
      %v1347 = vshll.u32 %v1194, 16
      %v1349 = vrot.slane %v1347, 1
      %v1350 = vor.u32 %v1345, %v1349
      %v1352 = vshll.u32 %v1252, 16
      %v1354 = vrot.slane %v1352, 1
      %v1355 = vsel %vm900, %v1350, %v1354
      %v1356 = vshrl.u32 %v1252, 16
      %v1358 = vor.u32 %v1356, %v1354
      %v1360 = vshrl.u32 %v1196, 16
      %v1362 = vshll.u32 %v1196, 16
      %v1364 = vrot.slane %v1362, 1
      %v1365 = vor.u32 %v1360, %v1364
      %v1367 = vshll.u32 %v1253, 16
      %v1369 = vrot.slane %v1367, 1
      %v1370 = vsel %vm900, %v1365, %v1369
      %v1371 = vshrl.u32 %v1253, 16
      %v1373 = vor.u32 %v1371, %v1369
      %1374 = vrot.lane.b32.xlu0 %v1265, 32
      %v1375 = vpop.permute.xlu0 %1374
      %1376 = vrot.lane.b32.xlu0 %v1268, 32
      %v1377 = vpop.permute.xlu0 %1376
      %1378 = vrot.lane.b32.xlu0 %v1280, 32
      %v1379 = vpop.permute.xlu0 %1378
      %1380 = vrot.lane.b32.xlu0 %v1283, 32
      %v1381 = vpop.permute.xlu0 %1380
      %1382 = vrot.lane.b32.xlu0 %v1295, 32
      %v1383 = vpop.permute.xlu0 %1382
      %1384 = vrot.lane.b32.xlu0 %v1298, 32
      %v1385 = vpop.permute.xlu0 %1384
      %1386 = vrot.lane.b32.xlu0 %v1310, 32
      %v1387 = vpop.permute.xlu0 %1386
      %1388 = vrot.lane.b32.xlu0 %v1313, 32
      %v1389 = vpop.permute.xlu0 %1388
      %1390 = vrot.lane.b32.xlu0 %v1325, 32
      %v1391 = vpop.permute.xlu0 %1390
      %1392 = vrot.lane.b32.xlu0 %v1328, 32
      %v1393 = vpop.permute.xlu0 %1392
      %1394 = vrot.lane.b32.xlu0 %v1340, 32
      %v1395 = vpop.permute.xlu0 %1394
      %1396 = vrot.lane.b32.xlu0 %v1343, 32
      %v1397 = vpop.permute.xlu0 %1396
      %1398 = vrot.lane.b32.xlu0 %v1355, 32
      %v1399 = vpop.permute.xlu0 %1398
      %1400 = vrot.lane.b32.xlu0 %v1358, 32
      %v1401 = vpop.permute.xlu0 %1400
      %1402 = vrot.lane.b32.xlu0 %v1370, 32
      %v1403 = vpop.permute.xlu0 %1402
      %1404 = vrot.lane.b32.xlu0 %v1373, 32
      %v1405 = vpop.permute.xlu0 %1404
      %v1414 = vunpack.c.l.b16 %v763
      %v1415 = vunpack.c.l.b16 %v764
      %v1416 = vunpack.c.l.b16 %v765
      %v1417 = vunpack.c.l.b16 %v766
      %v1418 = vunpack.c.l.b16 %v767
      %v1419 = vunpack.c.l.b16 %v768
      %v1420 = vunpack.c.l.b16 %v769
      %v1421 = vunpack.c.l.b16 %v770
      %v1422 = vpack.c.b16 %v1159, %v1414
      %v1423 = vpack.c.b16 %v1162, %v1415
      %v1424 = vpack.c.b16 %v1165, %v1416
      %v1425 = vpack.c.b16 %v1168, %v1417
      %v1426 = vpack.c.b16 %v1171, %v1418
      %v1427 = vpack.c.b16 %v1174, %v1419
      %v1428 = vpack.c.b16 %v1177, %v1420
      %v1429 = vpack.c.b16 %v1180, %v1421
      %v1430 = vrot.slane %v1422, 1
      %v1431 = vrot.slane %v1246, 1
      %v1432 = vsel %vm1077, %v1430, %v1431
      %v1433 = vrot.slane %v1423, 1
      %v1434 = vrot.slane %v1247, 1
      %v1435 = vsel %vm1077, %v1433, %v1434
      %v1436 = vrot.slane %v1424, 1
      %v1437 = vrot.slane %v1248, 1
      %v1438 = vsel %vm1077, %v1436, %v1437
      %v1439 = vrot.slane %v1425, 1
      %v1440 = vrot.slane %v1249, 1
      %v1441 = vsel %vm1077, %v1439, %v1440
      %v1442 = vrot.slane %v1426, 1
      %v1443 = vrot.slane %v1250, 1
      %v1444 = vsel %vm1077, %v1442, %v1443
      %v1445 = vrot.slane %v1427, 1
      %v1446 = vrot.slane %v1251, 1
      %v1447 = vsel %vm1077, %v1445, %v1446
      %v1448 = vrot.slane %v1428, 1
      %v1449 = vrot.slane %v1252, 1
      %v1450 = vsel %vm1077, %v1448, %v1449
      %v1451 = vrot.slane %v1429, 1
      %v1452 = vrot.slane %v1253, 1
      %v1453 = vsel %vm1077, %v1451, %v1452
      %1454 = vrot.lane.b32.xlu0 %v1432, 40
      %v1455 = vpop.permute.xlu0 %1454
      %1456 = vrot.lane.b32.xlu0 %v1431, 40
      %v1457 = vpop.permute.xlu0 %1456
      %1458 = vrot.lane.b32.xlu0 %v1435, 40
      %v1459 = vpop.permute.xlu0 %1458
      %1460 = vrot.lane.b32.xlu0 %v1434, 40
      %v1461 = vpop.permute.xlu0 %1460
      %1462 = vrot.lane.b32.xlu0 %v1438, 40
      %v1463 = vpop.permute.xlu0 %1462
      %1464 = vrot.lane.b32.xlu0 %v1437, 40
      %v1465 = vpop.permute.xlu0 %1464
      %1466 = vrot.lane.b32.xlu0 %v1441, 40
      %v1467 = vpop.permute.xlu0 %1466
      %1468 = vrot.lane.b32.xlu0 %v1440, 40
      %v1469 = vpop.permute.xlu0 %1468
      %1470 = vrot.lane.b32.xlu0 %v1444, 40
      %v1471 = vpop.permute.xlu0 %1470
      %1472 = vrot.lane.b32.xlu0 %v1443, 40
      %v1473 = vpop.permute.xlu0 %1472
      %1474 = vrot.lane.b32.xlu0 %v1447, 40
      %v1475 = vpop.permute.xlu0 %1474
      %1476 = vrot.lane.b32.xlu0 %v1446, 40
      %v1477 = vpop.permute.xlu0 %1476
      %1478 = vrot.lane.b32.xlu0 %v1450, 40
      %v1479 = vpop.permute.xlu0 %1478
      %1480 = vrot.lane.b32.xlu0 %v1449, 40
      %v1481 = vpop.permute.xlu0 %1480
      %1482 = vrot.lane.b32.xlu0 %v1453, 40
      %v1483 = vpop.permute.xlu0 %1482
      %1484 = vrot.lane.b32.xlu0 %v1452, 40
      %v1485 = vpop.permute.xlu0 %1484
      %v1510 = vunpack.c.l.b16 %v772
      %v1511 = vunpack.c.l.b16 %v773
      %v1512 = vunpack.c.l.b16 %v774
      %v1513 = vunpack.c.l.b16 %v775
      %v1514 = vunpack.c.l.b16 %v776
      %v1515 = vunpack.c.l.b16 %v777
      %v1516 = vunpack.c.l.b16 %v778
      %v1517 = vunpack.c.l.b16 %v779
      %v1518 = vunpack.c.l.b16 %v780
      %v1519 = vunpack.c.l.b16 %v781
      %v1520 = vunpack.c.l.b16 %v782
      %v1521 = vunpack.c.l.b16 %v783
      %v1522 = vunpack.c.l.b16 %v784
      %v1523 = vunpack.c.l.b16 %v785
      %v1524 = vunpack.c.l.b16 %v786
      %v1525 = vunpack.c.l.b16 %v787
      %v1526 = vunpack.c.l.b16 %v788
      %v1527 = vunpack.c.l.b16 %v789
      %v1528 = vunpack.c.l.b16 %v790
      %v1529 = vunpack.c.l.b16 %v791
      %v1530 = vunpack.c.l.b16 %v792
      %v1531 = vunpack.c.l.b16 %v793
      %v1532 = vunpack.c.l.b16 %v794
      %v1533 = vunpack.c.l.b16 %v795
      %v1534 = vpack.c.b16 %v1511, %v1510
      %v1535 = vpack.c.b16 %v1512, %v1512
      %v1536 = vpack.c.b16 %v1514, %v1513
      %v1537 = vpack.c.b16 %v1515, %v1515
      %v1538 = vpack.c.b16 %v1517, %v1516
      %v1539 = vpack.c.b16 %v1518, %v1518
      %v1540 = vpack.c.b16 %v1520, %v1519
      %v1541 = vpack.c.b16 %v1521, %v1521
      %v1542 = vpack.c.b16 %v1523, %v1522
      %v1543 = vpack.c.b16 %v1524, %v1524
      %v1544 = vpack.c.b16 %v1526, %v1525
      %v1545 = vpack.c.b16 %v1527, %v1527
      %v1546 = vpack.c.b16 %v1529, %v1528
      %v1547 = vpack.c.b16 %v1530, %v1530
      %v1548 = vpack.c.b16 %v1532, %v1531
      %v1549 = vpack.c.b16 %v1533, %v1533
      %1550 = vrot.lane.b32.xlu0 %v1534, 48
      %v1551 = vpop.permute.xlu0 %1550
      %1552 = vrot.lane.b32.xlu0 %v1535, 48
      %v1553 = vpop.permute.xlu0 %1552
      %1554 = vrot.lane.b32.xlu0 %v1536, 48
      %v1555 = vpop.permute.xlu0 %1554
      %1556 = vrot.lane.b32.xlu0 %v1537, 48
      %v1557 = vpop.permute.xlu0 %1556
      %1558 = vrot.lane.b32.xlu0 %v1538, 48
      %v1559 = vpop.permute.xlu0 %1558
      %1560 = vrot.lane.b32.xlu0 %v1539, 48
      %v1561 = vpop.permute.xlu0 %1560
      %1562 = vrot.lane.b32.xlu0 %v1540, 48
      %v1563 = vpop.permute.xlu0 %1562
      %1564 = vrot.lane.b32.xlu0 %v1541, 48
      %v1565 = vpop.permute.xlu0 %1564
      %1566 = vrot.lane.b32.xlu0 %v1542, 48
      %v1567 = vpop.permute.xlu0 %1566
      %1568 = vrot.lane.b32.xlu0 %v1543, 48
      %v1569 = vpop.permute.xlu0 %1568
      %1570 = vrot.lane.b32.xlu0 %v1544, 48
      %v1571 = vpop.permute.xlu0 %1570
      %1572 = vrot.lane.b32.xlu0 %v1545, 48
      %v1573 = vpop.permute.xlu0 %1572
      %1574 = vrot.lane.b32.xlu0 %v1546, 48
      %v1575 = vpop.permute.xlu0 %1574
      %1576 = vrot.lane.b32.xlu0 %v1547, 48
      %v1577 = vpop.permute.xlu0 %1576
      %1578 = vrot.lane.b32.xlu0 %v1548, 48
      %v1579 = vpop.permute.xlu0 %1578
      %1580 = vrot.lane.b32.xlu0 %v1549, 48
      %v1581 = vpop.permute.xlu0 %1580
      %v1590 = vunpack.c.l.b16 %v796
      %v1591 = vunpack.c.l.b16 %v797
      %v1592 = vunpack.c.l.b16 %v798
      %v1593 = vunpack.c.l.b16 %v799
      %v1594 = vunpack.c.l.b16 %v800
      %v1595 = vunpack.c.l.b16 %v801
      %v1596 = vunpack.c.l.b16 %v802
      %v1597 = vunpack.c.l.b16 %v803
      %v1598 = vpack.c.b16 %v1590, %v1590
      %v1599 = vpack.c.b16 %v1591, %v1591
      %v1600 = vpack.c.b16 %v1592, %v1592
      %v1601 = vpack.c.b16 %v1593, %v1593
      %v1602 = vpack.c.b16 %v1594, %v1594
      %v1603 = vpack.c.b16 %v1595, %v1595
      %v1604 = vpack.c.b16 %v1596, %v1596
      %v1605 = vpack.c.b16 %v1597, %v1597
      %v1607 = vshrl.u32 %v1534, 16
      %v1609 = vshll.u32 %v1534, 16
      %v1611 = vrot.slane %v1609, 1
      %v1612 = vor.u32 %v1607, %v1611
      %v1614 = vshll.u32 %v1598, 16
      %v1616 = vrot.slane %v1614, 1
      %v1617 = vsel %vm900, %v1612, %v1616
      %v1618 = vshrl.u32 %v1598, 16
      %v1620 = vor.u32 %v1618, %v1616
      %v1622 = vshrl.u32 %v1536, 16
      %v1624 = vshll.u32 %v1536, 16
      %v1626 = vrot.slane %v1624, 1
      %v1627 = vor.u32 %v1622, %v1626
      %v1629 = vshll.u32 %v1599, 16
      %v1631 = vrot.slane %v1629, 1
      %v1632 = vsel %vm900, %v1627, %v1631
      %v1633 = vshrl.u32 %v1599, 16
      %v1635 = vor.u32 %v1633, %v1631
      %v1637 = vshrl.u32 %v1538, 16
      %v1639 = vshll.u32 %v1538, 16
      %v1641 = vrot.slane %v1639, 1
      %v1642 = vor.u32 %v1637, %v1641
      %v1644 = vshll.u32 %v1600, 16
      %v1646 = vrot.slane %v1644, 1
      %v1647 = vsel %vm900, %v1642, %v1646
      %v1648 = vshrl.u32 %v1600, 16
      %v1650 = vor.u32 %v1648, %v1646
      %v1652 = vshrl.u32 %v1540, 16
      %v1654 = vshll.u32 %v1540, 16
      %v1656 = vrot.slane %v1654, 1
      %v1657 = vor.u32 %v1652, %v1656
      %v1659 = vshll.u32 %v1601, 16
      %v1661 = vrot.slane %v1659, 1
      %v1662 = vsel %vm900, %v1657, %v1661
      %v1663 = vshrl.u32 %v1601, 16
      %v1665 = vor.u32 %v1663, %v1661
      %v1667 = vshrl.u32 %v1542, 16
      %v1669 = vshll.u32 %v1542, 16
      %v1671 = vrot.slane %v1669, 1
      %v1672 = vor.u32 %v1667, %v1671
      %v1674 = vshll.u32 %v1602, 16
      %v1676 = vrot.slane %v1674, 1
      %v1677 = vsel %vm900, %v1672, %v1676
      %v1678 = vshrl.u32 %v1602, 16
      %v1680 = vor.u32 %v1678, %v1676
      %v1682 = vshrl.u32 %v1544, 16
      %v1684 = vshll.u32 %v1544, 16
      %v1686 = vrot.slane %v1684, 1
      %v1687 = vor.u32 %v1682, %v1686
      %v1689 = vshll.u32 %v1603, 16
      %v1691 = vrot.slane %v1689, 1
      %v1692 = vsel %vm900, %v1687, %v1691
      %v1693 = vshrl.u32 %v1603, 16
      %v1695 = vor.u32 %v1693, %v1691
      %v1697 = vshrl.u32 %v1546, 16
      %v1699 = vshll.u32 %v1546, 16
      %v1701 = vrot.slane %v1699, 1
      %v1702 = vor.u32 %v1697, %v1701
      %v1704 = vshll.u32 %v1604, 16
      %v1706 = vrot.slane %v1704, 1
      %v1707 = vsel %vm900, %v1702, %v1706
      %v1708 = vshrl.u32 %v1604, 16
      %v1710 = vor.u32 %v1708, %v1706
      %v1712 = vshrl.u32 %v1548, 16
      %v1714 = vshll.u32 %v1548, 16
      %v1716 = vrot.slane %v1714, 1
      %v1717 = vor.u32 %v1712, %v1716
      %v1719 = vshll.u32 %v1605, 16
      %v1721 = vrot.slane %v1719, 1
      %v1722 = vsel %vm900, %v1717, %v1721
      %v1723 = vshrl.u32 %v1605, 16
      %v1725 = vor.u32 %v1723, %v1721
      %1726 = vrot.lane.b32.xlu0 %v1617, 56
      %v1727 = vpop.permute.xlu0 %1726
      %1728 = vrot.lane.b32.xlu0 %v1620, 56
      %v1729 = vpop.permute.xlu0 %1728
      %1730 = vrot.lane.b32.xlu0 %v1632, 56
      %v1731 = vpop.permute.xlu0 %1730
      %1732 = vrot.lane.b32.xlu0 %v1635, 56
      %v1733 = vpop.permute.xlu0 %1732
      %1734 = vrot.lane.b32.xlu0 %v1647, 56
      %v1735 = vpop.permute.xlu0 %1734
      %1736 = vrot.lane.b32.xlu0 %v1650, 56
      %v1737 = vpop.permute.xlu0 %1736
      %1738 = vrot.lane.b32.xlu0 %v1662, 56
      %v1739 = vpop.permute.xlu0 %1738
      %1740 = vrot.lane.b32.xlu0 %v1665, 56
      %v1741 = vpop.permute.xlu0 %1740
      %1742 = vrot.lane.b32.xlu0 %v1677, 56
      %v1743 = vpop.permute.xlu0 %1742
      %1744 = vrot.lane.b32.xlu0 %v1680, 56
      %v1745 = vpop.permute.xlu0 %1744
      %1746 = vrot.lane.b32.xlu0 %v1692, 56
      %v1747 = vpop.permute.xlu0 %1746
      %1748 = vrot.lane.b32.xlu0 %v1695, 56
      %v1749 = vpop.permute.xlu0 %1748
      %1750 = vrot.lane.b32.xlu0 %v1707, 56
      %v1751 = vpop.permute.xlu0 %1750
      %1752 = vrot.lane.b32.xlu0 %v1710, 56
      %v1753 = vpop.permute.xlu0 %1752
      %1754 = vrot.lane.b32.xlu0 %v1722, 56
      %v1755 = vpop.permute.xlu0 %1754
      %1756 = vrot.lane.b32.xlu0 %v1725, 56
      %v1757 = vpop.permute.xlu0 %1756
      %v1766 = vunpack.c.l.b16 %v804
      %v1767 = vunpack.c.l.b16 %v805
      %v1768 = vunpack.c.l.b16 %v806
      %v1769 = vunpack.c.l.b16 %v807
      %v1770 = vunpack.c.l.b16 %v808
      %v1771 = vunpack.c.l.b16 %v809
      %v1772 = vunpack.c.l.b16 %v810
      %v1773 = vunpack.c.l.b16 %v811
      %v1774 = vpack.c.b16 %v1511, %v1766
      %v1775 = vpack.c.b16 %v1514, %v1767
      %v1776 = vpack.c.b16 %v1517, %v1768
      %v1777 = vpack.c.b16 %v1520, %v1769
      %v1778 = vpack.c.b16 %v1523, %v1770
      %v1779 = vpack.c.b16 %v1526, %v1771
      %v1780 = vpack.c.b16 %v1529, %v1772
      %v1781 = vpack.c.b16 %v1532, %v1773
      %v1782 = vrot.slane %v1774, 1
      %v1783 = vrot.slane %v1598, 1
      %v1784 = vsel %vm1077, %v1782, %v1783
      %v1785 = vrot.slane %v1775, 1
      %v1786 = vrot.slane %v1599, 1
      %v1787 = vsel %vm1077, %v1785, %v1786
      %v1788 = vrot.slane %v1776, 1
      %v1789 = vrot.slane %v1600, 1
      %v1790 = vsel %vm1077, %v1788, %v1789
      %v1791 = vrot.slane %v1777, 1
      %v1792 = vrot.slane %v1601, 1
      %v1793 = vsel %vm1077, %v1791, %v1792
      %v1794 = vrot.slane %v1778, 1
      %v1795 = vrot.slane %v1602, 1
      %v1796 = vsel %vm1077, %v1794, %v1795
      %v1797 = vrot.slane %v1779, 1
      %v1798 = vrot.slane %v1603, 1
      %v1799 = vsel %vm1077, %v1797, %v1798
      %v1800 = vrot.slane %v1780, 1
      %v1801 = vrot.slane %v1604, 1
      %v1802 = vsel %vm1077, %v1800, %v1801
      %v1803 = vrot.slane %v1781, 1
      %v1804 = vrot.slane %v1605, 1
      %v1805 = vsel %vm1077, %v1803, %v1804
      %1806 = vrot.lane.b32.xlu0 %v1784, 64
      %v1807 = vpop.permute.xlu0 %1806
      %1808 = vrot.lane.b32.xlu0 %v1783, 64
      %v1809 = vpop.permute.xlu0 %1808
      %1810 = vrot.lane.b32.xlu0 %v1787, 64
      %v1811 = vpop.permute.xlu0 %1810
      %1812 = vrot.lane.b32.xlu0 %v1786, 64
      %v1813 = vpop.permute.xlu0 %1812
      %1814 = vrot.lane.b32.xlu0 %v1790, 64
      %v1815 = vpop.permute.xlu0 %1814
      %1816 = vrot.lane.b32.xlu0 %v1789, 64
      %v1817 = vpop.permute.xlu0 %1816
      %1818 = vrot.lane.b32.xlu0 %v1793, 64
      %v1819 = vpop.permute.xlu0 %1818
      %1820 = vrot.lane.b32.xlu0 %v1792, 64
      %v1821 = vpop.permute.xlu0 %1820
      %1822 = vrot.lane.b32.xlu0 %v1796, 64
      %v1823 = vpop.permute.xlu0 %1822
      %1824 = vrot.lane.b32.xlu0 %v1795, 64
      %v1825 = vpop.permute.xlu0 %1824
      %1826 = vrot.lane.b32.xlu0 %v1799, 64
      %v1827 = vpop.permute.xlu0 %1826
      %1828 = vrot.lane.b32.xlu0 %v1798, 64
      %v1829 = vpop.permute.xlu0 %1828
      %1830 = vrot.lane.b32.xlu0 %v1802, 64
      %v1831 = vpop.permute.xlu0 %1830
      %1832 = vrot.lane.b32.xlu0 %v1801, 64
      %v1833 = vpop.permute.xlu0 %1832
      %1834 = vrot.lane.b32.xlu0 %v1805, 64
      %v1835 = vpop.permute.xlu0 %1834
      %1836 = vrot.lane.b32.xlu0 %v1804, 64
      %v1837 = vpop.permute.xlu0 %1836
      %v1839 = vsel %vm588, %v860, %v1022
      %v1842 = vsel %vm588, %v861, %v1024
      %v1844 = vsel %vm588, %v862, %v1026
      %v1847 = vsel %vm588, %v863, %v1028
      %v1849 = vsel %vm588, %v864, %v1030
      %v1852 = vsel %vm588, %v865, %v1032
      %v1854 = vsel %vm588, %v866, %v1034
      %v1857 = vsel %vm588, %v867, %v1036
      %v1859 = vsel %vm588, %v868, %v1038
      %v1862 = vsel %vm588, %v869, %v1040
      %v1864 = vsel %vm588, %v870, %v1042
      %v1867 = vsel %vm588, %v871, %v1044
      %v1869 = vsel %vm588, %v872, %v1046
      %v1872 = vsel %vm588, %v873, %v1048
      %v1874 = vsel %vm588, %v874, %v1050
      %v1877 = vsel %vm588, %v875, %v1052
      %vm1878 = vcmask 130048
      %v1880 = vsel %vm1878, %v1839, %v1103
      %v1882 = vsel %vm1878, %v1842, %v1105
      %v1884 = vsel %vm1878, %v1844, %v1107
      %v1886 = vsel %vm1878, %v1847, %v1109
      %v1888 = vsel %vm1878, %v1849, %v1111
      %v1890 = vsel %vm1878, %v1852, %v1113
      %v1892 = vsel %vm1878, %v1854, %v1115
      %v1894 = vsel %vm1878, %v1857, %v1117
      %v1896 = vsel %vm1878, %v1859, %v1119
      %v1898 = vsel %vm1878, %v1862, %v1121
      %v1900 = vsel %vm1878, %v1864, %v1123
      %v1902 = vsel %vm1878, %v1867, %v1125
      %v1904 = vsel %vm1878, %v1869, %v1127
      %v1906 = vsel %vm1878, %v1872, %v1129
      %v1908 = vsel %vm1878, %v1874, %v1131
      %v1910 = vsel %vm1878, %v1877, %v1133
      %vm1911 = vcmask 195584
      %v1913 = vsel %vm1911, %v1880, %v1199
      %v1915 = vsel %vm1911, %v1882, %v1201
      %v1917 = vsel %vm1911, %v1884, %v1203
      %v1919 = vsel %vm1911, %v1886, %v1205
      %v1921 = vsel %vm1911, %v1888, %v1207
      %v1923 = vsel %vm1911, %v1890, %v1209
      %v1925 = vsel %vm1911, %v1892, %v1211
      %v1927 = vsel %vm1911, %v1894, %v1213
      %v1929 = vsel %vm1911, %v1896, %v1215
      %v1931 = vsel %vm1911, %v1898, %v1217
      %v1933 = vsel %vm1911, %v1900, %v1219
      %v1935 = vsel %vm1911, %v1902, %v1221
      %v1937 = vsel %vm1911, %v1904, %v1223
      %v1939 = vsel %vm1911, %v1906, %v1225
      %v1941 = vsel %vm1911, %v1908, %v1227
      %v1943 = vsel %vm1911, %v1910, %v1229
      %vm1944 = vcmask 261120
      %v1946 = vsel %vm1944, %v1913, %v1375
      %v1948 = vsel %vm1944, %v1915, %v1377
      %v1950 = vsel %vm1944, %v1917, %v1379
      %v1952 = vsel %vm1944, %v1919, %v1381
      %v1954 = vsel %vm1944, %v1921, %v1383
      %v1956 = vsel %vm1944, %v1923, %v1385
      %v1958 = vsel %vm1944, %v1925, %v1387
      %v1960 = vsel %vm1944, %v1927, %v1389
      %v1962 = vsel %vm1944, %v1929, %v1391
      %v1964 = vsel %vm1944, %v1931, %v1393
      %v1966 = vsel %vm1944, %v1933, %v1395
      %v1968 = vsel %vm1944, %v1935, %v1397
      %v1970 = vsel %vm1944, %v1937, %v1399
      %v1972 = vsel %vm1944, %v1939, %v1401
      %v1974 = vsel %vm1944, %v1941, %v1403
      %v1976 = vsel %vm1944, %v1943, %v1405
      %vm1977 = vcmask 326656
      %v1979 = vsel %vm1977, %v1946, %v1455
      %v1981 = vsel %vm1977, %v1948, %v1457
      %v1983 = vsel %vm1977, %v1950, %v1459
      %v1985 = vsel %vm1977, %v1952, %v1461
      %v1987 = vsel %vm1977, %v1954, %v1463
      %v1989 = vsel %vm1977, %v1956, %v1465
      %v1991 = vsel %vm1977, %v1958, %v1467
      %v1993 = vsel %vm1977, %v1960, %v1469
      %v1995 = vsel %vm1977, %v1962, %v1471
      %v1997 = vsel %vm1977, %v1964, %v1473
      %v1999 = vsel %vm1977, %v1966, %v1475
      %v2001 = vsel %vm1977, %v1968, %v1477
      %v2003 = vsel %vm1977, %v1970, %v1479
      %v2005 = vsel %vm1977, %v1972, %v1481
      %v2007 = vsel %vm1977, %v1974, %v1483
      %v2009 = vsel %vm1977, %v1976, %v1485
      %vm2010 = vcmask 392192
      %v2012 = vsel %vm2010, %v1979, %v1551
      %v2014 = vsel %vm2010, %v1981, %v1553
      %v2016 = vsel %vm2010, %v1983, %v1555
      %v2018 = vsel %vm2010, %v1985, %v1557
      %v2020 = vsel %vm2010, %v1987, %v1559
      %v2022 = vsel %vm2010, %v1989, %v1561
      %v2024 = vsel %vm2010, %v1991, %v1563
      %v2026 = vsel %vm2010, %v1993, %v1565
      %v2028 = vsel %vm2010, %v1995, %v1567
      %v2030 = vsel %vm2010, %v1997, %v1569
      %v2032 = vsel %vm2010, %v1999, %v1571
      %v2034 = vsel %vm2010, %v2001, %v1573
      %v2036 = vsel %vm2010, %v2003, %v1575
      %v2038 = vsel %vm2010, %v2005, %v1577
      %v2040 = vsel %vm2010, %v2007, %v1579
      %v2042 = vsel %vm2010, %v2009, %v1581
      %vm2043 = vcmask 457728
      %v2045 = vsel %vm2043, %v2012, %v1727
      %v2047 = vsel %vm2043, %v2014, %v1729
      %v2049 = vsel %vm2043, %v2016, %v1731
      %v2051 = vsel %vm2043, %v2018, %v1733
      %v2053 = vsel %vm2043, %v2020, %v1735
      %v2055 = vsel %vm2043, %v2022, %v1737
      %v2057 = vsel %vm2043, %v2024, %v1739
      %v2059 = vsel %vm2043, %v2026, %v1741
      %v2061 = vsel %vm2043, %v2028, %v1743
      %v2063 = vsel %vm2043, %v2030, %v1745
      %v2065 = vsel %vm2043, %v2032, %v1747
      %v2067 = vsel %vm2043, %v2034, %v1749
      %v2069 = vsel %vm2043, %v2036, %v1751
      %v2071 = vsel %vm2043, %v2038, %v1753
      %v2073 = vsel %vm2043, %v2040, %v1755
      %v2075 = vsel %vm2043, %v2042, %v1757
      %vm2076 = vcmask 523264
      %v2078 = vsel %vm2076, %v2045, %v1807
      %v2080 = vsel %vm2076, %v2047, %v1809
      %v2082 = vsel %vm2076, %v2049, %v1811
      %v2084 = vsel %vm2076, %v2051, %v1813
      %v2086 = vsel %vm2076, %v2053, %v1815
      %v2088 = vsel %vm2076, %v2055, %v1817
      %v2090 = vsel %vm2076, %v2057, %v1819
      %v2092 = vsel %vm2076, %v2059, %v1821
      %v2094 = vsel %vm2076, %v2061, %v1823
      %v2096 = vsel %vm2076, %v2063, %v1825
      %v2098 = vsel %vm2076, %v2065, %v1827
      %v2100 = vsel %vm2076, %v2067, %v1829
      %v2102 = vsel %vm2076, %v2069, %v1831
      %v2104 = vsel %vm2076, %v2071, %v1833
      %v2106 = vsel %vm2076, %v2073, %v1835
      %v2108 = vsel %vm2076, %v2075, %v1837
      %v2125 = vrot.slane %v2078, 1
      %v2126 = vrot.slane %v2080, 1
      %v2127 = vsel %vm1077, %v2125, %v2126
      %v2128 = vrot.slane %v2082, 1
      %v2129 = vrot.slane %v2084, 1
      %v2130 = vsel %vm1077, %v2128, %v2129
      %v2131 = vrot.slane %v2086, 1
      %v2132 = vrot.slane %v2088, 1
      %v2133 = vsel %vm1077, %v2131, %v2132
      %v2134 = vrot.slane %v2090, 1
      %v2135 = vrot.slane %v2092, 1
      %v2136 = vsel %vm1077, %v2134, %v2135
      %v2137 = vrot.slane %v2094, 1
      %v2138 = vrot.slane %v2096, 1
      %v2139 = vsel %vm1077, %v2137, %v2138
      %v2140 = vrot.slane %v2098, 1
      %v2141 = vrot.slane %v2100, 1
      %v2142 = vsel %vm1077, %v2140, %v2141
      %v2143 = vrot.slane %v2102, 1
      %v2144 = vrot.slane %v2104, 1
      %v2145 = vsel %vm1077, %v2143, %v2144
      %v2146 = vrot.slane %v2106, 1
      %v2147 = vrot.slane %v2108, 1
      %v2148 = vsel %vm1077, %v2146, %v2147
      %v2149 = vld [vmem:[%s2] sm:$0xf]
      %v2150 = vld [vmem:[%s2 + $0x4] sm:$0xf]
      %v2151 = vld [vmem:[%s2 + $0x8] sm:$0xf]
      %v2152 = vld [vmem:[%s2 + $0xc] sm:$0xf]
      %v2153 = vld [vmem:[%s2 + $0x10] sm:$0xf]
      %v2154 = vld [vmem:[%s2 + $0x14] sm:$0xf]
      %v2155 = vld [vmem:[%s2 + $0x18] sm:$0xf]
      %v2156 = vld [vmem:[%s2 + $0x1c] sm:$0xf]
      %v2157 = vld [vmem:[%s2 + $0x20] sm:$0xf]
      %v2167 = vunpack.c.l.b16 %v2149
      %v2168 = vunpack.c.l.b16 %v2150
      %v2169 = vunpack.c.l.b16 %v2151
      %v2170 = vunpack.c.l.b16 %v2152
      %v2171 = vunpack.c.l.b16 %v2153
      %v2172 = vunpack.c.l.b16 %v2154
      %v2173 = vunpack.c.l.b16 %v2155
      %v2174 = vunpack.c.l.b16 %v2156
      %v2175 = vunpack.c.l.b16 %v2157
      %v2176 = vpack.c.b16 %v2168, %v2167
      %v2177 = vpack.c.b16 %v2170, %v2169
      %v2178 = vpack.c.b16 %v2172, %v2171
      %v2179 = vpack.c.b16 %v2174, %v2173
      %v2180 = vpack.c.b16 %v2175, %v2175
      %vm2185 = vcmask 588800
      %v2187 = vsel %vm2185, %v2127, 0
      %v2190 = vsel %vm2185, %v2130, 0
      %v2193 = vsel %vm2185, %v2133, 0
      %v2196 = vsel %vm2185, %v2136, 0
      %v2199 = vsel %vm2185, %v2139, 0
      %v2202 = vsel %vm2185, %v2142, 0
      %v2205 = vsel %vm2185, %v2145, 0
      %v2208 = vsel %vm2185, %v2148, 0
      %v2211 = vsel %vm613, %v2180, 0
      %2213 = vmatprep.subr.bf16.mxu0 0
      %2214 = vmatpush1.bf16.msra.mxu0 0
      %2215 = vmatprep.subr.bf16.mxu0 0
      %2216 = vmatpush1.bf16.msra.mxu0 0
      %2217 = vmatprep.subr.bf16.mxu0 0
      %2218 = vmatpush1.bf16.msra.mxu0 0
      %2219 = vmatprep.subr.bf16.mxu0 0
      %2220 = vmatpush1.bf16.msra.mxu0 %v2211
      %2221 = vmatprep.subr.bf16.mxu0 0
      %2222 = vmatpush1.bf16.msra.mxu0 %v2179
      %2223 = vmatprep.subr.bf16.mxu0 0
      %2224 = vmatpush1.bf16.msra.mxu0 %v2178
      %2225 = vmatprep.subr.bf16.mxu0 0
      %2226 = vmatpush1.bf16.msra.mxu0 %v2177
      %2227 = vmatprep.subr.bf16.mxu0 0
      %2228 = vmatpush1.bf16.msra.mxu0 %v2176
      %2229 = vmatprep.subr.bf16.mxu0 0
      %2230 = vmatpush2.bf16.msra.mxu0 0
      %2231 = vmatprep.subr.bf16.mxu0 0
      %2232 = vmatpush2.bf16.msra.mxu0 0
      %2233 = vmatprep.subr.bf16.mxu0 0
      %2234 = vmatpush2.bf16.msra.mxu0 0
      %2235 = vmatprep.subr.bf16.mxu0 0
      %2236 = vmatpush2.bf16.msra.mxu0 0
      %2237 = vmatprep.subr.bf16.mxu0 0
      %2238 = vmatpush2.bf16.msra.mxu0 0
      %2239 = vmatprep.subr.bf16.mxu0 0
      %2240 = vmatpush2.bf16.msra.mxu0 0
      %2241 = vmatprep.subr.bf16.mxu0 0
      %2242 = vmatpush2.bf16.msra.mxu0 0
      %2243 = vmatprep.subr.bf16.mxu0 0
      %2244 = vmatpush2.bf16.msra.mxu0 0
      %2245 = vmatprep.mubr.bf16.mxu0 0
      %2246 = vmatmul.mubr.bf16.gmra.mxu0 %v2187
      %v2247 = vpop.f32.mrf.mxu0
      %v2248 = vadd.f32 0.0, %v2247
      %v2249 = vpop.f32.mrf.mxu0
      %v2250 = vpop.f32.mrf.mxu0
      %v2251 = vadd.f32 0.0, %v2250
      %v2252 = vpop.f32.mrf.mxu0
      %2253 = vmatprep.mubr.bf16.mxu0 0
      %2254 = vmatmul.mubr.bf16.gmra.mxu0 %v2190
      %v2255 = vpop.f32.mrf.mxu0
      %v2256 = vadd.f32 0.0, %v2255
      %v2257 = vpop.f32.mrf.mxu0
      %v2258 = vpop.f32.mrf.mxu0
      %v2259 = vadd.f32 0.0, %v2258
      %v2260 = vpop.f32.mrf.mxu0
      %2261 = vmatprep.mubr.bf16.mxu0 0
      %2262 = vmatmul.mubr.bf16.gmra.mxu0 %v2193
      %v2263 = vpop.f32.mrf.mxu0
      %v2264 = vadd.f32 0.0, %v2263
      %v2265 = vpop.f32.mrf.mxu0
      %v2266 = vpop.f32.mrf.mxu0
      %v2267 = vadd.f32 0.0, %v2266
      %v2268 = vpop.f32.mrf.mxu0
      %2269 = vmatprep.mubr.bf16.mxu0 0
      %2270 = vmatmul.mubr.bf16.gmra.mxu0 %v2196
      %v2271 = vpop.f32.mrf.mxu0
      %v2272 = vadd.f32 0.0, %v2271
      %v2273 = vpop.f32.mrf.mxu0
      %v2274 = vpop.f32.mrf.mxu0
      %v2275 = vadd.f32 0.0, %v2274
      %v2276 = vpop.f32.mrf.mxu0
      %2277 = vmatprep.mubr.bf16.mxu0 0
      %2278 = vmatmul.mubr.bf16.gmra.mxu0 %v2199
      %v2279 = vpop.f32.mrf.mxu0
      %v2280 = vadd.f32 0.0, %v2279
      %v2281 = vpop.f32.mrf.mxu0
      %v2282 = vpop.f32.mrf.mxu0
      %v2283 = vadd.f32 0.0, %v2282
      %v2284 = vpop.f32.mrf.mxu0
      %2285 = vmatprep.mubr.bf16.mxu0 0
      %2286 = vmatmul.mubr.bf16.gmra.mxu0 %v2202
      %v2287 = vpop.f32.mrf.mxu0
      %v2288 = vadd.f32 0.0, %v2287
      %v2289 = vpop.f32.mrf.mxu0
      %v2290 = vpop.f32.mrf.mxu0
      %v2291 = vadd.f32 0.0, %v2290
      %v2292 = vpop.f32.mrf.mxu0
      %2293 = vmatprep.mubr.bf16.mxu0 0
      %2294 = vmatmul.mubr.bf16.gmra.mxu0 %v2205
      %v2295 = vpop.f32.mrf.mxu0
      %v2296 = vadd.f32 0.0, %v2295
      %v2297 = vpop.f32.mrf.mxu0
      %v2298 = vpop.f32.mrf.mxu0
      %v2299 = vadd.f32 0.0, %v2298
      %v2300 = vpop.f32.mrf.mxu0
      %2301 = vmatprep.mubr.bf16.mxu0 0
      %2302 = vmatmul.mubr.bf16.gmra.mxu0 %v2208
      %v2303 = vpop.f32.mrf.mxu0
      %v2304 = vadd.f32 0.0, %v2303
      %v2305 = vpop.f32.mrf.mxu0
      %v2306 = vpop.f32.mrf.mxu0
      %v2307 = vadd.f32 0.0, %v2306
      %v2308 = vpop.f32.mrf.mxu0
      %2309 = vdwg.mxu0
      %s2310 = scalar_lea.vmem %s291, 12
      %v2311 = vld [vmem:[%s2310] sm:$0xf]
      %v2312 = vld [vmem:[%s2310 + $0x4] sm:$0xf]
      %v2313 = vld [vmem:[%s2310 + $0x8] sm:$0x1]
      %v2314 = vld [vmem:[%s2310 + $0xc] sm:$0xf]
      %v2315 = vld [vmem:[%s2310 + $0x10] sm:$0xf]
      %v2316 = vld [vmem:[%s2310 + $0x14] sm:$0x1]
      %v2317 = vld [vmem:[%s2310 + $0x18] sm:$0xf]
      %v2318 = vld [vmem:[%s2310 + $0x1c] sm:$0xf]
      %v2319 = vld [vmem:[%s2310 + $0x20] sm:$0x1]
      %v2320 = vld [vmem:[%s2310 + $0x24] sm:$0xf]
      %v2321 = vld [vmem:[%s2310 + $0x28] sm:$0xf]
      %v2322 = vld [vmem:[%s2310 + $0x2c] sm:$0x1]
      %v2323 = vld [vmem:[%s2310 + $0x30] sm:$0xf]
      %v2324 = vld [vmem:[%s2310 + $0x34] sm:$0xf]
      %v2325 = vld [vmem:[%s2310 + $0x38] sm:$0x1]
      %v2326 = vld [vmem:[%s2310 + $0x3c] sm:$0xf]
      %v2327 = vld [vmem:[%s2310 + $0x40] sm:$0xf]
      %v2328 = vld [vmem:[%s2310 + $0x44] sm:$0x1]
      %v2329 = vld [vmem:[%s2310 + $0x48] sm:$0xf]
      %v2330 = vld [vmem:[%s2310 + $0x4c] sm:$0xf]
      %v2331 = vld [vmem:[%s2310 + $0x50] sm:$0x1]
      %v2332 = vld [vmem:[%s2310 + $0x54] sm:$0xf]
      %v2333 = vld [vmem:[%s2310 + $0x58] sm:$0xf]
      %v2334 = vld [vmem:[%s2310 + $0x5c] sm:$0x1]
      %v2335 = vld [vmem:[%s2310] sm:$0xe]
      %v2336 = vld [vmem:[%s2310 + $0x8] sm:$0x3]
      %v2337 = vld [vmem:[%s2310 + $0xc] sm:$0xe]
      %v2338 = vld [vmem:[%s2310 + $0x14] sm:$0x3]
      %v2339 = vld [vmem:[%s2310 + $0x18] sm:$0xe]
      %v2340 = vld [vmem:[%s2310 + $0x20] sm:$0x3]
      %v2341 = vld [vmem:[%s2310 + $0x24] sm:$0xe]
      %v2342 = vld [vmem:[%s2310 + $0x2c] sm:$0x3]
      %v2343 = vld [vmem:[%s2310 + $0x30] sm:$0xe]
      %v2344 = vld [vmem:[%s2310 + $0x38] sm:$0x3]
      %v2345 = vld [vmem:[%s2310 + $0x3c] sm:$0xe]
      %v2346 = vld [vmem:[%s2310 + $0x44] sm:$0x3]
      %v2347 = vld [vmem:[%s2310 + $0x48] sm:$0xe]
      %v2348 = vld [vmem:[%s2310 + $0x50] sm:$0x3]
      %v2349 = vld [vmem:[%s2310 + $0x54] sm:$0xe]
      %v2350 = vld [vmem:[%s2310 + $0x5c] sm:$0x3]
      %v2351 = vld [vmem:[%s2310] sm:$0xc]
      %v2352 = vld [vmem:[%s2310 + $0x8] sm:$0x7]
      %v2353 = vld [vmem:[%s2310 + $0xc] sm:$0xc]
      %v2354 = vld [vmem:[%s2310 + $0x14] sm:$0x7]
      %v2355 = vld [vmem:[%s2310 + $0x18] sm:$0xc]
      %v2356 = vld [vmem:[%s2310 + $0x20] sm:$0x7]
      %v2357 = vld [vmem:[%s2310 + $0x24] sm:$0xc]
      %v2358 = vld [vmem:[%s2310 + $0x2c] sm:$0x7]
      %v2359 = vld [vmem:[%s2310 + $0x30] sm:$0xc]
      %v2360 = vld [vmem:[%s2310 + $0x38] sm:$0x7]
      %v2361 = vld [vmem:[%s2310 + $0x3c] sm:$0xc]
      %v2362 = vld [vmem:[%s2310 + $0x44] sm:$0x7]
      %v2363 = vld [vmem:[%s2310 + $0x48] sm:$0xc]
      %v2364 = vld [vmem:[%s2310 + $0x50] sm:$0x7]
      %v2365 = vld [vmem:[%s2310 + $0x54] sm:$0xc]
      %v2366 = vld [vmem:[%s2310 + $0x5c] sm:$0x7]
      %v2367 = vld [vmem:[%s311] sm:$0xf]
      %v2368 = vld [vmem:[%s311 + $0xc] sm:$0xf]
      %v2369 = vld [vmem:[%s311 + $0x18] sm:$0xf]
      %v2370 = vld [vmem:[%s311 + $0x24] sm:$0xf]
      %v2371 = vld [vmem:[%s311 + $0x30] sm:$0xf]
      %v2372 = vld [vmem:[%s311 + $0x3c] sm:$0xf]
      %v2373 = vld [vmem:[%s311 + $0x48] sm:$0xf]
      %v2374 = vld [vmem:[%s311 + $0x54] sm:$0xf]
      %v2375 = vld [vmem:[%s311 + $0x8] sm:$0x7]
      %v2376 = vld [vmem:[%s311 + $0x14] sm:$0x7]
      %v2377 = vld [vmem:[%s311 + $0x20] sm:$0x7]
      %v2378 = vld [vmem:[%s311 + $0x2c] sm:$0x7]
      %v2379 = vld [vmem:[%s311 + $0x38] sm:$0x7]
      %v2380 = vld [vmem:[%s311 + $0x44] sm:$0x7]
      %v2381 = vld [vmem:[%s311 + $0x50] sm:$0x7]
      %v2382 = vld [vmem:[%s311 + $0x5c] sm:$0x7]
      %s2383 = scalar_lea.vmem %s291, 60
      %v2384 = vld [vmem:[%s2383] sm:$0xf]
      %v2385 = vld [vmem:[%s2383 + $0x4] sm:$0xf]
      %v2386 = vld [vmem:[%s2383 + $0x8] sm:$0x1]
      %v2387 = vld [vmem:[%s2383 + $0xc] sm:$0xf]
      %v2388 = vld [vmem:[%s2383 + $0x10] sm:$0xf]
      %v2389 = vld [vmem:[%s2383 + $0x14] sm:$0x1]
      %v2390 = vld [vmem:[%s2383 + $0x18] sm:$0xf]
      %v2391 = vld [vmem:[%s2383 + $0x1c] sm:$0xf]
      %v2392 = vld [vmem:[%s2383 + $0x20] sm:$0x1]
      %v2393 = vld [vmem:[%s2383 + $0x24] sm:$0xf]
      %v2394 = vld [vmem:[%s2383 + $0x28] sm:$0xf]
      %v2395 = vld [vmem:[%s2383 + $0x2c] sm:$0x1]
      %v2396 = vld [vmem:[%s2383 + $0x30] sm:$0xf]
      %v2397 = vld [vmem:[%s2383 + $0x34] sm:$0xf]
      %v2398 = vld [vmem:[%s2383 + $0x38] sm:$0x1]
      %v2399 = vld [vmem:[%s2383 + $0x3c] sm:$0xf]
      %v2400 = vld [vmem:[%s2383 + $0x40] sm:$0xf]
      %v2401 = vld [vmem:[%s2383 + $0x44] sm:$0x1]
      %v2402 = vld [vmem:[%s2383 + $0x48] sm:$0xf]
      %v2403 = vld [vmem:[%s2383 + $0x4c] sm:$0xf]
      %v2404 = vld [vmem:[%s2383 + $0x50] sm:$0x1]
      %v2405 = vld [vmem:[%s2383 + $0x54] sm:$0xf]
      %v2406 = vld [vmem:[%s2383 + $0x58] sm:$0xf]
      %v2407 = vld [vmem:[%s2383 + $0x5c] sm:$0x1]
      %v2408 = vld [vmem:[%s2383] sm:$0xe]
      %v2409 = vld [vmem:[%s2383 + $0x8] sm:$0x3]
      %v2410 = vld [vmem:[%s2383 + $0xc] sm:$0xe]
      %v2411 = vld [vmem:[%s2383 + $0x14] sm:$0x3]
      %v2412 = vld [vmem:[%s2383 + $0x18] sm:$0xe]
      %v2413 = vld [vmem:[%s2383 + $0x20] sm:$0x3]
      %v2414 = vld [vmem:[%s2383 + $0x24] sm:$0xe]
      %v2415 = vld [vmem:[%s2383 + $0x2c] sm:$0x3]
      %v2416 = vld [vmem:[%s2383 + $0x30] sm:$0xe]
      %v2417 = vld [vmem:[%s2383 + $0x38] sm:$0x3]
      %v2418 = vld [vmem:[%s2383 + $0x3c] sm:$0xe]
      %v2419 = vld [vmem:[%s2383 + $0x44] sm:$0x3]
      %v2420 = vld [vmem:[%s2383 + $0x48] sm:$0xe]
      %v2421 = vld [vmem:[%s2383 + $0x50] sm:$0x3]
      %v2422 = vld [vmem:[%s2383 + $0x54] sm:$0xe]
      %v2423 = vld [vmem:[%s2383 + $0x5c] sm:$0x3]
      %v2424 = vld [vmem:[%s2383] sm:$0xc]
      %v2425 = vld [vmem:[%s2383 + $0x8] sm:$0x7]
      %v2426 = vld [vmem:[%s2383 + $0xc] sm:$0xc]
      %v2427 = vld [vmem:[%s2383 + $0x14] sm:$0x7]
      %v2428 = vld [vmem:[%s2383 + $0x18] sm:$0xc]
      %v2429 = vld [vmem:[%s2383 + $0x20] sm:$0x7]
      %v2430 = vld [vmem:[%s2383 + $0x24] sm:$0xc]
      %v2431 = vld [vmem:[%s2383 + $0x2c] sm:$0x7]
      %v2432 = vld [vmem:[%s2383 + $0x30] sm:$0xc]
      %v2433 = vld [vmem:[%s2383 + $0x38] sm:$0x7]
      %v2434 = vld [vmem:[%s2383 + $0x3c] sm:$0xc]
      %v2435 = vld [vmem:[%s2383 + $0x44] sm:$0x7]
      %v2436 = vld [vmem:[%s2383 + $0x48] sm:$0xc]
      %v2437 = vld [vmem:[%s2383 + $0x50] sm:$0x7]
      %v2438 = vld [vmem:[%s2383 + $0x54] sm:$0xc]
      %v2439 = vld [vmem:[%s2383 + $0x5c] sm:$0x7]
      %v2464 = vunpack.c.l.b16 %v2311
      %v2465 = vunpack.c.l.b16 %v2312
      %v2466 = vunpack.c.l.b16 %v2313
      %v2467 = vunpack.c.l.b16 %v2314
      %v2468 = vunpack.c.l.b16 %v2315
      %v2469 = vunpack.c.l.b16 %v2316
      %v2470 = vunpack.c.l.b16 %v2317
      %v2471 = vunpack.c.l.b16 %v2318
      %v2472 = vunpack.c.l.b16 %v2319
      %v2473 = vunpack.c.l.b16 %v2320
      %v2474 = vunpack.c.l.b16 %v2321
      %v2475 = vunpack.c.l.b16 %v2322
      %v2476 = vunpack.c.l.b16 %v2323
      %v2477 = vunpack.c.l.b16 %v2324
      %v2478 = vunpack.c.l.b16 %v2325
      %v2479 = vunpack.c.l.b16 %v2326
      %v2480 = vunpack.c.l.b16 %v2327
      %v2481 = vunpack.c.l.b16 %v2328
      %v2482 = vunpack.c.l.b16 %v2329
      %v2483 = vunpack.c.l.b16 %v2330
      %v2484 = vunpack.c.l.b16 %v2331
      %v2485 = vunpack.c.l.b16 %v2332
      %v2486 = vunpack.c.l.b16 %v2333
      %v2487 = vunpack.c.l.b16 %v2334
      %v2488 = vpack.c.b16 %v2465, %v2464
      %v2489 = vpack.c.b16 %v2466, %v2466
      %v2490 = vpack.c.b16 %v2468, %v2467
      %v2491 = vpack.c.b16 %v2469, %v2469
      %v2492 = vpack.c.b16 %v2471, %v2470
      %v2493 = vpack.c.b16 %v2472, %v2472
      %v2494 = vpack.c.b16 %v2474, %v2473
      %v2495 = vpack.c.b16 %v2475, %v2475
      %v2496 = vpack.c.b16 %v2477, %v2476
      %v2497 = vpack.c.b16 %v2478, %v2478
      %v2498 = vpack.c.b16 %v2480, %v2479
      %v2499 = vpack.c.b16 %v2481, %v2481
      %v2500 = vpack.c.b16 %v2483, %v2482
      %v2501 = vpack.c.b16 %v2484, %v2484
      %v2502 = vpack.c.b16 %v2486, %v2485
      %v2503 = vpack.c.b16 %v2487, %v2487
      %v2520 = vunpack.c.l.b16 %v2335
      %v2521 = vunpack.c.l.b16 %v2336
      %v2522 = vunpack.c.l.b16 %v2337
      %v2523 = vunpack.c.l.b16 %v2338
      %v2524 = vunpack.c.l.b16 %v2339
      %v2525 = vunpack.c.l.b16 %v2340
      %v2526 = vunpack.c.l.b16 %v2341
      %v2527 = vunpack.c.l.b16 %v2342
      %v2528 = vunpack.c.l.b16 %v2343
      %v2529 = vunpack.c.l.b16 %v2344
      %v2530 = vunpack.c.l.b16 %v2345
      %v2531 = vunpack.c.l.b16 %v2346
      %v2532 = vunpack.c.l.b16 %v2347
      %v2533 = vunpack.c.l.b16 %v2348
      %v2534 = vunpack.c.l.b16 %v2349
      %v2535 = vunpack.c.l.b16 %v2350
      %v2536 = vpack.c.b16 %v2465, %v2520
      %v2537 = vpack.c.b16 %v2521, %v2521
      %v2538 = vpack.c.b16 %v2468, %v2522
      %v2539 = vpack.c.b16 %v2523, %v2523
      %v2540 = vpack.c.b16 %v2471, %v2524
      %v2541 = vpack.c.b16 %v2525, %v2525
      %v2542 = vpack.c.b16 %v2474, %v2526
      %v2543 = vpack.c.b16 %v2527, %v2527
      %v2544 = vpack.c.b16 %v2477, %v2528
      %v2545 = vpack.c.b16 %v2529, %v2529
      %v2546 = vpack.c.b16 %v2480, %v2530
      %v2547 = vpack.c.b16 %v2531, %v2531
      %v2548 = vpack.c.b16 %v2483, %v2532
      %v2549 = vpack.c.b16 %v2533, %v2533
      %v2550 = vpack.c.b16 %v2486, %v2534
      %v2551 = vpack.c.b16 %v2535, %v2535
      %v2552 = vrot.slane %v2536, 1
      %v2553 = vrot.slane %v2537, 1
      %v2554 = vsel %vm1077, %v2552, %v2553
      %v2555 = vrot.slane %v2538, 1
      %v2556 = vrot.slane %v2539, 1
      %v2557 = vsel %vm1077, %v2555, %v2556
      %v2558 = vrot.slane %v2540, 1
      %v2559 = vrot.slane %v2541, 1
      %v2560 = vsel %vm1077, %v2558, %v2559
      %v2561 = vrot.slane %v2542, 1
      %v2562 = vrot.slane %v2543, 1
      %v2563 = vsel %vm1077, %v2561, %v2562
      %v2564 = vrot.slane %v2544, 1
      %v2565 = vrot.slane %v2545, 1
      %v2566 = vsel %vm1077, %v2564, %v2565
      %v2567 = vrot.slane %v2546, 1
      %v2568 = vrot.slane %v2547, 1
      %v2569 = vsel %vm1077, %v2567, %v2568
      %v2570 = vrot.slane %v2548, 1
      %v2571 = vrot.slane %v2549, 1
      %v2572 = vsel %vm1077, %v2570, %v2571
      %v2573 = vrot.slane %v2550, 1
      %v2574 = vrot.slane %v2551, 1
      %v2575 = vsel %vm1077, %v2573, %v2574
      %2576 = vrot.lane.b32.xlu0 %v2554, 8
      %v2577 = vpop.permute.xlu0 %2576
      %2578 = vrot.lane.b32.xlu0 %v2553, 8
      %v2579 = vpop.permute.xlu0 %2578
      %2580 = vrot.lane.b32.xlu0 %v2557, 8
      %v2581 = vpop.permute.xlu0 %2580
      %2582 = vrot.lane.b32.xlu0 %v2556, 8
      %v2583 = vpop.permute.xlu0 %2582
      %2584 = vrot.lane.b32.xlu0 %v2560, 8
      %v2585 = vpop.permute.xlu0 %2584
      %2586 = vrot.lane.b32.xlu0 %v2559, 8
      %v2587 = vpop.permute.xlu0 %2586
      %2588 = vrot.lane.b32.xlu0 %v2563, 8
      %v2589 = vpop.permute.xlu0 %2588
      %2590 = vrot.lane.b32.xlu0 %v2562, 8
      %v2591 = vpop.permute.xlu0 %2590
      %2592 = vrot.lane.b32.xlu0 %v2566, 8
      %v2593 = vpop.permute.xlu0 %2592
      %2594 = vrot.lane.b32.xlu0 %v2565, 8
      %v2595 = vpop.permute.xlu0 %2594
      %2596 = vrot.lane.b32.xlu0 %v2569, 8
      %v2597 = vpop.permute.xlu0 %2596
      %2598 = vrot.lane.b32.xlu0 %v2568, 8
      %v2599 = vpop.permute.xlu0 %2598
      %2600 = vrot.lane.b32.xlu0 %v2572, 8
      %v2601 = vpop.permute.xlu0 %2600
      %2602 = vrot.lane.b32.xlu0 %v2571, 8
      %v2603 = vpop.permute.xlu0 %2602
      %2604 = vrot.lane.b32.xlu0 %v2575, 8
      %v2605 = vpop.permute.xlu0 %2604
      %2606 = vrot.lane.b32.xlu0 %v2574, 8
      %v2607 = vpop.permute.xlu0 %2606
      %v2624 = vunpack.c.l.b16 %v2351
      %v2625 = vunpack.c.l.b16 %v2352
      %v2626 = vunpack.c.l.b16 %v2353
      %v2627 = vunpack.c.l.b16 %v2354
      %v2628 = vunpack.c.l.b16 %v2355
      %v2629 = vunpack.c.l.b16 %v2356
      %v2630 = vunpack.c.l.b16 %v2357
      %v2631 = vunpack.c.l.b16 %v2358
      %v2632 = vunpack.c.l.b16 %v2359
      %v2633 = vunpack.c.l.b16 %v2360
      %v2634 = vunpack.c.l.b16 %v2361
      %v2635 = vunpack.c.l.b16 %v2362
      %v2636 = vunpack.c.l.b16 %v2363
      %v2637 = vunpack.c.l.b16 %v2364
      %v2638 = vunpack.c.l.b16 %v2365
      %v2639 = vunpack.c.l.b16 %v2366
      %v2640 = vpack.c.b16 %v2465, %v2624
      %v2641 = vpack.c.b16 %v2625, %v2625
      %v2642 = vpack.c.b16 %v2468, %v2626
      %v2643 = vpack.c.b16 %v2627, %v2627
      %v2644 = vpack.c.b16 %v2471, %v2628
      %v2645 = vpack.c.b16 %v2629, %v2629
      %v2646 = vpack.c.b16 %v2474, %v2630
      %v2647 = vpack.c.b16 %v2631, %v2631
      %v2648 = vpack.c.b16 %v2477, %v2632
      %v2649 = vpack.c.b16 %v2633, %v2633
      %v2650 = vpack.c.b16 %v2480, %v2634
      %v2651 = vpack.c.b16 %v2635, %v2635
      %v2652 = vpack.c.b16 %v2483, %v2636
      %v2653 = vpack.c.b16 %v2637, %v2637
      %v2654 = vpack.c.b16 %v2486, %v2638
      %v2655 = vpack.c.b16 %v2639, %v2639
      %vm2656 = vcmask 1045504
      %v2657 = vrot.slane %v2640, 2
      %v2658 = vrot.slane %v2641, 2
      %v2659 = vsel %vm2656, %v2657, %v2658
      %v2660 = vrot.slane %v2642, 2
      %v2661 = vrot.slane %v2643, 2
      %v2662 = vsel %vm2656, %v2660, %v2661
      %v2663 = vrot.slane %v2644, 2
      %v2664 = vrot.slane %v2645, 2
      %v2665 = vsel %vm2656, %v2663, %v2664
      %v2666 = vrot.slane %v2646, 2
      %v2667 = vrot.slane %v2647, 2
      %v2668 = vsel %vm2656, %v2666, %v2667
      %v2669 = vrot.slane %v2648, 2
      %v2670 = vrot.slane %v2649, 2
      %v2671 = vsel %vm2656, %v2669, %v2670
      %v2672 = vrot.slane %v2650, 2
      %v2673 = vrot.slane %v2651, 2
      %v2674 = vsel %vm2656, %v2672, %v2673
      %v2675 = vrot.slane %v2652, 2
      %v2676 = vrot.slane %v2653, 2
      %v2677 = vsel %vm2656, %v2675, %v2676
      %v2678 = vrot.slane %v2654, 2
      %v2679 = vrot.slane %v2655, 2
      %v2680 = vsel %vm2656, %v2678, %v2679
      %2681 = vrot.lane.b32.xlu0 %v2659, 16
      %v2682 = vpop.permute.xlu0 %2681
      %2683 = vrot.lane.b32.xlu0 %v2658, 16
      %v2684 = vpop.permute.xlu0 %2683
      %2685 = vrot.lane.b32.xlu0 %v2662, 16
      %v2686 = vpop.permute.xlu0 %2685
      %2687 = vrot.lane.b32.xlu0 %v2661, 16
      %v2688 = vpop.permute.xlu0 %2687
      %2689 = vrot.lane.b32.xlu0 %v2665, 16
      %v2690 = vpop.permute.xlu0 %2689
      %2691 = vrot.lane.b32.xlu0 %v2664, 16
      %v2692 = vpop.permute.xlu0 %2691
      %2693 = vrot.lane.b32.xlu0 %v2668, 16
      %v2694 = vpop.permute.xlu0 %2693
      %2695 = vrot.lane.b32.xlu0 %v2667, 16
      %v2696 = vpop.permute.xlu0 %2695
      %2697 = vrot.lane.b32.xlu0 %v2671, 16
      %v2698 = vpop.permute.xlu0 %2697
      %2699 = vrot.lane.b32.xlu0 %v2670, 16
      %v2700 = vpop.permute.xlu0 %2699
      %2701 = vrot.lane.b32.xlu0 %v2674, 16
      %v2702 = vpop.permute.xlu0 %2701
      %2703 = vrot.lane.b32.xlu0 %v2673, 16
      %v2704 = vpop.permute.xlu0 %2703
      %2705 = vrot.lane.b32.xlu0 %v2677, 16
      %v2706 = vpop.permute.xlu0 %2705
      %2707 = vrot.lane.b32.xlu0 %v2676, 16
      %v2708 = vpop.permute.xlu0 %2707
      %2709 = vrot.lane.b32.xlu0 %v2680, 16
      %v2710 = vpop.permute.xlu0 %2709
      %2711 = vrot.lane.b32.xlu0 %v2679, 16
      %v2712 = vpop.permute.xlu0 %2711
      %v2721 = vunpack.c.l.b16 %v2367
      %v2722 = vunpack.c.l.b16 %v2368
      %v2723 = vunpack.c.l.b16 %v2369
      %v2724 = vunpack.c.l.b16 %v2370
      %v2725 = vunpack.c.l.b16 %v2371
      %v2726 = vunpack.c.l.b16 %v2372
      %v2727 = vunpack.c.l.b16 %v2373
      %v2728 = vunpack.c.l.b16 %v2374
      %v2729 = vpack.c.b16 %v1159, %v2721
      %v2730 = vpack.c.b16 %v1162, %v2722
      %v2731 = vpack.c.b16 %v1165, %v2723
      %v2732 = vpack.c.b16 %v1168, %v2724
      %v2733 = vpack.c.b16 %v1171, %v2725
      %v2734 = vpack.c.b16 %v1174, %v2726
      %v2735 = vpack.c.b16 %v1177, %v2727
      %v2736 = vpack.c.b16 %v1180, %v2728
      %2737 = vrot.lane.b32.xlu0 %v2729, 24
      %v2738 = vpop.permute.xlu0 %2737
      %2739 = vrot.lane.b32.xlu0 %v2730, 24
      %v2740 = vpop.permute.xlu0 %2739
      %2741 = vrot.lane.b32.xlu0 %v2731, 24
      %v2742 = vpop.permute.xlu0 %2741
      %2743 = vrot.lane.b32.xlu0 %v2732, 24
      %v2744 = vpop.permute.xlu0 %2743
      %2745 = vrot.lane.b32.xlu0 %v2733, 24
      %v2746 = vpop.permute.xlu0 %2745
      %2747 = vrot.lane.b32.xlu0 %v2734, 24
      %v2748 = vpop.permute.xlu0 %2747
      %2749 = vrot.lane.b32.xlu0 %v2735, 24
      %v2750 = vpop.permute.xlu0 %2749
      %2751 = vrot.lane.b32.xlu0 %v2736, 24
      %v2752 = vpop.permute.xlu0 %2751
      %v2753 = vrot.slane %v1182, 1
      %v2754 = vsel %vm1077, %v2753, %v1431
      %v2755 = vrot.slane %v1184, 1
      %v2756 = vsel %vm1077, %v2755, %v1434
      %v2757 = vrot.slane %v1186, 1
      %v2758 = vsel %vm1077, %v2757, %v1437
      %v2759 = vrot.slane %v1188, 1
      %v2760 = vsel %vm1077, %v2759, %v1440
      %v2761 = vrot.slane %v1190, 1
      %v2762 = vsel %vm1077, %v2761, %v1443
      %v2763 = vrot.slane %v1192, 1
      %v2764 = vsel %vm1077, %v2763, %v1446
      %v2765 = vrot.slane %v1194, 1
      %v2766 = vsel %vm1077, %v2765, %v1449
      %v2767 = vrot.slane %v1196, 1
      %v2768 = vsel %vm1077, %v2767, %v1452
      %2769 = vrot.lane.b32.xlu0 %v2754, 32
      %v2770 = vpop.permute.xlu0 %2769
      %2771 = vrot.lane.b32.xlu0 %v1431, 32
      %v2772 = vpop.permute.xlu0 %2771
      %2773 = vrot.lane.b32.xlu0 %v2756, 32
      %v2774 = vpop.permute.xlu0 %2773
      %2775 = vrot.lane.b32.xlu0 %v1434, 32
      %v2776 = vpop.permute.xlu0 %2775
      %2777 = vrot.lane.b32.xlu0 %v2758, 32
      %v2778 = vpop.permute.xlu0 %2777
      %2779 = vrot.lane.b32.xlu0 %v1437, 32
      %v2780 = vpop.permute.xlu0 %2779
      %2781 = vrot.lane.b32.xlu0 %v2760, 32
      %v2782 = vpop.permute.xlu0 %2781
      %2783 = vrot.lane.b32.xlu0 %v1440, 32
      %v2784 = vpop.permute.xlu0 %2783
      %2785 = vrot.lane.b32.xlu0 %v2762, 32
      %v2786 = vpop.permute.xlu0 %2785
      %2787 = vrot.lane.b32.xlu0 %v1443, 32
      %v2788 = vpop.permute.xlu0 %2787
      %2789 = vrot.lane.b32.xlu0 %v2764, 32
      %v2790 = vpop.permute.xlu0 %2789
      %2791 = vrot.lane.b32.xlu0 %v1446, 32
      %v2792 = vpop.permute.xlu0 %2791
      %2793 = vrot.lane.b32.xlu0 %v2766, 32
      %v2794 = vpop.permute.xlu0 %2793
      %2795 = vrot.lane.b32.xlu0 %v1449, 32
      %v2796 = vpop.permute.xlu0 %2795
      %2797 = vrot.lane.b32.xlu0 %v2768, 32
      %v2798 = vpop.permute.xlu0 %2797
      %2799 = vrot.lane.b32.xlu0 %v1452, 32
      %v2800 = vpop.permute.xlu0 %2799
      %v2809 = vunpack.c.l.b16 %v2375
      %v2810 = vunpack.c.l.b16 %v2376
      %v2811 = vunpack.c.l.b16 %v2377
      %v2812 = vunpack.c.l.b16 %v2378
      %v2813 = vunpack.c.l.b16 %v2379
      %v2814 = vunpack.c.l.b16 %v2380
      %v2815 = vunpack.c.l.b16 %v2381
      %v2816 = vunpack.c.l.b16 %v2382
      %v2817 = vpack.c.b16 %v2809, %v2809
      %v2818 = vpack.c.b16 %v2810, %v2810
      %v2819 = vpack.c.b16 %v2811, %v2811
      %v2820 = vpack.c.b16 %v2812, %v2812
      %v2821 = vpack.c.b16 %v2813, %v2813
      %v2822 = vpack.c.b16 %v2814, %v2814
      %v2823 = vpack.c.b16 %v2815, %v2815
      %v2824 = vpack.c.b16 %v2816, %v2816
      %v2825 = vrot.slane %v1422, 2
      %v2826 = vrot.slane %v2817, 2
      %v2827 = vsel %vm2656, %v2825, %v2826
      %v2828 = vrot.slane %v1423, 2
      %v2829 = vrot.slane %v2818, 2
      %v2830 = vsel %vm2656, %v2828, %v2829
      %v2831 = vrot.slane %v1424, 2
      %v2832 = vrot.slane %v2819, 2
      %v2833 = vsel %vm2656, %v2831, %v2832
      %v2834 = vrot.slane %v1425, 2
      %v2835 = vrot.slane %v2820, 2
      %v2836 = vsel %vm2656, %v2834, %v2835
      %v2837 = vrot.slane %v1426, 2
      %v2838 = vrot.slane %v2821, 2
      %v2839 = vsel %vm2656, %v2837, %v2838
      %v2840 = vrot.slane %v1427, 2
      %v2841 = vrot.slane %v2822, 2
      %v2842 = vsel %vm2656, %v2840, %v2841
      %v2843 = vrot.slane %v1428, 2
      %v2844 = vrot.slane %v2823, 2
      %v2845 = vsel %vm2656, %v2843, %v2844
      %v2846 = vrot.slane %v1429, 2
      %v2847 = vrot.slane %v2824, 2
      %v2848 = vsel %vm2656, %v2846, %v2847
      %2849 = vrot.lane.b32.xlu0 %v2827, 40
      %v2850 = vpop.permute.xlu0 %2849
      %2851 = vrot.lane.b32.xlu0 %v2826, 40
      %v2852 = vpop.permute.xlu0 %2851
      %2853 = vrot.lane.b32.xlu0 %v2830, 40
      %v2854 = vpop.permute.xlu0 %2853
      %2855 = vrot.lane.b32.xlu0 %v2829, 40
      %v2856 = vpop.permute.xlu0 %2855
      %2857 = vrot.lane.b32.xlu0 %v2833, 40
      %v2858 = vpop.permute.xlu0 %2857
      %2859 = vrot.lane.b32.xlu0 %v2832, 40
      %v2860 = vpop.permute.xlu0 %2859
      %2861 = vrot.lane.b32.xlu0 %v2836, 40
      %v2862 = vpop.permute.xlu0 %2861
      %2863 = vrot.lane.b32.xlu0 %v2835, 40
      %v2864 = vpop.permute.xlu0 %2863
      %2865 = vrot.lane.b32.xlu0 %v2839, 40
      %v2866 = vpop.permute.xlu0 %2865
      %2867 = vrot.lane.b32.xlu0 %v2838, 40
      %v2868 = vpop.permute.xlu0 %2867
      %2869 = vrot.lane.b32.xlu0 %v2842, 40
      %v2870 = vpop.permute.xlu0 %2869
      %2871 = vrot.lane.b32.xlu0 %v2841, 40
      %v2872 = vpop.permute.xlu0 %2871
      %2873 = vrot.lane.b32.xlu0 %v2845, 40
      %v2874 = vpop.permute.xlu0 %2873
      %2875 = vrot.lane.b32.xlu0 %v2844, 40
      %v2876 = vpop.permute.xlu0 %2875
      %2877 = vrot.lane.b32.xlu0 %v2848, 40
      %v2878 = vpop.permute.xlu0 %2877
      %2879 = vrot.lane.b32.xlu0 %v2847, 40
      %v2880 = vpop.permute.xlu0 %2879
      %v2905 = vunpack.c.l.b16 %v2384
      %v2906 = vunpack.c.l.b16 %v2385
      %v2907 = vunpack.c.l.b16 %v2386
      %v2908 = vunpack.c.l.b16 %v2387
      %v2909 = vunpack.c.l.b16 %v2388
      %v2910 = vunpack.c.l.b16 %v2389
      %v2911 = vunpack.c.l.b16 %v2390
      %v2912 = vunpack.c.l.b16 %v2391
      %v2913 = vunpack.c.l.b16 %v2392
      %v2914 = vunpack.c.l.b16 %v2393
      %v2915 = vunpack.c.l.b16 %v2394
      %v2916 = vunpack.c.l.b16 %v2395
      %v2917 = vunpack.c.l.b16 %v2396
      %v2918 = vunpack.c.l.b16 %v2397
      %v2919 = vunpack.c.l.b16 %v2398
      %v2920 = vunpack.c.l.b16 %v2399
      %v2921 = vunpack.c.l.b16 %v2400
      %v2922 = vunpack.c.l.b16 %v2401
      %v2923 = vunpack.c.l.b16 %v2402
      %v2924 = vunpack.c.l.b16 %v2403
      %v2925 = vunpack.c.l.b16 %v2404
      %v2926 = vunpack.c.l.b16 %v2405
      %v2927 = vunpack.c.l.b16 %v2406
      %v2928 = vunpack.c.l.b16 %v2407
      %v2929 = vpack.c.b16 %v2906, %v2905
      %v2930 = vpack.c.b16 %v2907, %v2907
      %v2931 = vpack.c.b16 %v2909, %v2908
      %v2932 = vpack.c.b16 %v2910, %v2910
      %v2933 = vpack.c.b16 %v2912, %v2911
      %v2934 = vpack.c.b16 %v2913, %v2913
      %v2935 = vpack.c.b16 %v2915, %v2914
      %v2936 = vpack.c.b16 %v2916, %v2916
      %v2937 = vpack.c.b16 %v2918, %v2917
      %v2938 = vpack.c.b16 %v2919, %v2919
      %v2939 = vpack.c.b16 %v2921, %v2920
      %v2940 = vpack.c.b16 %v2922, %v2922
      %v2941 = vpack.c.b16 %v2924, %v2923
      %v2942 = vpack.c.b16 %v2925, %v2925
      %v2943 = vpack.c.b16 %v2927, %v2926
      %v2944 = vpack.c.b16 %v2928, %v2928
      %2945 = vrot.lane.b32.xlu0 %v2929, 48
      %v2946 = vpop.permute.xlu0 %2945
      %2947 = vrot.lane.b32.xlu0 %v2930, 48
      %v2948 = vpop.permute.xlu0 %2947
      %2949 = vrot.lane.b32.xlu0 %v2931, 48
      %v2950 = vpop.permute.xlu0 %2949
      %2951 = vrot.lane.b32.xlu0 %v2932, 48
      %v2952 = vpop.permute.xlu0 %2951
      %2953 = vrot.lane.b32.xlu0 %v2933, 48
      %v2954 = vpop.permute.xlu0 %2953
      %2955 = vrot.lane.b32.xlu0 %v2934, 48
      %v2956 = vpop.permute.xlu0 %2955
      %2957 = vrot.lane.b32.xlu0 %v2935, 48
      %v2958 = vpop.permute.xlu0 %2957
      %2959 = vrot.lane.b32.xlu0 %v2936, 48
      %v2960 = vpop.permute.xlu0 %2959
      %2961 = vrot.lane.b32.xlu0 %v2937, 48
      %v2962 = vpop.permute.xlu0 %2961
      %2963 = vrot.lane.b32.xlu0 %v2938, 48
      %v2964 = vpop.permute.xlu0 %2963
      %2965 = vrot.lane.b32.xlu0 %v2939, 48
      %v2966 = vpop.permute.xlu0 %2965
      %2967 = vrot.lane.b32.xlu0 %v2940, 48
      %v2968 = vpop.permute.xlu0 %2967
      %2969 = vrot.lane.b32.xlu0 %v2941, 48
      %v2970 = vpop.permute.xlu0 %2969
      %2971 = vrot.lane.b32.xlu0 %v2942, 48
      %v2972 = vpop.permute.xlu0 %2971
      %2973 = vrot.lane.b32.xlu0 %v2943, 48
      %v2974 = vpop.permute.xlu0 %2973
      %2975 = vrot.lane.b32.xlu0 %v2944, 48
      %v2976 = vpop.permute.xlu0 %2975
      %v2993 = vunpack.c.l.b16 %v2408
      %v2994 = vunpack.c.l.b16 %v2409
      %v2995 = vunpack.c.l.b16 %v2410
      %v2996 = vunpack.c.l.b16 %v2411
      %v2997 = vunpack.c.l.b16 %v2412
      %v2998 = vunpack.c.l.b16 %v2413
      %v2999 = vunpack.c.l.b16 %v2414
      %v3000 = vunpack.c.l.b16 %v2415
      %v3001 = vunpack.c.l.b16 %v2416
      %v3002 = vunpack.c.l.b16 %v2417
      %v3003 = vunpack.c.l.b16 %v2418
      %v3004 = vunpack.c.l.b16 %v2419
      %v3005 = vunpack.c.l.b16 %v2420
      %v3006 = vunpack.c.l.b16 %v2421
      %v3007 = vunpack.c.l.b16 %v2422
      %v3008 = vunpack.c.l.b16 %v2423
      %v3009 = vpack.c.b16 %v2906, %v2993
      %v3010 = vpack.c.b16 %v2994, %v2994
      %v3011 = vpack.c.b16 %v2909, %v2995
      %v3012 = vpack.c.b16 %v2996, %v2996
      %v3013 = vpack.c.b16 %v2912, %v2997
      %v3014 = vpack.c.b16 %v2998, %v2998
      %v3015 = vpack.c.b16 %v2915, %v2999
      %v3016 = vpack.c.b16 %v3000, %v3000
      %v3017 = vpack.c.b16 %v2918, %v3001
      %v3018 = vpack.c.b16 %v3002, %v3002
      %v3019 = vpack.c.b16 %v2921, %v3003
      %v3020 = vpack.c.b16 %v3004, %v3004
      %v3021 = vpack.c.b16 %v2924, %v3005
      %v3022 = vpack.c.b16 %v3006, %v3006
      %v3023 = vpack.c.b16 %v2927, %v3007
      %v3024 = vpack.c.b16 %v3008, %v3008
      %v3025 = vrot.slane %v3009, 1
      %v3026 = vrot.slane %v3010, 1
      %v3027 = vsel %vm1077, %v3025, %v3026
      %v3028 = vrot.slane %v3011, 1
      %v3029 = vrot.slane %v3012, 1
      %v3030 = vsel %vm1077, %v3028, %v3029
      %v3031 = vrot.slane %v3013, 1
      %v3032 = vrot.slane %v3014, 1
      %v3033 = vsel %vm1077, %v3031, %v3032
      %v3034 = vrot.slane %v3015, 1
      %v3035 = vrot.slane %v3016, 1
      %v3036 = vsel %vm1077, %v3034, %v3035
      %v3037 = vrot.slane %v3017, 1
      %v3038 = vrot.slane %v3018, 1
      %v3039 = vsel %vm1077, %v3037, %v3038
      %v3040 = vrot.slane %v3019, 1
      %v3041 = vrot.slane %v3020, 1
      %v3042 = vsel %vm1077, %v3040, %v3041
      %v3043 = vrot.slane %v3021, 1
      %v3044 = vrot.slane %v3022, 1
      %v3045 = vsel %vm1077, %v3043, %v3044
      %v3046 = vrot.slane %v3023, 1
      %v3047 = vrot.slane %v3024, 1
      %v3048 = vsel %vm1077, %v3046, %v3047
      %3049 = vrot.lane.b32.xlu0 %v3027, 56
      %v3050 = vpop.permute.xlu0 %3049
      %3051 = vrot.lane.b32.xlu0 %v3026, 56
      %v3052 = vpop.permute.xlu0 %3051
      %3053 = vrot.lane.b32.xlu0 %v3030, 56
      %v3054 = vpop.permute.xlu0 %3053
      %3055 = vrot.lane.b32.xlu0 %v3029, 56
      %v3056 = vpop.permute.xlu0 %3055
      %3057 = vrot.lane.b32.xlu0 %v3033, 56
      %v3058 = vpop.permute.xlu0 %3057
      %3059 = vrot.lane.b32.xlu0 %v3032, 56
      %v3060 = vpop.permute.xlu0 %3059
      %3061 = vrot.lane.b32.xlu0 %v3036, 56
      %v3062 = vpop.permute.xlu0 %3061
      %3063 = vrot.lane.b32.xlu0 %v3035, 56
      %v3064 = vpop.permute.xlu0 %3063
      %3065 = vrot.lane.b32.xlu0 %v3039, 56
      %v3066 = vpop.permute.xlu0 %3065
      %3067 = vrot.lane.b32.xlu0 %v3038, 56
      %v3068 = vpop.permute.xlu0 %3067
      %3069 = vrot.lane.b32.xlu0 %v3042, 56
      %v3070 = vpop.permute.xlu0 %3069
      %3071 = vrot.lane.b32.xlu0 %v3041, 56
      %v3072 = vpop.permute.xlu0 %3071
      %3073 = vrot.lane.b32.xlu0 %v3045, 56
      %v3074 = vpop.permute.xlu0 %3073
      %3075 = vrot.lane.b32.xlu0 %v3044, 56
      %v3076 = vpop.permute.xlu0 %3075
      %3077 = vrot.lane.b32.xlu0 %v3048, 56
      %v3078 = vpop.permute.xlu0 %3077
      %3079 = vrot.lane.b32.xlu0 %v3047, 56
      %v3080 = vpop.permute.xlu0 %3079
      %v3097 = vunpack.c.l.b16 %v2424
      %v3098 = vunpack.c.l.b16 %v2425
      %v3099 = vunpack.c.l.b16 %v2426
      %v3100 = vunpack.c.l.b16 %v2427
      %v3101 = vunpack.c.l.b16 %v2428
      %v3102 = vunpack.c.l.b16 %v2429
      %v3103 = vunpack.c.l.b16 %v2430
      %v3104 = vunpack.c.l.b16 %v2431
      %v3105 = vunpack.c.l.b16 %v2432
      %v3106 = vunpack.c.l.b16 %v2433
      %v3107 = vunpack.c.l.b16 %v2434
      %v3108 = vunpack.c.l.b16 %v2435
      %v3109 = vunpack.c.l.b16 %v2436
      %v3110 = vunpack.c.l.b16 %v2437
      %v3111 = vunpack.c.l.b16 %v2438
      %v3112 = vunpack.c.l.b16 %v2439
      %v3113 = vpack.c.b16 %v2906, %v3097
      %v3114 = vpack.c.b16 %v3098, %v3098
      %v3115 = vpack.c.b16 %v2909, %v3099
      %v3116 = vpack.c.b16 %v3100, %v3100
      %v3117 = vpack.c.b16 %v2912, %v3101
      %v3118 = vpack.c.b16 %v3102, %v3102
      %v3119 = vpack.c.b16 %v2915, %v3103
      %v3120 = vpack.c.b16 %v3104, %v3104
      %v3121 = vpack.c.b16 %v2918, %v3105
      %v3122 = vpack.c.b16 %v3106, %v3106
      %v3123 = vpack.c.b16 %v2921, %v3107
      %v3124 = vpack.c.b16 %v3108, %v3108
      %v3125 = vpack.c.b16 %v2924, %v3109
      %v3126 = vpack.c.b16 %v3110, %v3110
      %v3127 = vpack.c.b16 %v2927, %v3111
      %v3128 = vpack.c.b16 %v3112, %v3112
      %v3129 = vrot.slane %v3113, 2
      %v3130 = vrot.slane %v3114, 2
      %v3131 = vsel %vm2656, %v3129, %v3130
      %v3132 = vrot.slane %v3115, 2
      %v3133 = vrot.slane %v3116, 2
      %v3134 = vsel %vm2656, %v3132, %v3133
      %v3135 = vrot.slane %v3117, 2
      %v3136 = vrot.slane %v3118, 2
      %v3137 = vsel %vm2656, %v3135, %v3136
      %v3138 = vrot.slane %v3119, 2
      %v3139 = vrot.slane %v3120, 2
      %v3140 = vsel %vm2656, %v3138, %v3139
      %v3141 = vrot.slane %v3121, 2
      %v3142 = vrot.slane %v3122, 2
      %v3143 = vsel %vm2656, %v3141, %v3142
      %v3144 = vrot.slane %v3123, 2
      %v3145 = vrot.slane %v3124, 2
      %v3146 = vsel %vm2656, %v3144, %v3145
      %v3147 = vrot.slane %v3125, 2
      %v3148 = vrot.slane %v3126, 2
      %v3149 = vsel %vm2656, %v3147, %v3148
      %v3150 = vrot.slane %v3127, 2
      %v3151 = vrot.slane %v3128, 2
      %v3152 = vsel %vm2656, %v3150, %v3151
      %3153 = vrot.lane.b32.xlu0 %v3131, 64
      %v3154 = vpop.permute.xlu0 %3153
      %3155 = vrot.lane.b32.xlu0 %v3130, 64
      %v3156 = vpop.permute.xlu0 %3155
      %3157 = vrot.lane.b32.xlu0 %v3134, 64
      %v3158 = vpop.permute.xlu0 %3157
      %3159 = vrot.lane.b32.xlu0 %v3133, 64
      %v3160 = vpop.permute.xlu0 %3159
      %3161 = vrot.lane.b32.xlu0 %v3137, 64
      %v3162 = vpop.permute.xlu0 %3161
      %3163 = vrot.lane.b32.xlu0 %v3136, 64
      %v3164 = vpop.permute.xlu0 %3163
      %3165 = vrot.lane.b32.xlu0 %v3140, 64
      %v3166 = vpop.permute.xlu0 %3165
      %3167 = vrot.lane.b32.xlu0 %v3139, 64
      %v3168 = vpop.permute.xlu0 %3167
      %3169 = vrot.lane.b32.xlu0 %v3143, 64
      %v3170 = vpop.permute.xlu0 %3169
      %3171 = vrot.lane.b32.xlu0 %v3142, 64
      %v3172 = vpop.permute.xlu0 %3171
      %3173 = vrot.lane.b32.xlu0 %v3146, 64
      %v3174 = vpop.permute.xlu0 %3173
      %3175 = vrot.lane.b32.xlu0 %v3145, 64
      %v3176 = vpop.permute.xlu0 %3175
      %3177 = vrot.lane.b32.xlu0 %v3149, 64
      %v3178 = vpop.permute.xlu0 %3177
      %3179 = vrot.lane.b32.xlu0 %v3148, 64
      %v3180 = vpop.permute.xlu0 %3179
      %3181 = vrot.lane.b32.xlu0 %v3152, 64
      %v3182 = vpop.permute.xlu0 %3181
      %3183 = vrot.lane.b32.xlu0 %v3151, 64
      %v3184 = vpop.permute.xlu0 %3183
      %v3187 = vsel %vm588, %v2488, %v2577
      %v3190 = vsel %vm588, %v2489, %v2579
      %v3193 = vsel %vm588, %v2490, %v2581
      %v3196 = vsel %vm588, %v2491, %v2583
      %v3199 = vsel %vm588, %v2492, %v2585
      %v3202 = vsel %vm588, %v2493, %v2587
      %v3205 = vsel %vm588, %v2494, %v2589
      %v3208 = vsel %vm588, %v2495, %v2591
      %v3211 = vsel %vm588, %v2496, %v2593
      %v3214 = vsel %vm588, %v2497, %v2595
      %v3217 = vsel %vm588, %v2498, %v2597
      %v3220 = vsel %vm588, %v2499, %v2599
      %v3223 = vsel %vm588, %v2500, %v2601
      %v3226 = vsel %vm588, %v2501, %v2603
      %v3229 = vsel %vm588, %v2502, %v2605
      %v3232 = vsel %vm588, %v2503, %v2607
      %v3234 = vsel %vm1878, %v3187, %v2682
      %v3236 = vsel %vm1878, %v3190, %v2684
      %v3238 = vsel %vm1878, %v3193, %v2686
      %v3240 = vsel %vm1878, %v3196, %v2688
      %v3242 = vsel %vm1878, %v3199, %v2690
      %v3244 = vsel %vm1878, %v3202, %v2692
      %v3246 = vsel %vm1878, %v3205, %v2694
      %v3248 = vsel %vm1878, %v3208, %v2696
      %v3250 = vsel %vm1878, %v3211, %v2698
      %v3252 = vsel %vm1878, %v3214, %v2700
      %v3254 = vsel %vm1878, %v3217, %v2702
      %v3256 = vsel %vm1878, %v3220, %v2704
      %v3258 = vsel %vm1878, %v3223, %v2706
      %v3260 = vsel %vm1878, %v3226, %v2708
      %v3262 = vsel %vm1878, %v3229, %v2710
      %v3264 = vsel %vm1878, %v3232, %v2712
      %v3266 = vsel %vm1911, %v3234, %v2738
      %v3267 = vsel %vm1911, %v3236, %v1201
      %v3269 = vsel %vm1911, %v3238, %v2740
      %v3270 = vsel %vm1911, %v3240, %v1205
      %v3272 = vsel %vm1911, %v3242, %v2742
      %v3273 = vsel %vm1911, %v3244, %v1209
      %v3275 = vsel %vm1911, %v3246, %v2744
      %v3276 = vsel %vm1911, %v3248, %v1213
      %v3278 = vsel %vm1911, %v3250, %v2746
      %v3279 = vsel %vm1911, %v3252, %v1217
      %v3281 = vsel %vm1911, %v3254, %v2748
      %v3282 = vsel %vm1911, %v3256, %v1221
      %v3284 = vsel %vm1911, %v3258, %v2750
      %v3285 = vsel %vm1911, %v3260, %v1225
      %v3287 = vsel %vm1911, %v3262, %v2752
      %v3288 = vsel %vm1911, %v3264, %v1229
      %v3290 = vsel %vm1944, %v3266, %v2770
      %v3292 = vsel %vm1944, %v3267, %v2772
      %v3294 = vsel %vm1944, %v3269, %v2774
      %v3296 = vsel %vm1944, %v3270, %v2776
      %v3298 = vsel %vm1944, %v3272, %v2778
      %v3300 = vsel %vm1944, %v3273, %v2780
      %v3302 = vsel %vm1944, %v3275, %v2782
      %v3304 = vsel %vm1944, %v3276, %v2784
      %v3306 = vsel %vm1944, %v3278, %v2786
      %v3308 = vsel %vm1944, %v3279, %v2788
      %v3310 = vsel %vm1944, %v3281, %v2790
      %v3312 = vsel %vm1944, %v3282, %v2792
      %v3314 = vsel %vm1944, %v3284, %v2794
      %v3316 = vsel %vm1944, %v3285, %v2796
      %v3318 = vsel %vm1944, %v3287, %v2798
      %v3320 = vsel %vm1944, %v3288, %v2800
      %v3322 = vsel %vm1977, %v3290, %v2850
      %v3324 = vsel %vm1977, %v3292, %v2852
      %v3326 = vsel %vm1977, %v3294, %v2854
      %v3328 = vsel %vm1977, %v3296, %v2856
      %v3330 = vsel %vm1977, %v3298, %v2858
      %v3332 = vsel %vm1977, %v3300, %v2860
      %v3334 = vsel %vm1977, %v3302, %v2862
      %v3336 = vsel %vm1977, %v3304, %v2864
      %v3338 = vsel %vm1977, %v3306, %v2866
      %v3340 = vsel %vm1977, %v3308, %v2868
      %v3342 = vsel %vm1977, %v3310, %v2870
      %v3344 = vsel %vm1977, %v3312, %v2872
      %v3346 = vsel %vm1977, %v3314, %v2874
      %v3348 = vsel %vm1977, %v3316, %v2876
      %v3350 = vsel %vm1977, %v3318, %v2878
      %v3352 = vsel %vm1977, %v3320, %v2880
      %v3354 = vsel %vm2010, %v3322, %v2946
      %v3356 = vsel %vm2010, %v3324, %v2948
      %v3358 = vsel %vm2010, %v3326, %v2950
      %v3360 = vsel %vm2010, %v3328, %v2952
      %v3362 = vsel %vm2010, %v3330, %v2954
      %v3364 = vsel %vm2010, %v3332, %v2956
      %v3366 = vsel %vm2010, %v3334, %v2958
      %v3368 = vsel %vm2010, %v3336, %v2960
      %v3370 = vsel %vm2010, %v3338, %v2962
      %v3372 = vsel %vm2010, %v3340, %v2964
      %v3374 = vsel %vm2010, %v3342, %v2966
      %v3376 = vsel %vm2010, %v3344, %v2968
      %v3378 = vsel %vm2010, %v3346, %v2970
      %v3380 = vsel %vm2010, %v3348, %v2972
      %v3382 = vsel %vm2010, %v3350, %v2974
      %v3384 = vsel %vm2010, %v3352, %v2976
      %v3386 = vsel %vm2043, %v3354, %v3050
      %v3388 = vsel %vm2043, %v3356, %v3052
      %v3390 = vsel %vm2043, %v3358, %v3054
      %v3392 = vsel %vm2043, %v3360, %v3056
      %v3394 = vsel %vm2043, %v3362, %v3058
      %v3396 = vsel %vm2043, %v3364, %v3060
      %v3398 = vsel %vm2043, %v3366, %v3062
      %v3400 = vsel %vm2043, %v3368, %v3064
      %v3402 = vsel %vm2043, %v3370, %v3066
      %v3404 = vsel %vm2043, %v3372, %v3068
      %v3406 = vsel %vm2043, %v3374, %v3070
      %v3408 = vsel %vm2043, %v3376, %v3072
      %v3410 = vsel %vm2043, %v3378, %v3074
      %v3412 = vsel %vm2043, %v3380, %v3076
      %v3414 = vsel %vm2043, %v3382, %v3078
      %v3416 = vsel %vm2043, %v3384, %v3080
      %v3418 = vsel %vm2076, %v3386, %v3154
      %v3420 = vsel %vm2076, %v3388, %v3156
      %v3422 = vsel %vm2076, %v3390, %v3158
      %v3424 = vsel %vm2076, %v3392, %v3160
      %v3426 = vsel %vm2076, %v3394, %v3162
      %v3428 = vsel %vm2076, %v3396, %v3164
      %v3430 = vsel %vm2076, %v3398, %v3166
      %v3432 = vsel %vm2076, %v3400, %v3168
      %v3434 = vsel %vm2076, %v3402, %v3170
      %v3436 = vsel %vm2076, %v3404, %v3172
      %v3438 = vsel %vm2076, %v3406, %v3174
      %v3440 = vsel %vm2076, %v3408, %v3176
      %v3442 = vsel %vm2076, %v3410, %v3178
      %v3444 = vsel %vm2076, %v3412, %v3180
      %v3446 = vsel %vm2076, %v3414, %v3182
      %v3448 = vsel %vm2076, %v3416, %v3184
      %v3449 = vshrl.u32 %v3418, 16
      %v3451 = vshll.u32 %v3418, 16
      %v3453 = vrot.slane %v3451, 1
      %v3454 = vor.u32 %v3449, %v3453
      %v3455 = vshll.u32 %v3420, 16
      %v3457 = vrot.slane %v3455, 1
      %v3458 = vsel %vm900, %v3454, %v3457
      %v3459 = vshrl.u32 %v3422, 16
      %v3461 = vshll.u32 %v3422, 16
      %v3463 = vrot.slane %v3461, 1
      %v3464 = vor.u32 %v3459, %v3463
      %v3465 = vshll.u32 %v3424, 16
      %v3467 = vrot.slane %v3465, 1
      %v3468 = vsel %vm900, %v3464, %v3467
      %v3469 = vshrl.u32 %v3426, 16
      %v3471 = vshll.u32 %v3426, 16
      %v3473 = vrot.slane %v3471, 1
      %v3474 = vor.u32 %v3469, %v3473
      %v3475 = vshll.u32 %v3428, 16
      %v3477 = vrot.slane %v3475, 1
      %v3478 = vsel %vm900, %v3474, %v3477
      %v3479 = vshrl.u32 %v3430, 16
      %v3481 = vshll.u32 %v3430, 16
      %v3483 = vrot.slane %v3481, 1
      %v3484 = vor.u32 %v3479, %v3483
      %v3485 = vshll.u32 %v3432, 16
      %v3487 = vrot.slane %v3485, 1
      %v3488 = vsel %vm900, %v3484, %v3487
      %v3489 = vshrl.u32 %v3434, 16
      %v3491 = vshll.u32 %v3434, 16
      %v3493 = vrot.slane %v3491, 1
      %v3494 = vor.u32 %v3489, %v3493
      %v3495 = vshll.u32 %v3436, 16
      %v3497 = vrot.slane %v3495, 1
      %v3498 = vsel %vm900, %v3494, %v3497
      %v3499 = vshrl.u32 %v3438, 16
      %v3501 = vshll.u32 %v3438, 16
      %v3503 = vrot.slane %v3501, 1
      %v3504 = vor.u32 %v3499, %v3503
      %v3505 = vshll.u32 %v3440, 16
      %v3507 = vrot.slane %v3505, 1
      %v3508 = vsel %vm900, %v3504, %v3507
      %v3509 = vshrl.u32 %v3442, 16
      %v3511 = vshll.u32 %v3442, 16
      %v3513 = vrot.slane %v3511, 1
      %v3514 = vor.u32 %v3509, %v3513
      %v3515 = vshll.u32 %v3444, 16
      %v3517 = vrot.slane %v3515, 1
      %v3518 = vsel %vm900, %v3514, %v3517
      %v3519 = vshrl.u32 %v3446, 16
      %v3521 = vshll.u32 %v3446, 16
      %v3523 = vrot.slane %v3521, 1
      %v3524 = vor.u32 %v3519, %v3523
      %v3525 = vshll.u32 %v3448, 16
      %v3527 = vrot.slane %v3525, 1
      %v3528 = vsel %vm900, %v3524, %v3527
      %v3529 = vld [vmem:[%s3] sm:$0xf]
      %v3530 = vld [vmem:[%s3 + $0x4] sm:$0xf]
      %v3531 = vld [vmem:[%s3 + $0x8] sm:$0xf]
      %v3532 = vld [vmem:[%s3 + $0xc] sm:$0xf]
      %v3533 = vld [vmem:[%s3 + $0x10] sm:$0xf]
      %v3534 = vld [vmem:[%s3 + $0x14] sm:$0xf]
      %v3535 = vld [vmem:[%s3 + $0x18] sm:$0xf]
      %v3536 = vld [vmem:[%s3 + $0x1c] sm:$0xf]
      %v3537 = vld [vmem:[%s3 + $0x20] sm:$0xf]
      %v3547 = vunpack.c.l.b16 %v3529
      %v3548 = vunpack.c.l.b16 %v3530
      %v3549 = vunpack.c.l.b16 %v3531
      %v3550 = vunpack.c.l.b16 %v3532
      %v3551 = vunpack.c.l.b16 %v3533
      %v3552 = vunpack.c.l.b16 %v3534
      %v3553 = vunpack.c.l.b16 %v3535
      %v3554 = vunpack.c.l.b16 %v3536
      %v3555 = vunpack.c.l.b16 %v3537
      %v3556 = vpack.c.b16 %v3548, %v3547
      %v3557 = vpack.c.b16 %v3550, %v3549
      %v3558 = vpack.c.b16 %v3552, %v3551
      %v3559 = vpack.c.b16 %v3554, %v3553
      %v3560 = vpack.c.b16 %v3555, %v3555
      %v3566 = vsel %vm2185, %v3458, 0
      %v3569 = vsel %vm2185, %v3468, 0
      %v3572 = vsel %vm2185, %v3478, 0
      %v3575 = vsel %vm2185, %v3488, 0
      %v3578 = vsel %vm2185, %v3498, 0
      %v3581 = vsel %vm2185, %v3508, 0
      %v3584 = vsel %vm2185, %v3518, 0
      %v3587 = vsel %vm2185, %v3528, 0
      %v3590 = vsel %vm613, %v3560, 0
      %3592 = vmatprep.subr.bf16.mxu0 0
      %3593 = vmatpush1.bf16.msra.mxu0 0
      %3594 = vmatprep.subr.bf16.mxu0 0
      %3595 = vmatpush1.bf16.msra.mxu0 0
      %3596 = vmatprep.subr.bf16.mxu0 0
      %3597 = vmatpush1.bf16.msra.mxu0 0
      %3598 = vmatprep.subr.bf16.mxu0 0
      %3599 = vmatpush1.bf16.msra.mxu0 %v3590
      %3600 = vmatprep.subr.bf16.mxu0 0
      %3601 = vmatpush1.bf16.msra.mxu0 %v3559
      %3602 = vmatprep.subr.bf16.mxu0 0
      %3603 = vmatpush1.bf16.msra.mxu0 %v3558
      %3604 = vmatprep.subr.bf16.mxu0 0
      %3605 = vmatpush1.bf16.msra.mxu0 %v3557
      %3606 = vmatprep.subr.bf16.mxu0 0
      %3607 = vmatpush1.bf16.msra.mxu0 %v3556
      %3608 = vmatprep.subr.bf16.mxu0 0
      %3609 = vmatpush2.bf16.msra.mxu0 0
      %3610 = vmatprep.subr.bf16.mxu0 0
      %3611 = vmatpush2.bf16.msra.mxu0 0
      %3612 = vmatprep.subr.bf16.mxu0 0
      %3613 = vmatpush2.bf16.msra.mxu0 0
      %3614 = vmatprep.subr.bf16.mxu0 0
      %3615 = vmatpush2.bf16.msra.mxu0 0
      %3616 = vmatprep.subr.bf16.mxu0 0
      %3617 = vmatpush2.bf16.msra.mxu0 0
      %3618 = vmatprep.subr.bf16.mxu0 0
      %3619 = vmatpush2.bf16.msra.mxu0 0
      %3620 = vmatprep.subr.bf16.mxu0 0
      %3621 = vmatpush2.bf16.msra.mxu0 0
      %3622 = vmatprep.subr.bf16.mxu0 0
      %3623 = vmatpush2.bf16.msra.mxu0 0
      %3624 = vmatprep.mubr.bf16.mxu0 0
      %3625 = vmatmul.mubr.bf16.gmra.mxu0 %v3566
      %v3626 = vpop.f32.mrf.mxu0
      %v3627 = vadd.f32 0.0, %v3626
      %v3628 = vpop.f32.mrf.mxu0
      %v3629 = vpop.f32.mrf.mxu0
      %v3630 = vadd.f32 0.0, %v3629
      %v3631 = vpop.f32.mrf.mxu0
      %3632 = vmatprep.mubr.bf16.mxu0 0
      %3633 = vmatmul.mubr.bf16.gmra.mxu0 %v3569
      %v3634 = vpop.f32.mrf.mxu0
      %v3635 = vadd.f32 0.0, %v3634
      %v3636 = vpop.f32.mrf.mxu0
      %v3637 = vpop.f32.mrf.mxu0
      %v3638 = vadd.f32 0.0, %v3637
      %v3639 = vpop.f32.mrf.mxu0
      %3640 = vmatprep.mubr.bf16.mxu0 0
      %3641 = vmatmul.mubr.bf16.gmra.mxu0 %v3572
      %v3642 = vpop.f32.mrf.mxu0
      %v3643 = vadd.f32 0.0, %v3642
      %v3644 = vpop.f32.mrf.mxu0
      %v3645 = vpop.f32.mrf.mxu0
      %v3646 = vadd.f32 0.0, %v3645
      %v3647 = vpop.f32.mrf.mxu0
      %3648 = vmatprep.mubr.bf16.mxu0 0
      %3649 = vmatmul.mubr.bf16.gmra.mxu0 %v3575
      %v3650 = vpop.f32.mrf.mxu0
      %v3651 = vadd.f32 0.0, %v3650
      %v3652 = vpop.f32.mrf.mxu0
      %v3653 = vpop.f32.mrf.mxu0
      %v3654 = vadd.f32 0.0, %v3653
      %v3655 = vpop.f32.mrf.mxu0
      %3656 = vmatprep.mubr.bf16.mxu0 0
      %3657 = vmatmul.mubr.bf16.gmra.mxu0 %v3578
      %v3658 = vpop.f32.mrf.mxu0
      %v3659 = vadd.f32 0.0, %v3658
      %v3660 = vpop.f32.mrf.mxu0
      %v3661 = vpop.f32.mrf.mxu0
      %v3662 = vadd.f32 0.0, %v3661
      %v3663 = vpop.f32.mrf.mxu0
      %3664 = vmatprep.mubr.bf16.mxu0 0
      %3665 = vmatmul.mubr.bf16.gmra.mxu0 %v3581
      %v3666 = vpop.f32.mrf.mxu0
      %v3667 = vadd.f32 0.0, %v3666
      %v3668 = vpop.f32.mrf.mxu0
      %v3669 = vpop.f32.mrf.mxu0
      %v3670 = vadd.f32 0.0, %v3669
      %v3671 = vpop.f32.mrf.mxu0
      %3672 = vmatprep.mubr.bf16.mxu0 0
      %3673 = vmatmul.mubr.bf16.gmra.mxu0 %v3584
      %v3674 = vpop.f32.mrf.mxu0
      %v3675 = vadd.f32 0.0, %v3674
      %v3676 = vpop.f32.mrf.mxu0
      %v3677 = vpop.f32.mrf.mxu0
      %v3678 = vadd.f32 0.0, %v3677
      %v3679 = vpop.f32.mrf.mxu0
      %3680 = vmatprep.mubr.bf16.mxu0 0
      %3681 = vmatmul.mubr.bf16.gmra.mxu0 %v3587
      %v3682 = vpop.f32.mrf.mxu0
      %v3683 = vadd.f32 0.0, %v3682
      %v3684 = vpop.f32.mrf.mxu0
      %v3685 = vpop.f32.mrf.mxu0
      %v3686 = vadd.f32 0.0, %v3685
      %v3687 = vpop.f32.mrf.mxu0
      %3688 = vdwg.mxu0
      %v3689 = vld [vmem:[%s291] sm:$0xf]
      %v3690 = vld [vmem:[%s291 + $0x4] sm:$0xf]
      %v3691 = vld [vmem:[%s291 + $0xc] sm:$0xf]
      %v3692 = vld [vmem:[%s291 + $0x10] sm:$0xf]
      %v3693 = vld [vmem:[%s291 + $0x18] sm:$0xf]
      %v3694 = vld [vmem:[%s291 + $0x1c] sm:$0xf]
      %v3695 = vld [vmem:[%s291 + $0x24] sm:$0xf]
      %v3696 = vld [vmem:[%s291 + $0x28] sm:$0xf]
      %v3697 = vld [vmem:[%s291 + $0x30] sm:$0xf]
      %v3698 = vld [vmem:[%s291 + $0x34] sm:$0xf]
      %v3699 = vld [vmem:[%s291 + $0x3c] sm:$0xf]
      %v3700 = vld [vmem:[%s291 + $0x40] sm:$0xf]
      %v3701 = vld [vmem:[%s291 + $0x48] sm:$0xf]
      %v3702 = vld [vmem:[%s291 + $0x4c] sm:$0xf]
      %v3703 = vld [vmem:[%s291 + $0x54] sm:$0xf]
      %v3704 = vld [vmem:[%s291 + $0x58] sm:$0xf]
      %v3705 = vld [vmem:[%s291] sm:$0xe]
      %v3706 = vld [vmem:[%s291 + $0x8] sm:$0x3]
      %v3707 = vld [vmem:[%s291 + $0xc] sm:$0xe]
      %v3708 = vld [vmem:[%s291 + $0x14] sm:$0x3]
      %v3709 = vld [vmem:[%s291 + $0x18] sm:$0xe]
      %v3710 = vld [vmem:[%s291 + $0x20] sm:$0x3]
      %v3711 = vld [vmem:[%s291 + $0x24] sm:$0xe]
      %v3712 = vld [vmem:[%s291 + $0x2c] sm:$0x3]
      %v3713 = vld [vmem:[%s291 + $0x30] sm:$0xe]
      %v3714 = vld [vmem:[%s291 + $0x38] sm:$0x3]
      %v3715 = vld [vmem:[%s291 + $0x3c] sm:$0xe]
      %v3716 = vld [vmem:[%s291 + $0x44] sm:$0x3]
      %v3717 = vld [vmem:[%s291 + $0x48] sm:$0xe]
      %v3718 = vld [vmem:[%s291 + $0x50] sm:$0x3]
      %v3719 = vld [vmem:[%s291 + $0x54] sm:$0xe]
      %v3720 = vld [vmem:[%s291 + $0x5c] sm:$0x3]
      %v3721 = vld [vmem:[%s291] sm:$0x8]
      %v3722 = vld [vmem:[%s291 + $0x8] sm:$0x7]
      %v3723 = vld [vmem:[%s291 + $0xc] sm:$0x8]
      %v3724 = vld [vmem:[%s291 + $0x14] sm:$0x7]
      %v3725 = vld [vmem:[%s291 + $0x18] sm:$0x8]
      %v3726 = vld [vmem:[%s291 + $0x20] sm:$0x7]
      %v3727 = vld [vmem:[%s291 + $0x24] sm:$0x8]
      %v3728 = vld [vmem:[%s291 + $0x2c] sm:$0x7]
      %v3729 = vld [vmem:[%s291 + $0x30] sm:$0x8]
      %v3730 = vld [vmem:[%s291 + $0x38] sm:$0x7]
      %v3731 = vld [vmem:[%s291 + $0x3c] sm:$0x8]
      %v3732 = vld [vmem:[%s291 + $0x44] sm:$0x7]
      %v3733 = vld [vmem:[%s291 + $0x48] sm:$0x8]
      %v3734 = vld [vmem:[%s291 + $0x50] sm:$0x7]
      %v3735 = vld [vmem:[%s291 + $0x54] sm:$0x8]
      %v3736 = vld [vmem:[%s291 + $0x5c] sm:$0x7]
      %v3737 = vld [vmem:[%s311] sm:$0xf]
      %v3738 = vld [vmem:[%s311 + $0x4] sm:$0xf]
      %v3739 = vld [vmem:[%s311 + $0xc] sm:$0xf]
      %v3740 = vld [vmem:[%s311 + $0x10] sm:$0xf]
      %v3741 = vld [vmem:[%s311 + $0x18] sm:$0xf]
      %v3742 = vld [vmem:[%s311 + $0x1c] sm:$0xf]
      %v3743 = vld [vmem:[%s311 + $0x24] sm:$0xf]
      %v3744 = vld [vmem:[%s311 + $0x28] sm:$0xf]
      %v3745 = vld [vmem:[%s311 + $0x30] sm:$0xf]
      %v3746 = vld [vmem:[%s311 + $0x34] sm:$0xf]
      %v3747 = vld [vmem:[%s311 + $0x3c] sm:$0xf]
      %v3748 = vld [vmem:[%s311 + $0x40] sm:$0xf]
      %v3749 = vld [vmem:[%s311 + $0x48] sm:$0xf]
      %v3750 = vld [vmem:[%s311 + $0x4c] sm:$0xf]
      %v3751 = vld [vmem:[%s311 + $0x54] sm:$0xf]
      %v3752 = vld [vmem:[%s311 + $0x58] sm:$0xf]
      %v3753 = vld [vmem:[%s311] sm:$0x8]
      %v3754 = vld [vmem:[%s311 + $0xc] sm:$0x8]
      %v3755 = vld [vmem:[%s311 + $0x18] sm:$0x8]
      %v3756 = vld [vmem:[%s311 + $0x24] sm:$0x8]
      %v3757 = vld [vmem:[%s311 + $0x30] sm:$0x8]
      %v3758 = vld [vmem:[%s311 + $0x3c] sm:$0x8]
      %v3759 = vld [vmem:[%s311 + $0x48] sm:$0x8]
      %v3760 = vld [vmem:[%s311 + $0x54] sm:$0x8]
      %s3761 = scalar_lea.vmem %s291, 72
      %v3762 = vld [vmem:[%s3761] sm:$0xf]
      %v3763 = vld [vmem:[%s3761 + $0x4] sm:$0xf]
      %v3764 = vld [vmem:[%s3761 + $0xc] sm:$0xf]
      %v3765 = vld [vmem:[%s3761 + $0x10] sm:$0xf]
      %v3766 = vld [vmem:[%s3761 + $0x18] sm:$0xf]
      %v3767 = vld [vmem:[%s3761 + $0x1c] sm:$0xf]
      %v3768 = vld [vmem:[%s3761 + $0x24] sm:$0xf]
      %v3769 = vld [vmem:[%s3761 + $0x28] sm:$0xf]
      %v3770 = vld [vmem:[%s3761 + $0x30] sm:$0xf]
      %v3771 = vld [vmem:[%s3761 + $0x34] sm:$0xf]
      %v3772 = vld [vmem:[%s3761 + $0x3c] sm:$0xf]
      %v3773 = vld [vmem:[%s3761 + $0x40] sm:$0xf]
      %v3774 = vld [vmem:[%s3761 + $0x48] sm:$0xf]
      %v3775 = vld [vmem:[%s3761 + $0x4c] sm:$0xf]
      %v3776 = vld [vmem:[%s3761 + $0x54] sm:$0xf]
      %v3777 = vld [vmem:[%s3761 + $0x58] sm:$0xf]
      %v3778 = vld [vmem:[%s3761] sm:$0xe]
      %v3779 = vld [vmem:[%s3761 + $0x8] sm:$0x3]
      %v3780 = vld [vmem:[%s3761 + $0xc] sm:$0xe]
      %v3781 = vld [vmem:[%s3761 + $0x14] sm:$0x3]
      %v3782 = vld [vmem:[%s3761 + $0x18] sm:$0xe]
      %v3783 = vld [vmem:[%s3761 + $0x20] sm:$0x3]
      %v3784 = vld [vmem:[%s3761 + $0x24] sm:$0xe]
      %v3785 = vld [vmem:[%s3761 + $0x2c] sm:$0x3]
      %v3786 = vld [vmem:[%s3761 + $0x30] sm:$0xe]
      %v3787 = vld [vmem:[%s3761 + $0x38] sm:$0x3]
      %v3788 = vld [vmem:[%s3761 + $0x3c] sm:$0xe]
      %v3789 = vld [vmem:[%s3761 + $0x44] sm:$0x3]
      %v3790 = vld [vmem:[%s3761 + $0x48] sm:$0xe]
      %v3791 = vld [vmem:[%s3761 + $0x50] sm:$0x3]
      %v3792 = vld [vmem:[%s3761 + $0x54] sm:$0xe]
      %v3793 = vld [vmem:[%s3761 + $0x5c] sm:$0x3]
      %v3794 = vld [vmem:[%s3761] sm:$0x8]
      %v3795 = vld [vmem:[%s3761 + $0x8] sm:$0x7]
      %v3796 = vld [vmem:[%s3761 + $0xc] sm:$0x8]
      %v3797 = vld [vmem:[%s3761 + $0x14] sm:$0x7]
      %v3798 = vld [vmem:[%s3761 + $0x18] sm:$0x8]
      %v3799 = vld [vmem:[%s3761 + $0x20] sm:$0x7]
      %v3800 = vld [vmem:[%s3761 + $0x24] sm:$0x8]
      %v3801 = vld [vmem:[%s3761 + $0x2c] sm:$0x7]
      %v3802 = vld [vmem:[%s3761 + $0x30] sm:$0x8]
      %v3803 = vld [vmem:[%s3761 + $0x38] sm:$0x7]
      %v3804 = vld [vmem:[%s3761 + $0x3c] sm:$0x8]
      %v3805 = vld [vmem:[%s3761 + $0x44] sm:$0x7]
      %v3806 = vld [vmem:[%s3761 + $0x48] sm:$0x8]
      %v3807 = vld [vmem:[%s3761 + $0x50] sm:$0x7]
      %v3808 = vld [vmem:[%s3761 + $0x54] sm:$0x8]
      %v3809 = vld [vmem:[%s3761 + $0x5c] sm:$0x7]
      %v3826 = vunpack.c.l.b16 %v3689
      %v3827 = vunpack.c.l.b16 %v3690
      %v3828 = vunpack.c.l.b16 %v3691
      %v3829 = vunpack.c.l.b16 %v3692
      %v3830 = vunpack.c.l.b16 %v3693
      %v3831 = vunpack.c.l.b16 %v3694
      %v3832 = vunpack.c.l.b16 %v3695
      %v3833 = vunpack.c.l.b16 %v3696
      %v3834 = vunpack.c.l.b16 %v3697
      %v3835 = vunpack.c.l.b16 %v3698
      %v3836 = vunpack.c.l.b16 %v3699
      %v3837 = vunpack.c.l.b16 %v3700
      %v3838 = vunpack.c.l.b16 %v3701
      %v3839 = vunpack.c.l.b16 %v3702
      %v3840 = vunpack.c.l.b16 %v3703
      %v3841 = vunpack.c.l.b16 %v3704
      %v3842 = vpack.c.b16 %v3827, %v3826
      %v3843 = vpack.c.b16 %v3829, %v3828
      %v3844 = vpack.c.b16 %v3831, %v3830
      %v3845 = vpack.c.b16 %v3833, %v3832
      %v3846 = vpack.c.b16 %v3835, %v3834
      %v3847 = vpack.c.b16 %v3837, %v3836
      %v3848 = vpack.c.b16 %v3839, %v3838
      %v3849 = vpack.c.b16 %v3841, %v3840
      %v3866 = vunpack.c.l.b16 %v3705
      %v3867 = vunpack.c.l.b16 %v3706
      %v3868 = vunpack.c.l.b16 %v3707
      %v3869 = vunpack.c.l.b16 %v3708
      %v3870 = vunpack.c.l.b16 %v3709
      %v3871 = vunpack.c.l.b16 %v3710
      %v3872 = vunpack.c.l.b16 %v3711
      %v3873 = vunpack.c.l.b16 %v3712
      %v3874 = vunpack.c.l.b16 %v3713
      %v3875 = vunpack.c.l.b16 %v3714
      %v3876 = vunpack.c.l.b16 %v3715
      %v3877 = vunpack.c.l.b16 %v3716
      %v3878 = vunpack.c.l.b16 %v3717
      %v3879 = vunpack.c.l.b16 %v3718
      %v3880 = vunpack.c.l.b16 %v3719
      %v3881 = vunpack.c.l.b16 %v3720
      %v3882 = vpack.c.b16 %v3827, %v3866
      %v3883 = vpack.c.b16 %v3867, %v3867
      %v3884 = vpack.c.b16 %v3829, %v3868
      %v3885 = vpack.c.b16 %v3869, %v3869
      %v3886 = vpack.c.b16 %v3831, %v3870
      %v3887 = vpack.c.b16 %v3871, %v3871
      %v3888 = vpack.c.b16 %v3833, %v3872
      %v3889 = vpack.c.b16 %v3873, %v3873
      %v3890 = vpack.c.b16 %v3835, %v3874
      %v3891 = vpack.c.b16 %v3875, %v3875
      %v3892 = vpack.c.b16 %v3837, %v3876
      %v3893 = vpack.c.b16 %v3877, %v3877
      %v3894 = vpack.c.b16 %v3839, %v3878
      %v3895 = vpack.c.b16 %v3879, %v3879
      %v3896 = vpack.c.b16 %v3841, %v3880
      %v3897 = vpack.c.b16 %v3881, %v3881
      %vm3898 = vsmask.f32 6400
      %v3900 = vshrl.u32 %v3882, 16
      %v3902 = vrot.slane %v3900, 1
      %v3903 = vshll.u32 %v3882, 16
      %v3905 = vrot.slane %v3903, 2
      %v3906 = vor.u32 %v3902, %v3905
      %v3908 = vshrl.u32 %v3883, 16
      %v3910 = vrot.slane %v3908, 1
      %v3911 = vshll.u32 %v3883, 16
      %v3913 = vrot.slane %v3911, 2
      %v3914 = vor.u32 %v3910, %v3913
      %v3915 = vsel %vm3898, %v3906, %v3914
      %v3917 = vshrl.u32 %v3884, 16
      %v3919 = vrot.slane %v3917, 1
      %v3920 = vshll.u32 %v3884, 16
      %v3922 = vrot.slane %v3920, 2
      %v3923 = vor.u32 %v3919, %v3922
      %v3925 = vshrl.u32 %v3885, 16
      %v3927 = vrot.slane %v3925, 1
      %v3928 = vshll.u32 %v3885, 16
      %v3930 = vrot.slane %v3928, 2
      %v3931 = vor.u32 %v3927, %v3930
      %v3932 = vsel %vm3898, %v3923, %v3931
      %v3934 = vshrl.u32 %v3886, 16
      %v3936 = vrot.slane %v3934, 1
      %v3937 = vshll.u32 %v3886, 16
      %v3939 = vrot.slane %v3937, 2
      %v3940 = vor.u32 %v3936, %v3939
      %v3942 = vshrl.u32 %v3887, 16
      %v3944 = vrot.slane %v3942, 1
      %v3945 = vshll.u32 %v3887, 16
      %v3947 = vrot.slane %v3945, 2
      %v3948 = vor.u32 %v3944, %v3947
      %v3949 = vsel %vm3898, %v3940, %v3948
      %v3951 = vshrl.u32 %v3888, 16
      %v3953 = vrot.slane %v3951, 1
      %v3954 = vshll.u32 %v3888, 16
      %v3956 = vrot.slane %v3954, 2
      %v3957 = vor.u32 %v3953, %v3956
      %v3959 = vshrl.u32 %v3889, 16
      %v3961 = vrot.slane %v3959, 1
      %v3962 = vshll.u32 %v3889, 16
      %v3964 = vrot.slane %v3962, 2
      %v3965 = vor.u32 %v3961, %v3964
      %v3966 = vsel %vm3898, %v3957, %v3965
      %v3968 = vshrl.u32 %v3890, 16
      %v3970 = vrot.slane %v3968, 1
      %v3971 = vshll.u32 %v3890, 16
      %v3973 = vrot.slane %v3971, 2
      %v3974 = vor.u32 %v3970, %v3973
      %v3976 = vshrl.u32 %v3891, 16
      %v3978 = vrot.slane %v3976, 1
      %v3979 = vshll.u32 %v3891, 16
      %v3981 = vrot.slane %v3979, 2
      %v3982 = vor.u32 %v3978, %v3981
      %v3983 = vsel %vm3898, %v3974, %v3982
      %v3985 = vshrl.u32 %v3892, 16
      %v3987 = vrot.slane %v3985, 1
      %v3988 = vshll.u32 %v3892, 16
      %v3990 = vrot.slane %v3988, 2
      %v3991 = vor.u32 %v3987, %v3990
      %v3993 = vshrl.u32 %v3893, 16
      %v3995 = vrot.slane %v3993, 1
      %v3996 = vshll.u32 %v3893, 16
      %v3998 = vrot.slane %v3996, 2
      %v3999 = vor.u32 %v3995, %v3998
      %v4000 = vsel %vm3898, %v3991, %v3999
      %v4002 = vshrl.u32 %v3894, 16
      %v4004 = vrot.slane %v4002, 1
      %v4005 = vshll.u32 %v3894, 16
      %v4007 = vrot.slane %v4005, 2
      %v4008 = vor.u32 %v4004, %v4007
      %v4010 = vshrl.u32 %v3895, 16
      %v4012 = vrot.slane %v4010, 1
      %v4013 = vshll.u32 %v3895, 16
      %v4015 = vrot.slane %v4013, 2
      %v4016 = vor.u32 %v4012, %v4015
      %v4017 = vsel %vm3898, %v4008, %v4016
      %v4019 = vshrl.u32 %v3896, 16
      %v4021 = vrot.slane %v4019, 1
      %v4022 = vshll.u32 %v3896, 16
      %v4024 = vrot.slane %v4022, 2
      %v4025 = vor.u32 %v4021, %v4024
      %v4027 = vshrl.u32 %v3897, 16
      %v4029 = vrot.slane %v4027, 1
      %v4030 = vshll.u32 %v3897, 16
      %v4032 = vrot.slane %v4030, 2
      %v4033 = vor.u32 %v4029, %v4032
      %v4034 = vsel %vm3898, %v4025, %v4033
      %4035 = vrot.lane.b32.xlu0 %v3915, 8
      %v4036 = vpop.permute.xlu0 %4035
      %4037 = vrot.lane.b32.xlu0 %v3932, 8
      %v4038 = vpop.permute.xlu0 %4037
      %4039 = vrot.lane.b32.xlu0 %v3949, 8
      %v4040 = vpop.permute.xlu0 %4039
      %4041 = vrot.lane.b32.xlu0 %v3966, 8
      %v4042 = vpop.permute.xlu0 %4041
      %4043 = vrot.lane.b32.xlu0 %v3983, 8
      %v4044 = vpop.permute.xlu0 %4043
      %4045 = vrot.lane.b32.xlu0 %v4000, 8
      %v4046 = vpop.permute.xlu0 %4045
      %4047 = vrot.lane.b32.xlu0 %v4017, 8
      %v4048 = vpop.permute.xlu0 %4047
      %4049 = vrot.lane.b32.xlu0 %v4034, 8
      %v4050 = vpop.permute.xlu0 %4049
      %v4067 = vunpack.c.l.b16 %v3721
      %v4068 = vunpack.c.l.b16 %v3722
      %v4069 = vunpack.c.l.b16 %v3723
      %v4070 = vunpack.c.l.b16 %v3724
      %v4071 = vunpack.c.l.b16 %v3725
      %v4072 = vunpack.c.l.b16 %v3726
      %v4073 = vunpack.c.l.b16 %v3727
      %v4074 = vunpack.c.l.b16 %v3728
      %v4075 = vunpack.c.l.b16 %v3729
      %v4076 = vunpack.c.l.b16 %v3730
      %v4077 = vunpack.c.l.b16 %v3731
      %v4078 = vunpack.c.l.b16 %v3732
      %v4079 = vunpack.c.l.b16 %v3733
      %v4080 = vunpack.c.l.b16 %v3734
      %v4081 = vunpack.c.l.b16 %v3735
      %v4082 = vunpack.c.l.b16 %v3736
      %v4083 = vpack.c.b16 %v3827, %v4067
      %v4084 = vpack.c.b16 %v4068, %v4068
      %v4085 = vpack.c.b16 %v3829, %v4069
      %v4086 = vpack.c.b16 %v4070, %v4070
      %v4087 = vpack.c.b16 %v3831, %v4071
      %v4088 = vpack.c.b16 %v4072, %v4072
      %v4089 = vpack.c.b16 %v3833, %v4073
      %v4090 = vpack.c.b16 %v4074, %v4074
      %v4091 = vpack.c.b16 %v3835, %v4075
      %v4092 = vpack.c.b16 %v4076, %v4076
      %v4093 = vpack.c.b16 %v3837, %v4077
      %v4094 = vpack.c.b16 %v4078, %v4078
      %v4095 = vpack.c.b16 %v3839, %v4079
      %v4096 = vpack.c.b16 %v4080, %v4080
      %v4097 = vpack.c.b16 %v3841, %v4081
      %v4098 = vpack.c.b16 %v4082, %v4082
      %vm4099 = vcmask 1044480
      %v4100 = vrot.slane %v4083, 3
      %v4101 = vrot.slane %v4084, 3
      %v4102 = vsel %vm4099, %v4100, %v4101
      %v4103 = vrot.slane %v4085, 3
      %v4104 = vrot.slane %v4086, 3
      %v4105 = vsel %vm4099, %v4103, %v4104
      %v4106 = vrot.slane %v4087, 3
      %v4107 = vrot.slane %v4088, 3
      %v4108 = vsel %vm4099, %v4106, %v4107
      %v4109 = vrot.slane %v4089, 3
      %v4110 = vrot.slane %v4090, 3
      %v4111 = vsel %vm4099, %v4109, %v4110
      %v4112 = vrot.slane %v4091, 3
      %v4113 = vrot.slane %v4092, 3
      %v4114 = vsel %vm4099, %v4112, %v4113
      %v4115 = vrot.slane %v4093, 3
      %v4116 = vrot.slane %v4094, 3
      %v4117 = vsel %vm4099, %v4115, %v4116
      %v4118 = vrot.slane %v4095, 3
      %v4119 = vrot.slane %v4096, 3
      %v4120 = vsel %vm4099, %v4118, %v4119
      %v4121 = vrot.slane %v4097, 3
      %v4122 = vrot.slane %v4098, 3
      %v4123 = vsel %vm4099, %v4121, %v4122
      %4124 = vrot.lane.b32.xlu0 %v4102, 16
      %v4125 = vpop.permute.xlu0 %4124
      %4126 = vrot.lane.b32.xlu0 %v4105, 16
      %v4127 = vpop.permute.xlu0 %4126
      %4128 = vrot.lane.b32.xlu0 %v4108, 16
      %v4129 = vpop.permute.xlu0 %4128
      %4130 = vrot.lane.b32.xlu0 %v4111, 16
      %v4131 = vpop.permute.xlu0 %4130
      %4132 = vrot.lane.b32.xlu0 %v4114, 16
      %v4133 = vpop.permute.xlu0 %4132
      %4134 = vrot.lane.b32.xlu0 %v4117, 16
      %v4135 = vpop.permute.xlu0 %4134
      %4136 = vrot.lane.b32.xlu0 %v4120, 16
      %v4137 = vpop.permute.xlu0 %4136
      %4138 = vrot.lane.b32.xlu0 %v4123, 16
      %v4139 = vpop.permute.xlu0 %4138
      %v4156 = vunpack.c.l.b16 %v3737
      %v4157 = vunpack.c.l.b16 %v3738
      %v4158 = vunpack.c.l.b16 %v3739
      %v4159 = vunpack.c.l.b16 %v3740
      %v4160 = vunpack.c.l.b16 %v3741
      %v4161 = vunpack.c.l.b16 %v3742
      %v4162 = vunpack.c.l.b16 %v3743
      %v4163 = vunpack.c.l.b16 %v3744
      %v4164 = vunpack.c.l.b16 %v3745
      %v4165 = vunpack.c.l.b16 %v3746
      %v4166 = vunpack.c.l.b16 %v3747
      %v4167 = vunpack.c.l.b16 %v3748
      %v4168 = vunpack.c.l.b16 %v3749
      %v4169 = vunpack.c.l.b16 %v3750
      %v4170 = vunpack.c.l.b16 %v3751
      %v4171 = vunpack.c.l.b16 %v3752
      %v4172 = vpack.c.b16 %v4157, %v4156
      %v4173 = vpack.c.b16 %v4159, %v4158
      %v4174 = vpack.c.b16 %v4161, %v4160
      %v4175 = vpack.c.b16 %v4163, %v4162
      %v4176 = vpack.c.b16 %v4165, %v4164
      %v4177 = vpack.c.b16 %v4167, %v4166
      %v4178 = vpack.c.b16 %v4169, %v4168
      %v4179 = vpack.c.b16 %v4171, %v4170
      %4180 = vrot.lane.b32.xlu0 %v4172, 24
      %v4181 = vpop.permute.xlu0 %4180
      %4182 = vrot.lane.b32.xlu0 %v4173, 24
      %v4183 = vpop.permute.xlu0 %4182
      %4184 = vrot.lane.b32.xlu0 %v4174, 24
      %v4185 = vpop.permute.xlu0 %4184
      %4186 = vrot.lane.b32.xlu0 %v4175, 24
      %v4187 = vpop.permute.xlu0 %4186
      %4188 = vrot.lane.b32.xlu0 %v4176, 24
      %v4189 = vpop.permute.xlu0 %4188
      %4190 = vrot.lane.b32.xlu0 %v4177, 24
      %v4191 = vpop.permute.xlu0 %4190
      %4192 = vrot.lane.b32.xlu0 %v4178, 24
      %v4193 = vpop.permute.xlu0 %4192
      %4194 = vrot.lane.b32.xlu0 %v4179, 24
      %v4195 = vpop.permute.xlu0 %4194
      %v4196 = vrot.slane %v1255, 1
      %v4197 = vrot.slane %v1257, 2
      %v4198 = vor.u32 %v4196, %v4197
      %v4199 = vrot.slane %v1266, 1
      %v4200 = vrot.slane %v1262, 2
      %v4201 = vor.u32 %v4199, %v4200
      %v4202 = vsel %vm3898, %v4198, %v4201
      %v4203 = vrot.slane %v1270, 1
      %v4204 = vrot.slane %v1272, 2
      %v4205 = vor.u32 %v4203, %v4204
      %v4206 = vrot.slane %v1281, 1
      %v4207 = vrot.slane %v1277, 2
      %v4208 = vor.u32 %v4206, %v4207
      %v4209 = vsel %vm3898, %v4205, %v4208
      %v4210 = vrot.slane %v1285, 1
      %v4211 = vrot.slane %v1287, 2
      %v4212 = vor.u32 %v4210, %v4211
      %v4213 = vrot.slane %v1296, 1
      %v4214 = vrot.slane %v1292, 2
      %v4215 = vor.u32 %v4213, %v4214
      %v4216 = vsel %vm3898, %v4212, %v4215
      %v4217 = vrot.slane %v1300, 1
      %v4218 = vrot.slane %v1302, 2
      %v4219 = vor.u32 %v4217, %v4218
      %v4220 = vrot.slane %v1311, 1
      %v4221 = vrot.slane %v1307, 2
      %v4222 = vor.u32 %v4220, %v4221
      %v4223 = vsel %vm3898, %v4219, %v4222
      %v4224 = vrot.slane %v1315, 1
      %v4225 = vrot.slane %v1317, 2
      %v4226 = vor.u32 %v4224, %v4225
      %v4227 = vrot.slane %v1326, 1
      %v4228 = vrot.slane %v1322, 2
      %v4229 = vor.u32 %v4227, %v4228
      %v4230 = vsel %vm3898, %v4226, %v4229
      %v4231 = vrot.slane %v1330, 1
      %v4232 = vrot.slane %v1332, 2
      %v4233 = vor.u32 %v4231, %v4232
      %v4234 = vrot.slane %v1341, 1
      %v4235 = vrot.slane %v1337, 2
      %v4236 = vor.u32 %v4234, %v4235
      %v4237 = vsel %vm3898, %v4233, %v4236
      %v4238 = vrot.slane %v1345, 1
      %v4239 = vrot.slane %v1347, 2
      %v4240 = vor.u32 %v4238, %v4239
      %v4241 = vrot.slane %v1356, 1
      %v4242 = vrot.slane %v1352, 2
      %v4243 = vor.u32 %v4241, %v4242
      %v4244 = vsel %vm3898, %v4240, %v4243
      %v4245 = vrot.slane %v1360, 1
      %v4246 = vrot.slane %v1362, 2
      %v4247 = vor.u32 %v4245, %v4246
      %v4248 = vrot.slane %v1371, 1
      %v4249 = vrot.slane %v1367, 2
      %v4250 = vor.u32 %v4248, %v4249
      %v4251 = vsel %vm3898, %v4247, %v4250
      %4252 = vrot.lane.b32.xlu0 %v4202, 32
      %v4253 = vpop.permute.xlu0 %4252
      %4254 = vrot.lane.b32.xlu0 %v4209, 32
      %v4255 = vpop.permute.xlu0 %4254
      %4256 = vrot.lane.b32.xlu0 %v4216, 32
      %v4257 = vpop.permute.xlu0 %4256
      %4258 = vrot.lane.b32.xlu0 %v4223, 32
      %v4259 = vpop.permute.xlu0 %4258
      %4260 = vrot.lane.b32.xlu0 %v4230, 32
      %v4261 = vpop.permute.xlu0 %4260
      %4262 = vrot.lane.b32.xlu0 %v4237, 32
      %v4263 = vpop.permute.xlu0 %4262
      %4264 = vrot.lane.b32.xlu0 %v4244, 32
      %v4265 = vpop.permute.xlu0 %4264
      %4266 = vrot.lane.b32.xlu0 %v4251, 32
      %v4267 = vpop.permute.xlu0 %4266
      %v4276 = vunpack.c.l.b16 %v3753
      %v4277 = vunpack.c.l.b16 %v3754
      %v4278 = vunpack.c.l.b16 %v3755
      %v4279 = vunpack.c.l.b16 %v3756
      %v4280 = vunpack.c.l.b16 %v3757
      %v4281 = vunpack.c.l.b16 %v3758
      %v4282 = vunpack.c.l.b16 %v3759
      %v4283 = vunpack.c.l.b16 %v3760
      %v4284 = vpack.c.b16 %v1159, %v4276
      %v4285 = vpack.c.b16 %v1162, %v4277
      %v4286 = vpack.c.b16 %v1165, %v4278
      %v4287 = vpack.c.b16 %v1168, %v4279
      %v4288 = vpack.c.b16 %v1171, %v4280
      %v4289 = vpack.c.b16 %v1174, %v4281
      %v4290 = vpack.c.b16 %v1177, %v4282
      %v4291 = vpack.c.b16 %v1180, %v4283
      %v4292 = vrot.slane %v4284, 3
      %v4293 = vrot.slane %v2817, 3
      %v4294 = vsel %vm4099, %v4292, %v4293
      %v4295 = vrot.slane %v4285, 3
      %v4296 = vrot.slane %v2818, 3
      %v4297 = vsel %vm4099, %v4295, %v4296
      %v4298 = vrot.slane %v4286, 3
      %v4299 = vrot.slane %v2819, 3
      %v4300 = vsel %vm4099, %v4298, %v4299
      %v4301 = vrot.slane %v4287, 3
      %v4302 = vrot.slane %v2820, 3
      %v4303 = vsel %vm4099, %v4301, %v4302
      %v4304 = vrot.slane %v4288, 3
      %v4305 = vrot.slane %v2821, 3
      %v4306 = vsel %vm4099, %v4304, %v4305
      %v4307 = vrot.slane %v4289, 3
      %v4308 = vrot.slane %v2822, 3
      %v4309 = vsel %vm4099, %v4307, %v4308
      %v4310 = vrot.slane %v4290, 3
      %v4311 = vrot.slane %v2823, 3
      %v4312 = vsel %vm4099, %v4310, %v4311
      %v4313 = vrot.slane %v4291, 3
      %v4314 = vrot.slane %v2824, 3
      %v4315 = vsel %vm4099, %v4313, %v4314
      %4316 = vrot.lane.b32.xlu0 %v4294, 40
      %v4317 = vpop.permute.xlu0 %4316
      %4318 = vrot.lane.b32.xlu0 %v4297, 40
      %v4319 = vpop.permute.xlu0 %4318
      %4320 = vrot.lane.b32.xlu0 %v4300, 40
      %v4321 = vpop.permute.xlu0 %4320
      %4322 = vrot.lane.b32.xlu0 %v4303, 40
      %v4323 = vpop.permute.xlu0 %4322
      %4324 = vrot.lane.b32.xlu0 %v4306, 40
      %v4325 = vpop.permute.xlu0 %4324
      %4326 = vrot.lane.b32.xlu0 %v4309, 40
      %v4327 = vpop.permute.xlu0 %4326
      %4328 = vrot.lane.b32.xlu0 %v4312, 40
      %v4329 = vpop.permute.xlu0 %4328
      %4330 = vrot.lane.b32.xlu0 %v4315, 40
      %v4331 = vpop.permute.xlu0 %4330
      %v4348 = vunpack.c.l.b16 %v3762
      %v4349 = vunpack.c.l.b16 %v3763
      %v4350 = vunpack.c.l.b16 %v3764
      %v4351 = vunpack.c.l.b16 %v3765
      %v4352 = vunpack.c.l.b16 %v3766
      %v4353 = vunpack.c.l.b16 %v3767
      %v4354 = vunpack.c.l.b16 %v3768
      %v4355 = vunpack.c.l.b16 %v3769
      %v4356 = vunpack.c.l.b16 %v3770
      %v4357 = vunpack.c.l.b16 %v3771
      %v4358 = vunpack.c.l.b16 %v3772
      %v4359 = vunpack.c.l.b16 %v3773
      %v4360 = vunpack.c.l.b16 %v3774
      %v4361 = vunpack.c.l.b16 %v3775
      %v4362 = vunpack.c.l.b16 %v3776
      %v4363 = vunpack.c.l.b16 %v3777
      %v4364 = vpack.c.b16 %v4349, %v4348
      %v4365 = vpack.c.b16 %v4351, %v4350
      %v4366 = vpack.c.b16 %v4353, %v4352
      %v4367 = vpack.c.b16 %v4355, %v4354
      %v4368 = vpack.c.b16 %v4357, %v4356
      %v4369 = vpack.c.b16 %v4359, %v4358
      %v4370 = vpack.c.b16 %v4361, %v4360
      %v4371 = vpack.c.b16 %v4363, %v4362
      %4372 = vrot.lane.b32.xlu0 %v4364, 48
      %v4373 = vpop.permute.xlu0 %4372
      %4374 = vrot.lane.b32.xlu0 %v4365, 48
      %v4375 = vpop.permute.xlu0 %4374
      %4376 = vrot.lane.b32.xlu0 %v4366, 48
      %v4377 = vpop.permute.xlu0 %4376
      %4378 = vrot.lane.b32.xlu0 %v4367, 48
      %v4379 = vpop.permute.xlu0 %4378
      %4380 = vrot.lane.b32.xlu0 %v4368, 48
      %v4381 = vpop.permute.xlu0 %4380
      %4382 = vrot.lane.b32.xlu0 %v4369, 48
      %v4383 = vpop.permute.xlu0 %4382
      %4384 = vrot.lane.b32.xlu0 %v4370, 48
      %v4385 = vpop.permute.xlu0 %4384
      %4386 = vrot.lane.b32.xlu0 %v4371, 48
      %v4387 = vpop.permute.xlu0 %4386
      %v4404 = vunpack.c.l.b16 %v3778
      %v4405 = vunpack.c.l.b16 %v3779
      %v4406 = vunpack.c.l.b16 %v3780
      %v4407 = vunpack.c.l.b16 %v3781
      %v4408 = vunpack.c.l.b16 %v3782
      %v4409 = vunpack.c.l.b16 %v3783
      %v4410 = vunpack.c.l.b16 %v3784
      %v4411 = vunpack.c.l.b16 %v3785
      %v4412 = vunpack.c.l.b16 %v3786
      %v4413 = vunpack.c.l.b16 %v3787
      %v4414 = vunpack.c.l.b16 %v3788
      %v4415 = vunpack.c.l.b16 %v3789
      %v4416 = vunpack.c.l.b16 %v3790
      %v4417 = vunpack.c.l.b16 %v3791
      %v4418 = vunpack.c.l.b16 %v3792
      %v4419 = vunpack.c.l.b16 %v3793
      %v4420 = vpack.c.b16 %v4349, %v4404
      %v4421 = vpack.c.b16 %v4405, %v4405
      %v4422 = vpack.c.b16 %v4351, %v4406
      %v4423 = vpack.c.b16 %v4407, %v4407
      %v4424 = vpack.c.b16 %v4353, %v4408
      %v4425 = vpack.c.b16 %v4409, %v4409
      %v4426 = vpack.c.b16 %v4355, %v4410
      %v4427 = vpack.c.b16 %v4411, %v4411
      %v4428 = vpack.c.b16 %v4357, %v4412
      %v4429 = vpack.c.b16 %v4413, %v4413
      %v4430 = vpack.c.b16 %v4359, %v4414
      %v4431 = vpack.c.b16 %v4415, %v4415
      %v4432 = vpack.c.b16 %v4361, %v4416
      %v4433 = vpack.c.b16 %v4417, %v4417
      %v4434 = vpack.c.b16 %v4363, %v4418
      %v4435 = vpack.c.b16 %v4419, %v4419
      %v4437 = vshrl.u32 %v4420, 16
      %v4439 = vrot.slane %v4437, 1
      %v4440 = vshll.u32 %v4420, 16
      %v4442 = vrot.slane %v4440, 2
      %v4443 = vor.u32 %v4439, %v4442
      %v4445 = vshrl.u32 %v4421, 16
      %v4447 = vrot.slane %v4445, 1
      %v4448 = vshll.u32 %v4421, 16
      %v4450 = vrot.slane %v4448, 2
      %v4451 = vor.u32 %v4447, %v4450
      %v4452 = vsel %vm3898, %v4443, %v4451
      %v4454 = vshrl.u32 %v4422, 16
      %v4456 = vrot.slane %v4454, 1
      %v4457 = vshll.u32 %v4422, 16
      %v4459 = vrot.slane %v4457, 2
      %v4460 = vor.u32 %v4456, %v4459
      %v4462 = vshrl.u32 %v4423, 16
      %v4464 = vrot.slane %v4462, 1
      %v4465 = vshll.u32 %v4423, 16
      %v4467 = vrot.slane %v4465, 2
      %v4468 = vor.u32 %v4464, %v4467
      %v4469 = vsel %vm3898, %v4460, %v4468
      %v4471 = vshrl.u32 %v4424, 16
      %v4473 = vrot.slane %v4471, 1
      %v4474 = vshll.u32 %v4424, 16
      %v4476 = vrot.slane %v4474, 2
      %v4477 = vor.u32 %v4473, %v4476
      %v4479 = vshrl.u32 %v4425, 16
      %v4481 = vrot.slane %v4479, 1
      %v4482 = vshll.u32 %v4425, 16
      %v4484 = vrot.slane %v4482, 2
      %v4485 = vor.u32 %v4481, %v4484
      %v4486 = vsel %vm3898, %v4477, %v4485
      %v4488 = vshrl.u32 %v4426, 16
      %v4490 = vrot.slane %v4488, 1
      %v4491 = vshll.u32 %v4426, 16
      %v4493 = vrot.slane %v4491, 2
      %v4494 = vor.u32 %v4490, %v4493
      %v4496 = vshrl.u32 %v4427, 16
      %v4498 = vrot.slane %v4496, 1
      %v4499 = vshll.u32 %v4427, 16
      %v4501 = vrot.slane %v4499, 2
      %v4502 = vor.u32 %v4498, %v4501
      %v4503 = vsel %vm3898, %v4494, %v4502
      %v4505 = vshrl.u32 %v4428, 16
      %v4507 = vrot.slane %v4505, 1
      %v4508 = vshll.u32 %v4428, 16
      %v4510 = vrot.slane %v4508, 2
      %v4511 = vor.u32 %v4507, %v4510
      %v4513 = vshrl.u32 %v4429, 16
      %v4515 = vrot.slane %v4513, 1
      %v4516 = vshll.u32 %v4429, 16
      %v4518 = vrot.slane %v4516, 2
      %v4519 = vor.u32 %v4515, %v4518
      %v4520 = vsel %vm3898, %v4511, %v4519
      %v4522 = vshrl.u32 %v4430, 16
      %v4524 = vrot.slane %v4522, 1
      %v4525 = vshll.u32 %v4430, 16
      %v4527 = vrot.slane %v4525, 2
      %v4528 = vor.u32 %v4524, %v4527
      %v4530 = vshrl.u32 %v4431, 16
      %v4532 = vrot.slane %v4530, 1
      %v4533 = vshll.u32 %v4431, 16
      %v4535 = vrot.slane %v4533, 2
      %v4536 = vor.u32 %v4532, %v4535
      %v4537 = vsel %vm3898, %v4528, %v4536
      %v4539 = vshrl.u32 %v4432, 16
      %v4541 = vrot.slane %v4539, 1
      %v4542 = vshll.u32 %v4432, 16
      %v4544 = vrot.slane %v4542, 2
      %v4545 = vor.u32 %v4541, %v4544
      %v4547 = vshrl.u32 %v4433, 16
      %v4549 = vrot.slane %v4547, 1
      %v4550 = vshll.u32 %v4433, 16
      %v4552 = vrot.slane %v4550, 2
      %v4553 = vor.u32 %v4549, %v4552
      %v4554 = vsel %vm3898, %v4545, %v4553
      %v4556 = vshrl.u32 %v4434, 16
      %v4558 = vrot.slane %v4556, 1
      %v4559 = vshll.u32 %v4434, 16
      %v4561 = vrot.slane %v4559, 2
      %v4562 = vor.u32 %v4558, %v4561
      %v4564 = vshrl.u32 %v4435, 16
      %v4566 = vrot.slane %v4564, 1
      %v4567 = vshll.u32 %v4435, 16
      %v4569 = vrot.slane %v4567, 2
      %v4570 = vor.u32 %v4566, %v4569
      %v4571 = vsel %vm3898, %v4562, %v4570
      %4572 = vrot.lane.b32.xlu0 %v4452, 56
      %v4573 = vpop.permute.xlu0 %4572
      %4574 = vrot.lane.b32.xlu0 %v4469, 56
      %v4575 = vpop.permute.xlu0 %4574
      %4576 = vrot.lane.b32.xlu0 %v4486, 56
      %v4577 = vpop.permute.xlu0 %4576
      %4578 = vrot.lane.b32.xlu0 %v4503, 56
      %v4579 = vpop.permute.xlu0 %4578
      %4580 = vrot.lane.b32.xlu0 %v4520, 56
      %v4581 = vpop.permute.xlu0 %4580
      %4582 = vrot.lane.b32.xlu0 %v4537, 56
      %v4583 = vpop.permute.xlu0 %4582
      %4584 = vrot.lane.b32.xlu0 %v4554, 56
      %v4585 = vpop.permute.xlu0 %4584
      %4586 = vrot.lane.b32.xlu0 %v4571, 56
      %v4587 = vpop.permute.xlu0 %4586
      %v4604 = vunpack.c.l.b16 %v3794
      %v4605 = vunpack.c.l.b16 %v3795
      %v4606 = vunpack.c.l.b16 %v3796
      %v4607 = vunpack.c.l.b16 %v3797
      %v4608 = vunpack.c.l.b16 %v3798
      %v4609 = vunpack.c.l.b16 %v3799
      %v4610 = vunpack.c.l.b16 %v3800
      %v4611 = vunpack.c.l.b16 %v3801
      %v4612 = vunpack.c.l.b16 %v3802
      %v4613 = vunpack.c.l.b16 %v3803
      %v4614 = vunpack.c.l.b16 %v3804
      %v4615 = vunpack.c.l.b16 %v3805
      %v4616 = vunpack.c.l.b16 %v3806
      %v4617 = vunpack.c.l.b16 %v3807
      %v4618 = vunpack.c.l.b16 %v3808
      %v4619 = vunpack.c.l.b16 %v3809
      %v4620 = vpack.c.b16 %v4349, %v4604
      %v4621 = vpack.c.b16 %v4605, %v4605
      %v4622 = vpack.c.b16 %v4351, %v4606
      %v4623 = vpack.c.b16 %v4607, %v4607
      %v4624 = vpack.c.b16 %v4353, %v4608
      %v4625 = vpack.c.b16 %v4609, %v4609
      %v4626 = vpack.c.b16 %v4355, %v4610
      %v4627 = vpack.c.b16 %v4611, %v4611
      %v4628 = vpack.c.b16 %v4357, %v4612
      %v4629 = vpack.c.b16 %v4613, %v4613
      %v4630 = vpack.c.b16 %v4359, %v4614
      %v4631 = vpack.c.b16 %v4615, %v4615
      %v4632 = vpack.c.b16 %v4361, %v4616
      %v4633 = vpack.c.b16 %v4617, %v4617
      %v4634 = vpack.c.b16 %v4363, %v4618
      %v4635 = vpack.c.b16 %v4619, %v4619
      %v4636 = vrot.slane %v4620, 3
      %v4637 = vrot.slane %v4621, 3
      %v4638 = vsel %vm4099, %v4636, %v4637
      %v4639 = vrot.slane %v4622, 3
      %v4640 = vrot.slane %v4623, 3
      %v4641 = vsel %vm4099, %v4639, %v4640
      %v4642 = vrot.slane %v4624, 3
      %v4643 = vrot.slane %v4625, 3
      %v4644 = vsel %vm4099, %v4642, %v4643
      %v4645 = vrot.slane %v4626, 3
      %v4646 = vrot.slane %v4627, 3
      %v4647 = vsel %vm4099, %v4645, %v4646
      %v4648 = vrot.slane %v4628, 3
      %v4649 = vrot.slane %v4629, 3
      %v4650 = vsel %vm4099, %v4648, %v4649
      %v4651 = vrot.slane %v4630, 3
      %v4652 = vrot.slane %v4631, 3
      %v4653 = vsel %vm4099, %v4651, %v4652
      %v4654 = vrot.slane %v4632, 3
      %v4655 = vrot.slane %v4633, 3
      %v4656 = vsel %vm4099, %v4654, %v4655
      %v4657 = vrot.slane %v4634, 3
      %v4658 = vrot.slane %v4635, 3
      %v4659 = vsel %vm4099, %v4657, %v4658
      %4660 = vrot.lane.b32.xlu0 %v4638, 64
      %v4661 = vpop.permute.xlu0 %4660
      %4662 = vrot.lane.b32.xlu0 %v4641, 64
      %v4663 = vpop.permute.xlu0 %4662
      %4664 = vrot.lane.b32.xlu0 %v4644, 64
      %v4665 = vpop.permute.xlu0 %4664
      %4666 = vrot.lane.b32.xlu0 %v4647, 64
      %v4667 = vpop.permute.xlu0 %4666
      %4668 = vrot.lane.b32.xlu0 %v4650, 64
      %v4669 = vpop.permute.xlu0 %4668
      %4670 = vrot.lane.b32.xlu0 %v4653, 64
      %v4671 = vpop.permute.xlu0 %4670
      %4672 = vrot.lane.b32.xlu0 %v4656, 64
      %v4673 = vpop.permute.xlu0 %4672
      %4674 = vrot.lane.b32.xlu0 %v4659, 64
      %v4675 = vpop.permute.xlu0 %4674
      %v4678 = vsel %vm588, %v3842, %v4036
      %v4681 = vsel %vm588, %v3843, %v4038
      %v4684 = vsel %vm588, %v3844, %v4040
      %v4687 = vsel %vm588, %v3845, %v4042
      %v4690 = vsel %vm588, %v3846, %v4044
      %v4693 = vsel %vm588, %v3847, %v4046
      %v4696 = vsel %vm588, %v3848, %v4048
      %v4699 = vsel %vm588, %v3849, %v4050
      %v4701 = vsel %vm1878, %v4678, %v4125
      %v4703 = vsel %vm1878, %v4681, %v4127
      %v4705 = vsel %vm1878, %v4684, %v4129
      %v4707 = vsel %vm1878, %v4687, %v4131
      %v4709 = vsel %vm1878, %v4690, %v4133
      %v4711 = vsel %vm1878, %v4693, %v4135
      %v4713 = vsel %vm1878, %v4696, %v4137
      %v4715 = vsel %vm1878, %v4699, %v4139
      %v4717 = vsel %vm1911, %v4701, %v4181
      %v4719 = vsel %vm1911, %v4703, %v4183
      %v4721 = vsel %vm1911, %v4705, %v4185
      %v4723 = vsel %vm1911, %v4707, %v4187
      %v4725 = vsel %vm1911, %v4709, %v4189
      %v4727 = vsel %vm1911, %v4711, %v4191
      %v4729 = vsel %vm1911, %v4713, %v4193
      %v4731 = vsel %vm1911, %v4715, %v4195
      %v4733 = vsel %vm1944, %v4717, %v4253
      %v4735 = vsel %vm1944, %v4719, %v4255
      %v4737 = vsel %vm1944, %v4721, %v4257
      %v4739 = vsel %vm1944, %v4723, %v4259
      %v4741 = vsel %vm1944, %v4725, %v4261
      %v4743 = vsel %vm1944, %v4727, %v4263
      %v4745 = vsel %vm1944, %v4729, %v4265
      %v4747 = vsel %vm1944, %v4731, %v4267
      %v4749 = vsel %vm1977, %v4733, %v4317
      %v4751 = vsel %vm1977, %v4735, %v4319
      %v4753 = vsel %vm1977, %v4737, %v4321
      %v4755 = vsel %vm1977, %v4739, %v4323
      %v4757 = vsel %vm1977, %v4741, %v4325
      %v4759 = vsel %vm1977, %v4743, %v4327
      %v4761 = vsel %vm1977, %v4745, %v4329
      %v4763 = vsel %vm1977, %v4747, %v4331
      %v4765 = vsel %vm2010, %v4749, %v4373
      %v4767 = vsel %vm2010, %v4751, %v4375
      %v4769 = vsel %vm2010, %v4753, %v4377
      %v4771 = vsel %vm2010, %v4755, %v4379
      %v4773 = vsel %vm2010, %v4757, %v4381
      %v4775 = vsel %vm2010, %v4759, %v4383
      %v4777 = vsel %vm2010, %v4761, %v4385
      %v4779 = vsel %vm2010, %v4763, %v4387
      %v4781 = vsel %vm2043, %v4765, %v4573
      %v4783 = vsel %vm2043, %v4767, %v4575
      %v4785 = vsel %vm2043, %v4769, %v4577
      %v4787 = vsel %vm2043, %v4771, %v4579
      %v4789 = vsel %vm2043, %v4773, %v4581
      %v4791 = vsel %vm2043, %v4775, %v4583
      %v4793 = vsel %vm2043, %v4777, %v4585
      %v4795 = vsel %vm2043, %v4779, %v4587
      %v4797 = vsel %vm2076, %v4781, %v4661
      %v4799 = vsel %vm2076, %v4783, %v4663
      %v4801 = vsel %vm2076, %v4785, %v4665
      %v4803 = vsel %vm2076, %v4787, %v4667
      %v4805 = vsel %vm2076, %v4789, %v4669
      %v4807 = vsel %vm2076, %v4791, %v4671
      %v4809 = vsel %vm2076, %v4793, %v4673
      %v4811 = vsel %vm2076, %v4795, %v4675
      %v4812 = vld [vmem:[%s4] sm:$0xf]
      %v4813 = vld [vmem:[%s4 + $0x4] sm:$0xf]
      %v4814 = vld [vmem:[%s4 + $0x8] sm:$0xf]
      %v4815 = vld [vmem:[%s4 + $0xc] sm:$0xf]
      %v4816 = vld [vmem:[%s4 + $0x10] sm:$0xf]
      %v4817 = vld [vmem:[%s4 + $0x14] sm:$0xf]
      %v4818 = vld [vmem:[%s4 + $0x18] sm:$0xf]
      %v4819 = vld [vmem:[%s4 + $0x1c] sm:$0xf]
      %v4820 = vld [vmem:[%s4 + $0x20] sm:$0xf]
      %v4830 = vunpack.c.l.b16 %v4812
      %v4831 = vunpack.c.l.b16 %v4813
      %v4832 = vunpack.c.l.b16 %v4814
      %v4833 = vunpack.c.l.b16 %v4815
      %v4834 = vunpack.c.l.b16 %v4816
      %v4835 = vunpack.c.l.b16 %v4817
      %v4836 = vunpack.c.l.b16 %v4818
      %v4837 = vunpack.c.l.b16 %v4819
      %v4838 = vunpack.c.l.b16 %v4820
      %v4839 = vpack.c.b16 %v4831, %v4830
      %v4840 = vpack.c.b16 %v4833, %v4832
      %v4841 = vpack.c.b16 %v4835, %v4834
      %v4842 = vpack.c.b16 %v4837, %v4836
      %v4843 = vpack.c.b16 %v4838, %v4838
      %v4848 = vsel %vm2185, %v4797, 0
      %v4850 = vsel %vm2185, %v4799, 0
      %v4852 = vsel %vm2185, %v4801, 0
      %v4854 = vsel %vm2185, %v4803, 0
      %v4856 = vsel %vm2185, %v4805, 0
      %v4858 = vsel %vm2185, %v4807, 0
      %v4860 = vsel %vm2185, %v4809, 0
      %v4862 = vsel %vm2185, %v4811, 0
      %v4865 = vsel %vm613, %v4843, 0
      %4867 = vmatprep.subr.bf16.mxu0 0
      %4868 = vmatpush1.bf16.msra.mxu0 0
      %4869 = vmatprep.subr.bf16.mxu0 0
      %4870 = vmatpush1.bf16.msra.mxu0 0
      %4871 = vmatprep.subr.bf16.mxu0 0
      %4872 = vmatpush1.bf16.msra.mxu0 0
      %4873 = vmatprep.subr.bf16.mxu0 0
      %4874 = vmatpush1.bf16.msra.mxu0 %v4865
      %4875 = vmatprep.subr.bf16.mxu0 0
      %4876 = vmatpush1.bf16.msra.mxu0 %v4842
      %4877 = vmatprep.subr.bf16.mxu0 0
      %4878 = vmatpush1.bf16.msra.mxu0 %v4841
      %4879 = vmatprep.subr.bf16.mxu0 0
      %4880 = vmatpush1.bf16.msra.mxu0 %v4840
      %4881 = vmatprep.subr.bf16.mxu0 0
      %4882 = vmatpush1.bf16.msra.mxu0 %v4839
      %4883 = vmatprep.subr.bf16.mxu0 0
      %4884 = vmatpush2.bf16.msra.mxu0 0
      %4885 = vmatprep.subr.bf16.mxu0 0
      %4886 = vmatpush2.bf16.msra.mxu0 0
      %4887 = vmatprep.subr.bf16.mxu0 0
      %4888 = vmatpush2.bf16.msra.mxu0 0
      %4889 = vmatprep.subr.bf16.mxu0 0
      %4890 = vmatpush2.bf16.msra.mxu0 0
      %4891 = vmatprep.subr.bf16.mxu0 0
      %4892 = vmatpush2.bf16.msra.mxu0 0
      %4893 = vmatprep.subr.bf16.mxu0 0
      %4894 = vmatpush2.bf16.msra.mxu0 0
      %4895 = vmatprep.subr.bf16.mxu0 0
      %4896 = vmatpush2.bf16.msra.mxu0 0
      %4897 = vmatprep.subr.bf16.mxu0 0
      %4898 = vmatpush2.bf16.msra.mxu0 0
      %4899 = vmatprep.mubr.bf16.mxu0 0
      %4900 = vmatmul.mubr.bf16.gmra.mxu0 %v4848
      %v4901 = vpop.f32.mrf.mxu0
      %v4902 = vadd.f32 0.0, %v4901
      %v4903 = vpop.f32.mrf.mxu0
      %v4904 = vpop.f32.mrf.mxu0
      %v4905 = vadd.f32 0.0, %v4904
      %v4906 = vpop.f32.mrf.mxu0
      %4907 = vmatprep.mubr.bf16.mxu0 0
      %4908 = vmatmul.mubr.bf16.gmra.mxu0 %v4850
      %v4909 = vpop.f32.mrf.mxu0
      %v4910 = vadd.f32 0.0, %v4909
      %v4911 = vpop.f32.mrf.mxu0
      %v4912 = vpop.f32.mrf.mxu0
      %v4913 = vadd.f32 0.0, %v4912
      %v4914 = vpop.f32.mrf.mxu0
      %4915 = vmatprep.mubr.bf16.mxu0 0
      %4916 = vmatmul.mubr.bf16.gmra.mxu0 %v4852
      %v4917 = vpop.f32.mrf.mxu0
      %v4918 = vadd.f32 0.0, %v4917
      %v4919 = vpop.f32.mrf.mxu0
      %v4920 = vpop.f32.mrf.mxu0
      %v4921 = vadd.f32 0.0, %v4920
      %v4922 = vpop.f32.mrf.mxu0
      %4923 = vmatprep.mubr.bf16.mxu0 0
      %4924 = vmatmul.mubr.bf16.gmra.mxu0 %v4854
      %v4925 = vpop.f32.mrf.mxu0
      %v4926 = vadd.f32 0.0, %v4925
      %v4927 = vpop.f32.mrf.mxu0
      %v4928 = vpop.f32.mrf.mxu0
      %v4929 = vadd.f32 0.0, %v4928
      %v4930 = vpop.f32.mrf.mxu0
      %4931 = vmatprep.mubr.bf16.mxu0 0
      %4932 = vmatmul.mubr.bf16.gmra.mxu0 %v4856
      %v4933 = vpop.f32.mrf.mxu0
      %v4934 = vadd.f32 0.0, %v4933
      %v4935 = vpop.f32.mrf.mxu0
      %v4936 = vpop.f32.mrf.mxu0
      %v4937 = vadd.f32 0.0, %v4936
      %v4938 = vpop.f32.mrf.mxu0
      %4939 = vmatprep.mubr.bf16.mxu0 0
      %4940 = vmatmul.mubr.bf16.gmra.mxu0 %v4858
      %v4941 = vpop.f32.mrf.mxu0
      %v4942 = vadd.f32 0.0, %v4941
      %v4943 = vpop.f32.mrf.mxu0
      %v4944 = vpop.f32.mrf.mxu0
      %v4945 = vadd.f32 0.0, %v4944
      %v4946 = vpop.f32.mrf.mxu0
      %4947 = vmatprep.mubr.bf16.mxu0 0
      %4948 = vmatmul.mubr.bf16.gmra.mxu0 %v4860
      %v4949 = vpop.f32.mrf.mxu0
      %v4950 = vadd.f32 0.0, %v4949
      %v4951 = vpop.f32.mrf.mxu0
      %v4952 = vpop.f32.mrf.mxu0
      %v4953 = vadd.f32 0.0, %v4952
      %v4954 = vpop.f32.mrf.mxu0
      %4955 = vmatprep.mubr.bf16.mxu0 0
      %4956 = vmatmul.mubr.bf16.gmra.mxu0 %v4862
      %v4957 = vpop.f32.mrf.mxu0
      %v4958 = vadd.f32 0.0, %v4957
      %v4959 = vpop.f32.mrf.mxu0
      %v4960 = vpop.f32.mrf.mxu0
      %v4961 = vadd.f32 0.0, %v4960
      %v4962 = vpop.f32.mrf.mxu0
      %4963 = vdwg.mxu0
      %4980 = vrot.lane.b32.xlu0 %v2248, 16
      %v4981 = vpop.permute.xlu0 %4980
      %4982 = vrot.lane.b32.xlu0 %v2251, 16
      %v4983 = vpop.permute.xlu0 %4982
      %4984 = vrot.lane.b32.xlu0 %v2256, 16
      %v4985 = vpop.permute.xlu0 %4984
      %4986 = vrot.lane.b32.xlu0 %v2259, 16
      %v4987 = vpop.permute.xlu0 %4986
      %4988 = vrot.lane.b32.xlu0 %v2264, 16
      %v4989 = vpop.permute.xlu0 %4988
      %4990 = vrot.lane.b32.xlu0 %v2267, 16
      %v4991 = vpop.permute.xlu0 %4990
      %4992 = vrot.lane.b32.xlu0 %v2272, 16
      %v4993 = vpop.permute.xlu0 %4992
      %4994 = vrot.lane.b32.xlu0 %v2275, 16
      %v4995 = vpop.permute.xlu0 %4994
      %4996 = vrot.lane.b32.xlu0 %v2280, 16
      %v4997 = vpop.permute.xlu0 %4996
      %4998 = vrot.lane.b32.xlu0 %v2283, 16
      %v4999 = vpop.permute.xlu0 %4998
      %5000 = vrot.lane.b32.xlu0 %v2288, 16
      %v5001 = vpop.permute.xlu0 %5000
      %5002 = vrot.lane.b32.xlu0 %v2291, 16
      %v5003 = vpop.permute.xlu0 %5002
      %5004 = vrot.lane.b32.xlu0 %v2296, 16
      %v5005 = vpop.permute.xlu0 %5004
      %5006 = vrot.lane.b32.xlu0 %v2299, 16
      %v5007 = vpop.permute.xlu0 %5006
      %5008 = vrot.lane.b32.xlu0 %v2304, 16
      %v5009 = vpop.permute.xlu0 %5008
      %5010 = vrot.lane.b32.xlu0 %v2307, 16
      %v5011 = vpop.permute.xlu0 %5010
      %5044 = vrot.lane.b32.xlu0 %v3627, 32
      %v5045 = vpop.permute.xlu0 %5044
      %5046 = vrot.lane.b32.xlu0 %v3630, 32
      %v5047 = vpop.permute.xlu0 %5046
      %5048 = vrot.lane.b32.xlu0 %v3635, 32
      %v5049 = vpop.permute.xlu0 %5048
      %5050 = vrot.lane.b32.xlu0 %v3638, 32
      %v5051 = vpop.permute.xlu0 %5050
      %5052 = vrot.lane.b32.xlu0 %v3643, 32
      %v5053 = vpop.permute.xlu0 %5052
      %5054 = vrot.lane.b32.xlu0 %v3646, 32
      %v5055 = vpop.permute.xlu0 %5054
      %5056 = vrot.lane.b32.xlu0 %v3651, 32
      %v5057 = vpop.permute.xlu0 %5056
      %5058 = vrot.lane.b32.xlu0 %v3654, 32
      %v5059 = vpop.permute.xlu0 %5058
      %5060 = vrot.lane.b32.xlu0 %v3659, 32
      %v5061 = vpop.permute.xlu0 %5060
      %5062 = vrot.lane.b32.xlu0 %v3662, 32
      %v5063 = vpop.permute.xlu0 %5062
      %5064 = vrot.lane.b32.xlu0 %v3667, 32
      %v5065 = vpop.permute.xlu0 %5064
      %5066 = vrot.lane.b32.xlu0 %v3670, 32
      %v5067 = vpop.permute.xlu0 %5066
      %5068 = vrot.lane.b32.xlu0 %v3675, 32
      %v5069 = vpop.permute.xlu0 %5068
      %5070 = vrot.lane.b32.xlu0 %v3678, 32
      %v5071 = vpop.permute.xlu0 %5070
      %5072 = vrot.lane.b32.xlu0 %v3683, 32
      %v5073 = vpop.permute.xlu0 %5072
      %5074 = vrot.lane.b32.xlu0 %v3686, 32
      %v5075 = vpop.permute.xlu0 %5074
      %5108 = vrot.lane.b32.xlu0 %v4902, 48
      %v5109 = vpop.permute.xlu0 %5108
      %5110 = vrot.lane.b32.xlu0 %v4905, 48
      %v5111 = vpop.permute.xlu0 %5110
      %5112 = vrot.lane.b32.xlu0 %v4910, 48
      %v5113 = vpop.permute.xlu0 %5112
      %5114 = vrot.lane.b32.xlu0 %v4913, 48
      %v5115 = vpop.permute.xlu0 %5114
      %5116 = vrot.lane.b32.xlu0 %v4918, 48
      %v5117 = vpop.permute.xlu0 %5116
      %5118 = vrot.lane.b32.xlu0 %v4921, 48
      %v5119 = vpop.permute.xlu0 %5118
      %5120 = vrot.lane.b32.xlu0 %v4926, 48
      %v5121 = vpop.permute.xlu0 %5120
      %5122 = vrot.lane.b32.xlu0 %v4929, 48
      %v5123 = vpop.permute.xlu0 %5122
      %5124 = vrot.lane.b32.xlu0 %v4934, 48
      %v5125 = vpop.permute.xlu0 %5124
      %5126 = vrot.lane.b32.xlu0 %v4937, 48
      %v5127 = vpop.permute.xlu0 %5126
      %5128 = vrot.lane.b32.xlu0 %v4942, 48
      %v5129 = vpop.permute.xlu0 %5128
      %5130 = vrot.lane.b32.xlu0 %v4945, 48
      %v5131 = vpop.permute.xlu0 %5130
      %5132 = vrot.lane.b32.xlu0 %v4950, 48
      %v5133 = vpop.permute.xlu0 %5132
      %5134 = vrot.lane.b32.xlu0 %v4953, 48
      %v5135 = vpop.permute.xlu0 %5134
      %5136 = vrot.lane.b32.xlu0 %v4958, 48
      %v5137 = vpop.permute.xlu0 %5136
      %5138 = vrot.lane.b32.xlu0 %v4961, 48
      %v5139 = vpop.permute.xlu0 %5138
      %v5156 = vsel %vm1878, %v652, %v4981
      %v5157 = vsel %vm1878, %v655, %v4983
      %v5158 = vsel %vm1878, %v660, %v4985
      %v5159 = vsel %vm1878, %v663, %v4987
      %v5160 = vsel %vm1878, %v668, %v4989
      %v5161 = vsel %vm1878, %v671, %v4991
      %v5162 = vsel %vm1878, %v676, %v4993
      %v5163 = vsel %vm1878, %v679, %v4995
      %v5164 = vsel %vm1878, %v684, %v4997
      %v5165 = vsel %vm1878, %v687, %v4999
      %v5166 = vsel %vm1878, %v692, %v5001
      %v5167 = vsel %vm1878, %v695, %v5003
      %v5168 = vsel %vm1878, %v700, %v5005
      %v5169 = vsel %vm1878, %v703, %v5007
      %v5170 = vsel %vm1878, %v708, %v5009
      %v5171 = vsel %vm1878, %v711, %v5011
      %v5172 = vsel %vm1944, %v5156, %v5045
      %v5173 = vsel %vm1944, %v5157, %v5047
      %v5174 = vsel %vm1944, %v5158, %v5049
      %v5175 = vsel %vm1944, %v5159, %v5051
      %v5176 = vsel %vm1944, %v5160, %v5053
      %v5177 = vsel %vm1944, %v5161, %v5055
      %v5178 = vsel %vm1944, %v5162, %v5057
      %v5179 = vsel %vm1944, %v5163, %v5059
      %v5180 = vsel %vm1944, %v5164, %v5061
      %v5181 = vsel %vm1944, %v5165, %v5063
      %v5182 = vsel %vm1944, %v5166, %v5065
      %v5183 = vsel %vm1944, %v5167, %v5067
      %v5184 = vsel %vm1944, %v5168, %v5069
      %v5185 = vsel %vm1944, %v5169, %v5071
      %v5186 = vsel %vm1944, %v5170, %v5073
      %v5187 = vsel %vm1944, %v5171, %v5075
      %v5188 = vsel %vm2010, %v5172, %v5109
      %v5189 = vsel %vm2010, %v5173, %v5111
      %v5190 = vsel %vm2010, %v5174, %v5113
      %v5191 = vsel %vm2010, %v5175, %v5115
      %v5192 = vsel %vm2010, %v5176, %v5117
      %v5193 = vsel %vm2010, %v5177, %v5119
      %v5194 = vsel %vm2010, %v5178, %v5121
      %v5195 = vsel %vm2010, %v5179, %v5123
      %v5196 = vsel %vm2010, %v5180, %v5125
      %v5197 = vsel %vm2010, %v5181, %v5127
      %v5198 = vsel %vm2010, %v5182, %v5129
      %v5199 = vsel %vm2010, %v5183, %v5131
      %v5200 = vsel %vm2010, %v5184, %v5133
      %v5201 = vsel %vm2010, %v5185, %v5135
      %v5202 = vsel %vm2010, %v5186, %v5137
      %v5203 = vsel %vm2010, %v5187, %v5139
      %v5204 = vsel %vm2076, %v5188, 0.0
      %v5205 = vsel %vm2076, %v5189, 0.0
      %v5206 = vsel %vm2076, %v5190, 0.0
      %v5207 = vsel %vm2076, %v5191, 0.0
      %v5208 = vsel %vm2076, %v5192, 0.0
      %v5209 = vsel %vm2076, %v5193, 0.0
      %v5210 = vsel %vm2076, %v5194, 0.0
      %v5211 = vsel %vm2076, %v5195, 0.0
      %v5212 = vsel %vm2076, %v5196, 0.0
      %v5213 = vsel %vm2076, %v5197, 0.0
      %v5214 = vsel %vm2076, %v5198, 0.0
      %v5215 = vsel %vm2076, %v5199, 0.0
      %v5216 = vsel %vm2076, %v5200, 0.0
      %v5217 = vsel %vm2076, %v5201, 0.0
      %v5218 = vsel %vm2076, %v5202, 0.0
      %v5219 = vsel %vm2076, %v5203, 0.0
      %v5220 = vpack.c.bf16 %v5205, %v5204
      %v5221 = vpack.c.bf16 %v5207, %v5206
      %v5222 = vpack.c.bf16 %v5209, %v5208
      %v5223 = vpack.c.bf16 %v5211, %v5210
      %v5224 = vpack.c.bf16 %v5213, %v5212
      %v5225 = vpack.c.bf16 %v5215, %v5214
      %v5226 = vpack.c.bf16 %v5217, %v5216
      %v5227 = vpack.c.bf16 %v5219, %v5218
      %v5236 = vunpack.c.l.b16 %v5220
      %v5237 = vunpack.c.h.b16 %v5220
      %v5238 = vunpack.c.l.b16 %v5221
      %v5239 = vunpack.c.h.b16 %v5221
      %v5240 = vunpack.c.l.b16 %v5222
      %v5241 = vunpack.c.h.b16 %v5222
      %v5242 = vunpack.c.l.b16 %v5223
      %v5243 = vunpack.c.h.b16 %v5223
      %v5244 = vunpack.c.l.b16 %v5224
      %v5245 = vunpack.c.h.b16 %v5224
      %v5246 = vunpack.c.l.b16 %v5225
      %v5247 = vunpack.c.h.b16 %v5225
      %v5248 = vunpack.c.l.b16 %v5226
      %v5249 = vunpack.c.h.b16 %v5226
      %v5250 = vunpack.c.l.b16 %v5227
      %v5251 = vunpack.c.h.b16 %v5227
      %v5252 = vpack.c.b16 %v5236, %v5236
      %v5253 = vpack.c.b16 %v5237, %v5237
      %v5254 = vpack.c.b16 %v5238, %v5238
      %v5255 = vpack.c.b16 %v5239, %v5239
      %v5256 = vpack.c.b16 %v5240, %v5240
      %v5257 = vpack.c.b16 %v5241, %v5241
      %v5258 = vpack.c.b16 %v5242, %v5242
      %v5259 = vpack.c.b16 %v5243, %v5243
      %v5260 = vpack.c.b16 %v5244, %v5244
      %v5261 = vpack.c.b16 %v5245, %v5245
      %v5262 = vpack.c.b16 %v5246, %v5246
      %v5263 = vpack.c.b16 %v5247, %v5247
      %v5264 = vpack.c.b16 %v5248, %v5248
      %v5265 = vpack.c.b16 %v5249, %v5249
      %v5266 = vpack.c.b16 %v5250, %v5250
      %v5267 = vpack.c.b16 %v5251, %v5251
      %5284 = vst [vmem:[%s298] sm:$0xf] %v5252
      %5285 = vst [vmem:[%s298 + $0x4] sm:$0xf] %v5253
      %5286 = vst [vmem:[%s298 + $0x8] sm:$0xf] %v5254
      %5287 = vst [vmem:[%s298 + $0xc] sm:$0xf] %v5255
      %5288 = vst [vmem:[%s298 + $0x10] sm:$0xf] %v5256
      %5289 = vst [vmem:[%s298 + $0x14] sm:$0xf] %v5257
      %5290 = vst [vmem:[%s298 + $0x18] sm:$0xf] %v5258
      %5291 = vst [vmem:[%s298 + $0x1c] sm:$0xf] %v5259
      %5292 = vst [vmem:[%s298 + $0x20] sm:$0xf] %v5260
      %5293 = vst [vmem:[%s298 + $0x24] sm:$0xf] %v5261
      %5294 = vst [vmem:[%s298 + $0x28] sm:$0xf] %v5262
      %5295 = vst [vmem:[%s298 + $0x2c] sm:$0xf] %v5263
      %5296 = vst [vmem:[%s298 + $0x30] sm:$0xf] %v5264
      %5297 = vst [vmem:[%s298 + $0x34] sm:$0xf] %v5265
      %5298 = vst [vmem:[%s298 + $0x38] sm:$0xf] %v5266
      %5299 = vst [vmem:[%s298 + $0x3c] sm:$0xf] %v5267
      %v5300 = vadd.f32 %v5204, %v5205
      %v5301 = vadd.f32 %v5300, %v5206
      %v5302 = vadd.f32 %v5301, %v5207
      %v5303 = vadd.f32 %v5302, %v5208
      %v5304 = vadd.f32 %v5303, %v5209
      %v5305 = vadd.f32 %v5304, %v5210
      %v5306 = vadd.f32 %v5305, %v5211
      %v5307 = vadd.f32 %v5306, %v5212
      %v5308 = vadd.f32 %v5307, %v5213
      %v5309 = vadd.f32 %v5308, %v5214
      %v5310 = vadd.f32 %v5309, %v5215
      %v5311 = vadd.f32 %v5310, %v5216
      %v5312 = vadd.f32 %v5311, %v5217
      %v5313 = vadd.f32 %v5312, %v5218
      %v5314 = vadd.f32 %v5313, %v5219
      %v5315 = vrot.slane %v5314, 4
      %v5316 = vadd.f32 %v5314, %v5315
      %v5317 = vrot.slane %v5316, 2
      %v5318 = vadd.f32 %v5316, %v5317
      %v5319 = vrot.slane %v5318, 1
      %v5320 = vadd.f32 %v5318, %v5319
      %v5321 = vmul.f32 %v5204, %v5204
      %v5322 = vmul.f32 %v5205, %v5205
      %v5323 = vmul.f32 %v5206, %v5206
      %v5324 = vmul.f32 %v5207, %v5207
      %v5325 = vmul.f32 %v5208, %v5208
      %v5326 = vmul.f32 %v5209, %v5209
      %v5327 = vmul.f32 %v5210, %v5210
      %v5328 = vmul.f32 %v5211, %v5211
      %v5329 = vmul.f32 %v5212, %v5212
      %v5330 = vmul.f32 %v5213, %v5213
      %v5331 = vmul.f32 %v5214, %v5214
      %v5332 = vmul.f32 %v5215, %v5215
      %v5333 = vmul.f32 %v5216, %v5216
      %v5334 = vmul.f32 %v5217, %v5217
      %v5335 = vmul.f32 %v5218, %v5218
      %v5336 = vmul.f32 %v5219, %v5219
      %v5337 = vadd.f32 %v5321, %v5322
      %v5338 = vadd.f32 %v5337, %v5323
      %v5339 = vadd.f32 %v5338, %v5324
      %v5340 = vadd.f32 %v5339, %v5325
      %v5341 = vadd.f32 %v5340, %v5326
      %v5342 = vadd.f32 %v5341, %v5327
      %v5343 = vadd.f32 %v5342, %v5328
      %v5344 = vadd.f32 %v5343, %v5329
      %v5345 = vadd.f32 %v5344, %v5330
      %v5346 = vadd.f32 %v5345, %v5331
      %v5347 = vadd.f32 %v5346, %v5332
      %v5348 = vadd.f32 %v5347, %v5333
      %v5349 = vadd.f32 %v5348, %v5334
      %v5350 = vadd.f32 %v5349, %v5335
      %v5351 = vadd.f32 %v5350, %v5336
      %v5352 = vrot.slane %v5351, 4
      %v5353 = vadd.f32 %v5351, %v5352
      %v5354 = vrot.slane %v5353, 2
      %v5355 = vadd.f32 %v5353, %v5354
      %v5356 = vrot.slane %v5355, 1
      %v5357 = vadd.f32 %v5355, %v5356
      %vm5358 = vcmask 1040384
      %v5359 = vsel %vm5358, %v5320, %v5357
      %5360 = vst [vmem:[%s307] sm:$0x3] %v5359
      %s5361 = smul.u32 %s22, 2
      %s5362 = sadd.s32 %s5361, %s23
      %s5363 = smul.u32 16, %s5362
      %p5364 = scmp.lt.s32.totalorder %s5363, 63
      %s5365 = scalar_select %p5364, %s5363, 63
      %s5366 = smul.addr %s5365, 4
      %s5367 = scalar_lea.vmem %s5, %s5366
      %s5368 = smul.u32 %s22, 2
      %s5369 = sadd.s32 %s5368, %s23
      %p5370 = scmp.lt.s32.totalorder %s5369, 3
      %s5371 = scalar_select %p5370, %s5369, 3
      %s5372 = smul.addr %s5371, 2
      %s5373 = scalar_lea.vmem %s6, %s5372
      // Predicated region
      $region41: #{aspp_forward.3} parent=39 // pred_check
        %p5374 = pneg %p164
      $region42: #{aspp_forward.3} parent=39 // pred_check_branch
        %5376 = sbr.rel (%p5374) target = $region44
      $region43: #{aspp_forward.3} parent=39 // pred_region
        %s5377 = smul.u32 %s22, 2
        %s5378 = sadd.s32 %s5377, %s23
        %s5379 = smul.u32 16, %s5378
      $region44: #{aspp_forward.3} parent=39 // pred_fallthru
        _
      // Predicated region
      $region45: #{aspp_forward.3} parent=39 // pred_check
        %p5380 = pneg %p194
      $region46: #{aspp_forward.3} parent=39 // pred_check_branch
        %5382 = sbr.rel (%p5380) target = $region48
      $region47: #{aspp_forward.3} parent=39 // pred_region
        %s5383 = smul.u32 %s22, 2
        %s5384 = sadd.s32 %s5383, %s23
      $region48: #{aspp_forward.3} parent=39 // pred_fallthru
        _
    $region40: #{aspp_forward.3} parent=5 // pred_fallthru
      _
    %p5385 = scmp.le.s32.totalorder 2, %s13
    // Predicated region
    $region49: #{aspp_forward.3} parent=5 // pred_check
      %p5386 = pneg %p5385
    $region50: #{aspp_forward.3} parent=5 // pred_check_branch
      %5388 = sbr.rel (%p5386) target = $region52
    $region51: #{aspp_forward.3} parent=5 // pred_region
      %s5389 = ssub.s32 %s13, 2
      // Predicated region
      $region53: #{aspp_forward.3} parent=51 // pred_check
        %p5390 = pneg %p170
      $region54: #{aspp_forward.3} parent=51 // pred_check_branch
        %5392 = sbr.rel (%p5390) target = $region56
      $region55: #{aspp_forward.3} parent=51 // pred_region
        %s5393 = smul.u32 %s24, 2
        %s5394 = sadd.s32 %s5393, %s25
        %s5395 = smul.u32 16, %s5394
        %p5396 = scmp.lt.s32.totalorder %s5395, 63
        %s5397 = scalar_select %p5396, %s5395, 63
        %s5398 = smul.addr %s5397, 4
        %s5399 = scalar_lea.vmem %s5, %s5398
      $region56: #{aspp_forward.3} parent=51 // pred_fallthru
        _
      // Predicated region
      $region57: #{aspp_forward.3} parent=51 // pred_check
        %p5400 = pneg %p200
      $region58: #{aspp_forward.3} parent=51 // pred_check_branch
        %5402 = sbr.rel (%p5400) target = $region60
      $region59: #{aspp_forward.3} parent=51 // pred_region
        %s5403 = smul.u32 %s24, 2
        %s5404 = sadd.s32 %s5403, %s25
        %p5405 = scmp.lt.s32.totalorder %s5404, 3
        %s5406 = scalar_select %p5405, %s5404, 3
        %s5407 = smul.addr %s5406, 2
        %s5408 = scalar_lea.vmem %s6, %s5407
      $region60: #{aspp_forward.3} parent=51 // pred_fallthru
        _
    $region52: #{aspp_forward.3} parent=5 // pred_fallthru
      _
  $region6: #{aspp_forward.3} parent=0 // loop_footer
    %s17 = sadd.s32 1, %s13
  $region7: #{aspp_forward.3} parent=0 // loop_footer_branch
    %12 = sbr.rel target = $region3
  $region8: #{aspp_forward.3} parent=0 // loop_exit
    _

</llo_original>
